<compile_context>
chip_gen: v6e
topology: v6e:2x2x1
jax: 0.10.0
libtpu: 0.0.40
codegen_flags: <defaults>
</compile_context>

<pallas_src>
import functools

import jax
import jax.numpy as jnp
from jax import lax
from jax.experimental import pallas as pl
from jax.experimental.pallas import tpu as pltpu


# ----------------------------- Pallas kernel --------------------------------

def temporal_2l_kernel(x_ref, wm_ref, bm_ref, wt_ref, a1_ref, a2_ref,
                       winv_ref, binv_ref, o_ref, *, alpha, nheads, n_vert):
    """Both GAT layers for one batch element. Weights carry a leading layer axis."""

    def gat_layer(xin, l):
        # --- fused pixel -> vertex mapping for all heads: (T, P) @ (P, H*N) ---
        v_all = jnp.dot(xin, wm_ref[l],
                        preferred_element_type=jnp.float32) + bm_ref[l]   # (T, H*N)

        wt = wt_ref[l]        # (nheads, Th, T)   per-head W, pre-transposed
        a1 = a1_ref[l]        # (nheads, 1, Th)
        a2 = a2_ref[l]        # (nheads, 1, Th)

        hpt_parts = []
        for h in range(nheads):   # static unrolled head loop (no grid axis)
            vT = v_all[:, h * n_vert:(h + 1) * n_vert]                     # (T, N)
            # whT[k, j] = (v^T W)[j, k] -- keep N on the lane axis throughout
            whT = jnp.dot(wt[h], vT, preferred_element_type=jnp.float32)   # (Th, N)
            f1 = jnp.dot(a1[h], whT, preferred_element_type=jnp.float32)   # (1, N)
            f2 = jnp.dot(a2[h], whT, preferred_element_type=jnp.float32)   # (1, N)
            e = f1.T + f2                                                  # (N, N)
            e = jnp.where(e > 0, e, alpha * e)                             # LeakyReLU
            # row-wise softmax (reciprocal on the EUP slot)
            e = e - jnp.max(e, axis=-1, keepdims=True)
            p = jnp.exp(e)
            inv = pl.reciprocal(jnp.sum(p, axis=-1, keepdims=True), approx=True)
            attn = p * inv                                                 # (N, N)
            # hpT[k, i] = sum_j attn[i, j] * whT[k, j]   (no explicit transpose)
            hpT = lax.dot_general(whT, attn, (((1,), (1,)), ((), ())),
                                  preferred_element_type=jnp.float32)      # (Th, N)
            hpT = jnp.where(hpT > 0, hpT, jnp.exp(hpT) - 1.0)              # ELU
            hpt_parts.append(hpT)

        hpT_all = jnp.concatenate(hpt_parts, axis=-1)                      # (Th, H*N)
        # --- fused vertex -> pixel inverse mapping; 1/nheads folded into winv ---
        return jnp.dot(hpT_all, winv_ref[l],
                       preferred_element_type=jnp.float32) + binv_ref[l]   # (Th, P)

    x = x_ref[0]                       # (T, P)
    h1 = gat_layer(x, 0)               # hidden GAT layer
    o_ref[0] = gat_layer(h1, 1)        # output GAT layer (single output write)


# ------------------------------ wrapper --------------------------------------

def prepare_weights(params, *, nheads):
    """Host-side, once-per-model plumbing: fuse heads, pre-transpose, fold 1/nheads."""
    L, H, N, P = params["wm"].shape
    assert H == nheads
    wm_all_t = jnp.transpose(params["wm"], (0, 3, 1, 2)).reshape(L, P, H * N)
    bm_all = params["bm"].reshape(L, 1, H * N)
    w_t = jnp.swapaxes(params["w"], -1, -2)                       # (L, H, Th, T)
    winv_all_t = (jnp.swapaxes(params["winv"], -1, -2)
                  .reshape(L, H * N, P) / nheads)                 # head-mean folded in
    binv_mean = jnp.mean(params["binv"], axis=1, keepdims=True)   # (L, 1, P)
    return (wm_all_t, bm_all, w_t, params["a1"], params["a2"],
            winv_all_t, binv_mean)


def temporal_model_2l(x, prepped, *, alpha=0.2, nheads=3):
    """x: (B, T, H, W) float32 -> (B, T, H, W) (nhid == time_steps)."""
    wm_all_t, bm_all, w_t, a1, a2, winv_all_t, binv_mean = prepped
    B, T, H, W = x.shape
    P = H * W
    L = wm_all_t.shape[0]
    NV = wm_all_t.shape[-1] // nheads
    Th = w_t.shape[-2]

    x_flat = x.reshape(B, T, P).astype(jnp.float32)
    # TODO(synk): cast x / wm / winv to bfloat16 for the MXU at production sizes
    # (keep preferred_element_type=f32); kept f32 here for exact-tolerance checks.

    out = pl.pallas_call(
        functools.partial(temporal_2l_kernel, alpha=alpha, nheads=nheads,
                          n_vert=NV),
        out_shape=jax.ShapeDtypeStruct((B, Th, P), jnp.float32),
        grid_spec=pltpu.PrefetchScalarGridSpec(
            num_scalar_prefetch=0,
            grid=(B,),
            in_specs=[
                pl.BlockSpec((1, T, P), lambda b: (b, 0, 0)),                 # x
                pl.BlockSpec((L, P, nheads * NV), lambda b: (0, 0, 0)),       # wm^T fused
                pl.BlockSpec((L, 1, nheads * NV), lambda b: (0, 0, 0)),       # bm fused
                pl.BlockSpec((L, nheads, Th, T), lambda b: (0, 0, 0, 0)),     # W^T
                pl.BlockSpec((L, nheads, 1, Th), lambda b: (0, 0, 0, 0)),     # a1
                pl.BlockSpec((L, nheads, 1, Th), lambda b: (0, 0, 0, 0)),     # a2
                pl.BlockSpec((L, nheads * NV, P), lambda b: (0, 0, 0)),       # winv^T/heads
                pl.BlockSpec((L, 1, P), lambda b: (0, 0, 0)),                 # mean binv
            ],
            out_specs=pl.BlockSpec((1, Th, P), lambda b: (b, 0, 0)),
        ),
        compiler_params=pltpu.CompilerParams(
            dimension_semantics=("parallel",)),
    )(x_flat, wm_all_t, bm_all, w_t, a1, a2, winv_all_t, binv_mean)

    return out.reshape(B, Th, H, W)


# --------------------------- parameter init ----------------------------------

def init_params(key, *, layers, time_steps, nhid, n_vertices, P, nheads):
    ks = jax.random.split(key, 7)
    f32 = jnp.float32
    lh = (layers, nheads)
    return {
        # pixel -> vertex mapping: nn.Linear(P, n_vertices) per layer/head
        "wm": jax.random.normal(ks[0], lh + (n_vertices, P), f32) * (1.0 / P) ** 0.5,
        "bm": jax.random.normal(ks[1], lh + (n_vertices,), f32) * 0.1,
        # GAT feature transform W: (T, Th) per layer/head
        "w": (jax.random.normal(ks[2], lh + (time_steps, nhid), f32)
              * (2.0 / (time_steps + nhid)) ** 0.5),
        # attention vector a = [a1; a2], each (Th,) per layer/head
        "a1": jax.random.normal(ks[3], lh + (1, nhid), f32) * 0.5,
        "a2": jax.random.normal(ks[4], lh + (1, nhid), f32) * 0.5,
        # vertex -> pixel inverse mapping: nn.Linear(n_vertices, P) per layer/head
        "winv": (jax.random.normal(ks[5], lh + (P, n_vertices), f32)
                 * (1.0 / n_vertices) ** 0.5),
        "binv": jax.random.normal(ks[6], lh + (P,), f32) * 0.1,
    }


# --------------------------- pure-JAX reference -------------------------------

def _gat_layer_ref(xf, p, l, *, alpha, nheads):
    acc = None
    for h in range(nheads):
        v = xf @ p["wm"][l, h].T + p["bm"][l, h]              # (B, T, N)
        v = jnp.swapaxes(v, 1, 2)                             # (B, N, T)
        wh = v @ p["w"][l, h]                                 # (B, N, Th)
        f1 = jnp.sum(wh * p["a1"][l, h], axis=-1, keepdims=True)
        f2 = jnp.sum(wh * p["a2"][l, h], axis=-1, keepdims=True)
        e = f1 + jnp.swapaxes(f2, 1, 2)
        e = jnp.where(e > 0, e, alpha * e)
        attn = jax.nn.softmax(e, axis=-1)
        hp = attn @ wh
        hp = jnp.where(hp > 0, hp, jnp.exp(hp) - 1.0)
        out = jnp.swapaxes(hp, 1, 2) @ p["winv"][l, h].T + p["binv"][l, h]
        acc = out if acc is None else acc + out
    return acc / nheads


def reference(x, params, *, alpha=0.2, nheads=3):
    B, T, H, W = x.shape
    xf = x.reshape(B, T, H * W)
    h1 = _gat_layer_ref(xf, params, 0, alpha=alpha, nheads=nheads)
    out = _gat_layer_ref(h1, params, 1, alpha=alpha, nheads=nheads)
    return out.reshape(B, -1, H, W)


# --------------------------------- main ---------------------------------------

if __name__ == "__main__":
    B, T, H, W = 2, 4, 16, 16          # batch=2, time_steps=4, 16x16 images
    N_VERT, NHEADS, ALPHA = 32, 3, 0.2
    NHID = T                           # nhid = time_steps in the module

    key = jax.random.PRNGKey(0)
    kx, kp = jax.random.split(key)
    x = jax.random.normal(kx, (B, T, H, W), jnp.float32)
    params = init_params(kp, layers=2, time_steps=T, nhid=NHID,
                         n_vertices=N_VERT, P=H * W, nheads=NHEADS)
    prepped = prepare_weights(params, nheads=NHEADS)

    y = temporal_model_2l(x, prepped, alpha=ALPHA, nheads=NHEADS)
    y = jax.block_until_ready(y)

    y_ref = reference(x, params, alpha=ALPHA, nheads=NHEADS)
    assert y.shape == (B, NHID, H, W), y.shape
    max_err = float(jnp.max(jnp.abs(y - y_ref)))
    assert jnp.allclose(y, y_ref, rtol=1e-2, atol=1e-2), max_err

    print("KERNEL_OK")
</pallas_src>

<mosaic_0001>
module attributes {stable_mosaic.version = 11 : i64} {
  func.func @temporal_2l_kernel(%arg0: i32, %arg1: memref<1x4x256xf32, #tpu.memory_space<vmem>>, %arg2: memref<2x256x96xf32, #tpu.memory_space<vmem>>, %arg3: memref<2x1x96xf32, #tpu.memory_space<vmem>>, %arg4: memref<2x3x4x4xf32, #tpu.memory_space<vmem>>, %arg5: memref<2x3x1x4xf32, #tpu.memory_space<vmem>>, %arg6: memref<2x3x1x4xf32, #tpu.memory_space<vmem>>, %arg7: memref<2x96x256xf32, #tpu.memory_space<vmem>>, %arg8: memref<2x1x256xf32, #tpu.memory_space<vmem>>, %arg9: memref<1x4x256xf32, #tpu.memory_space<vmem>>) attributes {dimension_semantics = [#tpu.dimension_semantics<parallel>], iteration_bounds = array<i64: 2>, scalar_prefetch = 0 : i64, scratch_operands = 0 : i64, tpu.core_type = #tpu.core_type<tc>, window_params = [{transform_indices = @transform_0, window_bounds = array<i64: 1, 4, 256>}, {pipeline_mode = #tpu.pipeline_mode<synchronous>, transform_indices = @transform_1, window_bounds = array<i64: 2, 256, 96>}, {pipeline_mode = #tpu.pipeline_mode<synchronous>, transform_indices = @transform_2, window_bounds = array<i64: 2, 1, 96>}, {pipeline_mode = #tpu.pipeline_mode<synchronous>, transform_indices = @transform_3, window_bounds = array<i64: 2, 3, 4, 4>}, {pipeline_mode = #tpu.pipeline_mode<synchronous>, transform_indices = @transform_4, window_bounds = array<i64: 2, 3, 1, 4>}, {pipeline_mode = #tpu.pipeline_mode<synchronous>, transform_indices = @transform_5, window_bounds = array<i64: 2, 3, 1, 4>}, {pipeline_mode = #tpu.pipeline_mode<synchronous>, transform_indices = @transform_6, window_bounds = array<i64: 2, 96, 256>}, {pipeline_mode = #tpu.pipeline_mode<synchronous>, transform_indices = @transform_7, window_bounds = array<i64: 2, 1, 256>}, {transform_indices = @transform_8, window_bounds = array<i64: 1, 4, 256>}]} {
    %c0 = arith.constant 0 : index
    %c0_0 = arith.constant 0 : index
    %c0_1 = arith.constant 0 : index
    %0 = vector.load %arg1[%c0, %c0_0, %c0_1] : memref<1x4x256xf32, #tpu.memory_space<vmem>>, vector<1x4x256xf32>
    %1 = vector.shape_cast %0 : vector<1x4x256xf32> to vector<4x256xf32>
    %c0_2 = arith.constant 0 : index
    %c0_3 = arith.constant 0 : index
    %c0_4 = arith.constant 0 : index
    %2 = vector.load %arg2[%c0_2, %c0_3, %c0_4] : memref<2x256x96xf32, #tpu.memory_space<vmem>>, vector<1x256x96xf32>
    %3 = vector.shape_cast %2 : vector<1x256x96xf32> to vector<256x96xf32>
    %cst = arith.constant dense<0.000000e+00> : vector<4x96xf32>
    %4 = tpu.matmul %1, %3, %cst {dimension_numbers = #tpu.dot_dimension_numbers<[1], [0], [0], [1], [0, 0, 1, 1], [], []>} : vector<4x256xf32>, vector<256x96xf32>, vector<4x96xf32> -> vector<4x96xf32>
    %c0_5 = arith.constant 0 : index
    %c0_6 = arith.constant 0 : index
    %c0_7 = arith.constant 0 : index
    %5 = vector.load %arg3[%c0_5, %c0_6, %c0_7] : memref<2x1x96xf32, #tpu.memory_space<vmem>>, vector<1x1x96xf32>
    %6 = vector.shape_cast %5 : vector<1x1x96xf32> to vector<1x96xf32>
    %7 = vector.broadcast %6 : vector<1x96xf32> to vector<4x96xf32>
    %8 = arith.addf %4, %7 : vector<4x96xf32>
    %c0_8 = arith.constant 0 : index
    %c0_9 = arith.constant 0 : index
    %c0_10 = arith.constant 0 : index
    %c0_11 = arith.constant 0 : index
    %9 = vector.load %arg4[%c0_8, %c0_9, %c0_10, %c0_11] : memref<2x3x4x4xf32, #tpu.memory_space<vmem>>, vector<1x3x4x4xf32>
    %10 = vector.shape_cast %9 : vector<1x3x4x4xf32> to vector<3x4x4xf32>
    %c0_12 = arith.constant 0 : index
    %c0_13 = arith.constant 0 : index
    %c0_14 = arith.constant 0 : index
    %c0_15 = arith.constant 0 : index
    %11 = vector.load %arg5[%c0_12, %c0_13, %c0_14, %c0_15] : memref<2x3x1x4xf32, #tpu.memory_space<vmem>>, vector<1x3x1x4xf32>
    %12 = vector.shape_cast %11 : vector<1x3x1x4xf32> to vector<3x1x4xf32>
    %c0_16 = arith.constant 0 : index
    %c0_17 = arith.constant 0 : index
    %c0_18 = arith.constant 0 : index
    %c0_19 = arith.constant 0 : index
    %13 = vector.load %arg6[%c0_16, %c0_17, %c0_18, %c0_19] : memref<2x3x1x4xf32, #tpu.memory_space<vmem>>, vector<1x3x1x4xf32>
    %14 = vector.shape_cast %13 : vector<1x3x1x4xf32> to vector<3x1x4xf32>
    %15 = vector.extract_strided_slice %8 {offsets = [0, 0], sizes = [4, 32], strides = [1, 1]} : vector<4x96xf32> to vector<4x32xf32>
    %16 = vector.extract_strided_slice %10 {offsets = [0, 0, 0], sizes = [1, 4, 4], strides = [1, 1, 1]} : vector<3x4x4xf32> to vector<1x4x4xf32>
    %17 = vector.shape_cast %16 : vector<1x4x4xf32> to vector<4x4xf32>
    %cst_20 = arith.constant dense<0.000000e+00> : vector<4x32xf32>
    %18 = tpu.matmul %17, %15, %cst_20 {dimension_numbers = #tpu.dot_dimension_numbers<[1], [0], [0], [1], [0, 0, 1, 1], [], []>} : vector<4x4xf32>, vector<4x32xf32>, vector<4x32xf32> -> vector<4x32xf32>
    %19 = vector.extract_strided_slice %12 {offsets = [0, 0, 0], sizes = [1, 1, 4], strides = [1, 1, 1]} : vector<3x1x4xf32> to vector<1x1x4xf32>
    %20 = vector.shape_cast %19 : vector<1x1x4xf32> to vector<1x4xf32>
    %cst_21 = arith.constant dense<0.000000e+00> : vector<1x32xf32>
    %21 = tpu.matmul %20, %18, %cst_21 {dimension_numbers = #tpu.dot_dimension_numbers<[1], [0], [0], [1], [0, 0, 1, 1], [], []>} : vector<1x4xf32>, vector<4x32xf32>, vector<1x32xf32> -> vector<1x32xf32>
    %22 = vector.extract_strided_slice %14 {offsets = [0, 0, 0], sizes = [1, 1, 4], strides = [1, 1, 1]} : vector<3x1x4xf32> to vector<1x1x4xf32>
    %23 = vector.shape_cast %22 : vector<1x1x4xf32> to vector<1x4xf32>
    %cst_22 = arith.constant dense<0.000000e+00> : vector<1x32xf32>
    %24 = tpu.matmul %23, %18, %cst_22 {dimension_numbers = #tpu.dot_dimension_numbers<[1], [0], [0], [1], [0, 0, 1, 1], [], []>} : vector<1x4xf32>, vector<4x32xf32>, vector<1x32xf32> -> vector<1x32xf32>
    %25 = tpu.transpose %21, [1, 0] : vector<1x32xf32> -> vector<32x1xf32>
    %26 = vector.broadcast %25 : vector<32x1xf32> to vector<32x32xf32>
    %27 = vector.broadcast %24 : vector<1x32xf32> to vector<32x32xf32>
    %28 = arith.addf %26, %27 : vector<32x32xf32>
    %cst_23 = arith.constant 0.000000e+00 : f32
    %29 = vector.broadcast %cst_23 : f32 to vector<32x32xf32>
    %30 = arith.cmpf ogt, %28, %29 : vector<32x32xf32>
    %cst_24 = arith.constant 2.000000e-01 : f32
    %31 = vector.broadcast %cst_24 : f32 to vector<32x32xf32>
    %32 = arith.mulf %31, %28 : vector<32x32xf32>
    %33 = arith.select %30, %28, %32 : vector<32x32xi1>, vector<32x32xf32>
    %cst_25 = arith.constant dense<0xFF800000> : vector<32xf32>
    %34 = vector.multi_reduction <maximumf>, %33, %cst_25 [1] : vector<32x32xf32> to vector<32xf32>
    %35 = vector.shape_cast %34 : vector<32xf32> to vector<32x1xf32>
    %36 = vector.broadcast %35 : vector<32x1xf32> to vector<32x32xf32>
    %37 = arith.subf %33, %36 : vector<32x32xf32>
    %38 = math.exp %37 : vector<32x32xf32>
    %cst_26 = arith.constant dense<0.000000e+00> : vector<32xf32>
    %39 = vector.multi_reduction <add>, %38, %cst_26 [1] : vector<32x32xf32> to vector<32xf32>
    %40 = vector.shape_cast %39 : vector<32xf32> to vector<32x1xf32>
    %41 = tpu.reciprocal %40 {approx = true} : vector<32x1xf32> -> vector<32x1xf32>
    %42 = vector.broadcast %41 : vector<32x1xf32> to vector<32x32xf32>
    %43 = arith.mulf %38, %42 : vector<32x32xf32>
    %cst_27 = arith.constant dense<0.000000e+00> : vector<4x32xf32>
    %44 = tpu.matmul %18, %43, %cst_27 {dimension_numbers = #tpu.dot_dimension_numbers<[1], [1], [0], [0], [0, 0, 1, 0], [], []>} : vector<4x32xf32>, vector<32x32xf32>, vector<4x32xf32> -> vector<4x32xf32>
    %cst_28 = arith.constant 0.000000e+00 : f32
    %45 = vector.broadcast %cst_28 : f32 to vector<4x32xf32>
    %46 = arith.cmpf ogt, %44, %45 : vector<4x32xf32>
    %47 = math.exp %44 : vector<4x32xf32>
    %cst_29 = arith.constant 1.000000e+00 : f32
    %48 = vector.broadcast %cst_29 : f32 to vector<4x32xf32>
    %49 = arith.subf %47, %48 : vector<4x32xf32>
    %50 = arith.select %46, %44, %49 : vector<4x32xi1>, vector<4x32xf32>
    %51 = vector.extract_strided_slice %8 {offsets = [0, 32], sizes = [4, 32], strides = [1, 1]} : vector<4x96xf32> to vector<4x32xf32>
    %52 = vector.extract_strided_slice %10 {offsets = [1, 0, 0], sizes = [1, 4, 4], strides = [1, 1, 1]} : vector<3x4x4xf32> to vector<1x4x4xf32>
    %53 = vector.shape_cast %52 : vector<1x4x4xf32> to vector<4x4xf32>
    %cst_30 = arith.constant dense<0.000000e+00> : vector<4x32xf32>
    %54 = tpu.matmul %53, %51, %cst_30 {dimension_numbers = #tpu.dot_dimension_numbers<[1], [0], [0], [1], [0, 0, 1, 1], [], []>} : vector<4x4xf32>, vector<4x32xf32>, vector<4x32xf32> -> vector<4x32xf32>
    %55 = vector.extract_strided_slice %12 {offsets = [1, 0, 0], sizes = [1, 1, 4], strides = [1, 1, 1]} : vector<3x1x4xf32> to vector<1x1x4xf32>
    %56 = vector.shape_cast %55 : vector<1x1x4xf32> to vector<1x4xf32>
    %cst_31 = arith.constant dense<0.000000e+00> : vector<1x32xf32>
    %57 = tpu.matmul %56, %54, %cst_31 {dimension_numbers = #tpu.dot_dimension_numbers<[1], [0], [0], [1], [0, 0, 1, 1], [], []>} : vector<1x4xf32>, vector<4x32xf32>, vector<1x32xf32> -> vector<1x32xf32>
    %58 = vector.extract_strided_slice %14 {offsets = [1, 0, 0], sizes = [1, 1, 4], strides = [1, 1, 1]} : vector<3x1x4xf32> to vector<1x1x4xf32>
    %59 = vector.shape_cast %58 : vector<1x1x4xf32> to vector<1x4xf32>
    %cst_32 = arith.constant dense<0.000000e+00> : vector<1x32xf32>
    %60 = tpu.matmul %59, %54, %cst_32 {dimension_numbers = #tpu.dot_dimension_numbers<[1], [0], [0], [1], [0, 0, 1, 1], [], []>} : vector<1x4xf32>, vector<4x32xf32>, vector<1x32xf32> -> vector<1x32xf32>
    %61 = tpu.transpose %57, [1, 0] : vector<1x32xf32> -> vector<32x1xf32>
    %62 = vector.broadcast %61 : vector<32x1xf32> to vector<32x32xf32>
    %63 = vector.broadcast %60 : vector<1x32xf32> to vector<32x32xf32>
    %64 = arith.addf %62, %63 : vector<32x32xf32>
    %cst_33 = arith.constant 0.000000e+00 : f32
    %65 = vector.broadcast %cst_33 : f32 to vector<32x32xf32>
    %66 = arith.cmpf ogt, %64, %65 : vector<32x32xf32>
    %cst_34 = arith.constant 2.000000e-01 : f32
    %67 = vector.broadcast %cst_34 : f32 to vector<32x32xf32>
    %68 = arith.mulf %67, %64 : vector<32x32xf32>
    %69 = arith.select %66, %64, %68 : vector<32x32xi1>, vector<32x32xf32>
    %cst_35 = arith.constant dense<0xFF800000> : vector<32xf32>
    %70 = vector.multi_reduction <maximumf>, %69, %cst_35 [1] : vector<32x32xf32> to vector<32xf32>
    %71 = vector.shape_cast %70 : vector<32xf32> to vector<32x1xf32>
    %72 = vector.broadcast %71 : vector<32x1xf32> to vector<32x32xf32>
    %73 = arith.subf %69, %72 : vector<32x32xf32>
    %74 = math.exp %73 : vector<32x32xf32>
    %cst_36 = arith.constant dense<0.000000e+00> : vector<32xf32>
    %75 = vector.multi_reduction <add>, %74, %cst_36 [1] : vector<32x32xf32> to vector<32xf32>
    %76 = vector.shape_cast %75 : vector<32xf32> to vector<32x1xf32>
    %77 = tpu.reciprocal %76 {approx = true} : vector<32x1xf32> -> vector<32x1xf32>
    %78 = vector.broadcast %77 : vector<32x1xf32> to vector<32x32xf32>
    %79 = arith.mulf %74, %78 : vector<32x32xf32>
    %cst_37 = arith.constant dense<0.000000e+00> : vector<4x32xf32>
    %80 = tpu.matmul %54, %79, %cst_37 {dimension_numbers = #tpu.dot_dimension_numbers<[1], [1], [0], [0], [0, 0, 1, 0], [], []>} : vector<4x32xf32>, vector<32x32xf32>, vector<4x32xf32> -> vector<4x32xf32>
    %cst_38 = arith.constant 0.000000e+00 : f32
    %81 = vector.broadcast %cst_38 : f32 to vector<4x32xf32>
    %82 = arith.cmpf ogt, %80, %81 : vector<4x32xf32>
    %83 = math.exp %80 : vector<4x32xf32>
    %cst_39 = arith.constant 1.000000e+00 : f32
    %84 = vector.broadcast %cst_39 : f32 to vector<4x32xf32>
    %85 = arith.subf %83, %84 : vector<4x32xf32>
    %86 = arith.select %82, %80, %85 : vector<4x32xi1>, vector<4x32xf32>
    %87 = vector.extract_strided_slice %8 {offsets = [0, 64], sizes = [4, 32], strides = [1, 1]} : vector<4x96xf32> to vector<4x32xf32>
    %88 = vector.extract_strided_slice %10 {offsets = [2, 0, 0], sizes = [1, 4, 4], strides = [1, 1, 1]} : vector<3x4x4xf32> to vector<1x4x4xf32>
    %89 = vector.shape_cast %88 : vector<1x4x4xf32> to vector<4x4xf32>
    %cst_40 = arith.constant dense<0.000000e+00> : vector<4x32xf32>
    %90 = tpu.matmul %89, %87, %cst_40 {dimension_numbers = #tpu.dot_dimension_numbers<[1], [0], [0], [1], [0, 0, 1, 1], [], []>} : vector<4x4xf32>, vector<4x32xf32>, vector<4x32xf32> -> vector<4x32xf32>
    %91 = vector.extract_strided_slice %12 {offsets = [2, 0, 0], sizes = [1, 1, 4], strides = [1, 1, 1]} : vector<3x1x4xf32> to vector<1x1x4xf32>
    %92 = vector.shape_cast %91 : vector<1x1x4xf32> to vector<1x4xf32>
    %cst_41 = arith.constant dense<0.000000e+00> : vector<1x32xf32>
    %93 = tpu.matmul %92, %90, %cst_41 {dimension_numbers = #tpu.dot_dimension_numbers<[1], [0], [0], [1], [0, 0, 1, 1], [], []>} : vector<1x4xf32>, vector<4x32xf32>, vector<1x32xf32> -> vector<1x32xf32>
    %94 = vector.extract_strided_slice %14 {offsets = [2, 0, 0], sizes = [1, 1, 4], strides = [1, 1, 1]} : vector<3x1x4xf32> to vector<1x1x4xf32>
    %95 = vector.shape_cast %94 : vector<1x1x4xf32> to vector<1x4xf32>
    %cst_42 = arith.constant dense<0.000000e+00> : vector<1x32xf32>
    %96 = tpu.matmul %95, %90, %cst_42 {dimension_numbers = #tpu.dot_dimension_numbers<[1], [0], [0], [1], [0, 0, 1, 1], [], []>} : vector<1x4xf32>, vector<4x32xf32>, vector<1x32xf32> -> vector<1x32xf32>
    %97 = tpu.transpose %93, [1, 0] : vector<1x32xf32> -> vector<32x1xf32>
    %98 = vector.broadcast %97 : vector<32x1xf32> to vector<32x32xf32>
    %99 = vector.broadcast %96 : vector<1x32xf32> to vector<32x32xf32>
    %100 = arith.addf %98, %99 : vector<32x32xf32>
    %cst_43 = arith.constant 0.000000e+00 : f32
    %101 = vector.broadcast %cst_43 : f32 to vector<32x32xf32>
    %102 = arith.cmpf ogt, %100, %101 : vector<32x32xf32>
    %cst_44 = arith.constant 2.000000e-01 : f32
    %103 = vector.broadcast %cst_44 : f32 to vector<32x32xf32>
    %104 = arith.mulf %103, %100 : vector<32x32xf32>
    %105 = arith.select %102, %100, %104 : vector<32x32xi1>, vector<32x32xf32>
    %cst_45 = arith.constant dense<0xFF800000> : vector<32xf32>
    %106 = vector.multi_reduction <maximumf>, %105, %cst_45 [1] : vector<32x32xf32> to vector<32xf32>
    %107 = vector.shape_cast %106 : vector<32xf32> to vector<32x1xf32>
    %108 = vector.broadcast %107 : vector<32x1xf32> to vector<32x32xf32>
    %109 = arith.subf %105, %108 : vector<32x32xf32>
    %110 = math.exp %109 : vector<32x32xf32>
    %cst_46 = arith.constant dense<0.000000e+00> : vector<32xf32>
    %111 = vector.multi_reduction <add>, %110, %cst_46 [1] : vector<32x32xf32> to vector<32xf32>
    %112 = vector.shape_cast %111 : vector<32xf32> to vector<32x1xf32>
    %113 = tpu.reciprocal %112 {approx = true} : vector<32x1xf32> -> vector<32x1xf32>
    %114 = vector.broadcast %113 : vector<32x1xf32> to vector<32x32xf32>
    %115 = arith.mulf %110, %114 : vector<32x32xf32>
    %cst_47 = arith.constant dense<0.000000e+00> : vector<4x32xf32>
    %116 = tpu.matmul %90, %115, %cst_47 {dimension_numbers = #tpu.dot_dimension_numbers<[1], [1], [0], [0], [0, 0, 1, 0], [], []>} : vector<4x32xf32>, vector<32x32xf32>, vector<4x32xf32> -> vector<4x32xf32>
    %cst_48 = arith.constant 0.000000e+00 : f32
    %117 = vector.broadcast %cst_48 : f32 to vector<4x32xf32>
    %118 = arith.cmpf ogt, %116, %117 : vector<4x32xf32>
    %119 = math.exp %116 : vector<4x32xf32>
    %cst_49 = arith.constant 1.000000e+00 : f32
    %120 = vector.broadcast %cst_49 : f32 to vector<4x32xf32>
    %121 = arith.subf %119, %120 : vector<4x32xf32>
    %122 = arith.select %118, %116, %121 : vector<4x32xi1>, vector<4x32xf32>
    %123 = tpu.concatenate %50, %86, %122 in 1 : vector<4x32xf32>, vector<4x32xf32>, vector<4x32xf32> -> vector<4x96xf32>
    %c0_50 = arith.constant 0 : index
    %c0_51 = arith.constant 0 : index
    %c0_52 = arith.constant 0 : index
    %124 = vector.load %arg7[%c0_50, %c0_51, %c0_52] : memref<2x96x256xf32, #tpu.memory_space<vmem>>, vector<1x96x256xf32>
    %125 = vector.shape_cast %124 : vector<1x96x256xf32> to vector<96x256xf32>
    %cst_53 = arith.constant dense<0.000000e+00> : vector<4x256xf32>
    %126 = tpu.matmul %123, %125, %cst_53 {dimension_numbers = #tpu.dot_dimension_numbers<[1], [0], [0], [1], [0, 0, 1, 1], [], []>} : vector<4x96xf32>, vector<96x256xf32>, vector<4x256xf32> -> vector<4x256xf32>
    %c0_54 = arith.constant 0 : index
    %c0_55 = arith.constant 0 : index
    %c0_56 = arith.constant 0 : index
    %127 = vector.load %arg8[%c0_54, %c0_55, %c0_56] : memref<2x1x256xf32, #tpu.memory_space<vmem>>, vector<1x1x256xf32>
    %128 = vector.shape_cast %127 : vector<1x1x256xf32> to vector<1x256xf32>
    %129 = vector.broadcast %128 : vector<1x256xf32> to vector<4x256xf32>
    %130 = arith.addf %126, %129 : vector<4x256xf32>
    %c1 = arith.constant 1 : index
    %c0_57 = arith.constant 0 : index
    %c0_58 = arith.constant 0 : index
    %131 = vector.load %arg2[%c1, %c0_57, %c0_58] : memref<2x256x96xf32, #tpu.memory_space<vmem>>, vector<1x256x96xf32>
    %132 = vector.shape_cast %131 : vector<1x256x96xf32> to vector<256x96xf32>
    %cst_59 = arith.constant dense<0.000000e+00> : vector<4x96xf32>
    %133 = tpu.matmul %130, %132, %cst_59 {dimension_numbers = #tpu.dot_dimension_numbers<[1], [0], [0], [1], [0, 0, 1, 1], [], []>} : vector<4x256xf32>, vector<256x96xf32>, vector<4x96xf32> -> vector<4x96xf32>
    %c1_60 = arith.constant 1 : index
    %c0_61 = arith.constant 0 : index
    %c0_62 = arith.constant 0 : index
    %134 = vector.load %arg3[%c1_60, %c0_61, %c0_62] : memref<2x1x96xf32, #tpu.memory_space<vmem>>, vector<1x1x96xf32>
    %135 = vector.shape_cast %134 : vector<1x1x96xf32> to vector<1x96xf32>
    %136 = vector.broadcast %135 : vector<1x96xf32> to vector<4x96xf32>
    %137 = arith.addf %133, %136 : vector<4x96xf32>
    %c1_63 = arith.constant 1 : index
    %c0_64 = arith.constant 0 : index
    %c0_65 = arith.constant 0 : index
    %c0_66 = arith.constant 0 : index
    %138 = vector.load %arg4[%c1_63, %c0_64, %c0_65, %c0_66] : memref<2x3x4x4xf32, #tpu.memory_space<vmem>>, vector<1x3x4x4xf32>
    %139 = vector.shape_cast %138 : vector<1x3x4x4xf32> to vector<3x4x4xf32>
    %c1_67 = arith.constant 1 : index
    %c0_68 = arith.constant 0 : index
    %c0_69 = arith.constant 0 : index
    %c0_70 = arith.constant 0 : index
    %140 = vector.load %arg5[%c1_67, %c0_68, %c0_69, %c0_70] : memref<2x3x1x4xf32, #tpu.memory_space<vmem>>, vector<1x3x1x4xf32>
    %141 = vector.shape_cast %140 : vector<1x3x1x4xf32> to vector<3x1x4xf32>
    %c1_71 = arith.constant 1 : index
    %c0_72 = arith.constant 0 : index
    %c0_73 = arith.constant 0 : index
    %c0_74 = arith.constant 0 : index
    %142 = vector.load %arg6[%c1_71, %c0_72, %c0_73, %c0_74] : memref<2x3x1x4xf32, #tpu.memory_space<vmem>>, vector<1x3x1x4xf32>
    %143 = vector.shape_cast %142 : vector<1x3x1x4xf32> to vector<3x1x4xf32>
    %144 = vector.extract_strided_slice %137 {offsets = [0, 0], sizes = [4, 32], strides = [1, 1]} : vector<4x96xf32> to vector<4x32xf32>
    %145 = vector.extract_strided_slice %139 {offsets = [0, 0, 0], sizes = [1, 4, 4], strides = [1, 1, 1]} : vector<3x4x4xf32> to vector<1x4x4xf32>
    %146 = vector.shape_cast %145 : vector<1x4x4xf32> to vector<4x4xf32>
    %cst_75 = arith.constant dense<0.000000e+00> : vector<4x32xf32>
    %147 = tpu.matmul %146, %144, %cst_75 {dimension_numbers = #tpu.dot_dimension_numbers<[1], [0], [0], [1], [0, 0, 1, 1], [], []>} : vector<4x4xf32>, vector<4x32xf32>, vector<4x32xf32> -> vector<4x32xf32>
    %148 = vector.extract_strided_slice %141 {offsets = [0, 0, 0], sizes = [1, 1, 4], strides = [1, 1, 1]} : vector<3x1x4xf32> to vector<1x1x4xf32>
    %149 = vector.shape_cast %148 : vector<1x1x4xf32> to vector<1x4xf32>
    %cst_76 = arith.constant dense<0.000000e+00> : vector<1x32xf32>
    %150 = tpu.matmul %149, %147, %cst_76 {dimension_numbers = #tpu.dot_dimension_numbers<[1], [0], [0], [1], [0, 0, 1, 1], [], []>} : vector<1x4xf32>, vector<4x32xf32>, vector<1x32xf32> -> vector<1x32xf32>
    %151 = vector.extract_strided_slice %143 {offsets = [0, 0, 0], sizes = [1, 1, 4], strides = [1, 1, 1]} : vector<3x1x4xf32> to vector<1x1x4xf32>
    %152 = vector.shape_cast %151 : vector<1x1x4xf32> to vector<1x4xf32>
    %cst_77 = arith.constant dense<0.000000e+00> : vector<1x32xf32>
    %153 = tpu.matmul %152, %147, %cst_77 {dimension_numbers = #tpu.dot_dimension_numbers<[1], [0], [0], [1], [0, 0, 1, 1], [], []>} : vector<1x4xf32>, vector<4x32xf32>, vector<1x32xf32> -> vector<1x32xf32>
    %154 = tpu.transpose %150, [1, 0] : vector<1x32xf32> -> vector<32x1xf32>
    %155 = vector.broadcast %154 : vector<32x1xf32> to vector<32x32xf32>
    %156 = vector.broadcast %153 : vector<1x32xf32> to vector<32x32xf32>
    %157 = arith.addf %155, %156 : vector<32x32xf32>
    %cst_78 = arith.constant 0.000000e+00 : f32
    %158 = vector.broadcast %cst_78 : f32 to vector<32x32xf32>
    %159 = arith.cmpf ogt, %157, %158 : vector<32x32xf32>
    %cst_79 = arith.constant 2.000000e-01 : f32
    %160 = vector.broadcast %cst_79 : f32 to vector<32x32xf32>
    %161 = arith.mulf %160, %157 : vector<32x32xf32>
    %162 = arith.select %159, %157, %161 : vector<32x32xi1>, vector<32x32xf32>
    %cst_80 = arith.constant dense<0xFF800000> : vector<32xf32>
    %163 = vector.multi_reduction <maximumf>, %162, %cst_80 [1] : vector<32x32xf32> to vector<32xf32>
    %164 = vector.shape_cast %163 : vector<32xf32> to vector<32x1xf32>
    %165 = vector.broadcast %164 : vector<32x1xf32> to vector<32x32xf32>
    %166 = arith.subf %162, %165 : vector<32x32xf32>
    %167 = math.exp %166 : vector<32x32xf32>
    %cst_81 = arith.constant dense<0.000000e+00> : vector<32xf32>
    %168 = vector.multi_reduction <add>, %167, %cst_81 [1] : vector<32x32xf32> to vector<32xf32>
    %169 = vector.shape_cast %168 : vector<32xf32> to vector<32x1xf32>
    %170 = tpu.reciprocal %169 {approx = true} : vector<32x1xf32> -> vector<32x1xf32>
    %171 = vector.broadcast %170 : vector<32x1xf32> to vector<32x32xf32>
    %172 = arith.mulf %167, %171 : vector<32x32xf32>
    %cst_82 = arith.constant dense<0.000000e+00> : vector<4x32xf32>
    %173 = tpu.matmul %147, %172, %cst_82 {dimension_numbers = #tpu.dot_dimension_numbers<[1], [1], [0], [0], [0, 0, 1, 0], [], []>} : vector<4x32xf32>, vector<32x32xf32>, vector<4x32xf32> -> vector<4x32xf32>
    %cst_83 = arith.constant 0.000000e+00 : f32
    %174 = vector.broadcast %cst_83 : f32 to vector<4x32xf32>
    %175 = arith.cmpf ogt, %173, %174 : vector<4x32xf32>
    %176 = math.exp %173 : vector<4x32xf32>
    %cst_84 = arith.constant 1.000000e+00 : f32
    %177 = vector.broadcast %cst_84 : f32 to vector<4x32xf32>
    %178 = arith.subf %176, %177 : vector<4x32xf32>
    %179 = arith.select %175, %173, %178 : vector<4x32xi1>, vector<4x32xf32>
    %180 = vector.extract_strided_slice %137 {offsets = [0, 32], sizes = [4, 32], strides = [1, 1]} : vector<4x96xf32> to vector<4x32xf32>
    %181 = vector.extract_strided_slice %139 {offsets = [1, 0, 0], sizes = [1, 4, 4], strides = [1, 1, 1]} : vector<3x4x4xf32> to vector<1x4x4xf32>
    %182 = vector.shape_cast %181 : vector<1x4x4xf32> to vector<4x4xf32>
    %cst_85 = arith.constant dense<0.000000e+00> : vector<4x32xf32>
    %183 = tpu.matmul %182, %180, %cst_85 {dimension_numbers = #tpu.dot_dimension_numbers<[1], [0], [0], [1], [0, 0, 1, 1], [], []>} : vector<4x4xf32>, vector<4x32xf32>, vector<4x32xf32> -> vector<4x32xf32>
    %184 = vector.extract_strided_slice %141 {offsets = [1, 0, 0], sizes = [1, 1, 4], strides = [1, 1, 1]} : vector<3x1x4xf32> to vector<1x1x4xf32>
    %185 = vector.shape_cast %184 : vector<1x1x4xf32> to vector<1x4xf32>
    %cst_86 = arith.constant dense<0.000000e+00> : vector<1x32xf32>
    %186 = tpu.matmul %185, %183, %cst_86 {dimension_numbers = #tpu.dot_dimension_numbers<[1], [0], [0], [1], [0, 0, 1, 1], [], []>} : vector<1x4xf32>, vector<4x32xf32>, vector<1x32xf32> -> vector<1x32xf32>
    %187 = vector.extract_strided_slice %143 {offsets = [1, 0, 0], sizes = [1, 1, 4], strides = [1, 1, 1]} : vector<3x1x4xf32> to vector<1x1x4xf32>
    %188 = vector.shape_cast %187 : vector<1x1x4xf32> to vector<1x4xf32>
    %cst_87 = arith.constant dense<0.000000e+00> : vector<1x32xf32>
    %189 = tpu.matmul %188, %183, %cst_87 {dimension_numbers = #tpu.dot_dimension_numbers<[1], [0], [0], [1], [0, 0, 1, 1], [], []>} : vector<1x4xf32>, vector<4x32xf32>, vector<1x32xf32> -> vector<1x32xf32>
    %190 = tpu.transpose %186, [1, 0] : vector<1x32xf32> -> vector<32x1xf32>
    %191 = vector.broadcast %190 : vector<32x1xf32> to vector<32x32xf32>
    %192 = vector.broadcast %189 : vector<1x32xf32> to vector<32x32xf32>
    %193 = arith.addf %191, %192 : vector<32x32xf32>
    %cst_88 = arith.constant 0.000000e+00 : f32
    %194 = vector.broadcast %cst_88 : f32 to vector<32x32xf32>
    %195 = arith.cmpf ogt, %193, %194 : vector<32x32xf32>
    %cst_89 = arith.constant 2.000000e-01 : f32
    %196 = vector.broadcast %cst_89 : f32 to vector<32x32xf32>
    %197 = arith.mulf %196, %193 : vector<32x32xf32>
    %198 = arith.select %195, %193, %197 : vector<32x32xi1>, vector<32x32xf32>
    %cst_90 = arith.constant dense<0xFF800000> : vector<32xf32>
    %199 = vector.multi_reduction <maximumf>, %198, %cst_90 [1] : vector<32x32xf32> to vector<32xf32>
    %200 = vector.shape_cast %199 : vector<32xf32> to vector<32x1xf32>
    %201 = vector.broadcast %200 : vector<32x1xf32> to vector<32x32xf32>
    %202 = arith.subf %198, %201 : vector<32x32xf32>
    %203 = math.exp %202 : vector<32x32xf32>
    %cst_91 = arith.constant dense<0.000000e+00> : vector<32xf32>
    %204 = vector.multi_reduction <add>, %203, %cst_91 [1] : vector<32x32xf32> to vector<32xf32>
    %205 = vector.shape_cast %204 : vector<32xf32> to vector<32x1xf32>
    %206 = tpu.reciprocal %205 {approx = true} : vector<32x1xf32> -> vector<32x1xf32>
    %207 = vector.broadcast %206 : vector<32x1xf32> to vector<32x32xf32>
    %208 = arith.mulf %203, %207 : vector<32x32xf32>
    %cst_92 = arith.constant dense<0.000000e+00> : vector<4x32xf32>
    %209 = tpu.matmul %183, %208, %cst_92 {dimension_numbers = #tpu.dot_dimension_numbers<[1], [1], [0], [0], [0, 0, 1, 0], [], []>} : vector<4x32xf32>, vector<32x32xf32>, vector<4x32xf32> -> vector<4x32xf32>
    %cst_93 = arith.constant 0.000000e+00 : f32
    %210 = vector.broadcast %cst_93 : f32 to vector<4x32xf32>
    %211 = arith.cmpf ogt, %209, %210 : vector<4x32xf32>
    %212 = math.exp %209 : vector<4x32xf32>
    %cst_94 = arith.constant 1.000000e+00 : f32
    %213 = vector.broadcast %cst_94 : f32 to vector<4x32xf32>
    %214 = arith.subf %212, %213 : vector<4x32xf32>
    %215 = arith.select %211, %209, %214 : vector<4x32xi1>, vector<4x32xf32>
    %216 = vector.extract_strided_slice %137 {offsets = [0, 64], sizes = [4, 32], strides = [1, 1]} : vector<4x96xf32> to vector<4x32xf32>
    %217 = vector.extract_strided_slice %139 {offsets = [2, 0, 0], sizes = [1, 4, 4], strides = [1, 1, 1]} : vector<3x4x4xf32> to vector<1x4x4xf32>
    %218 = vector.shape_cast %217 : vector<1x4x4xf32> to vector<4x4xf32>
    %cst_95 = arith.constant dense<0.000000e+00> : vector<4x32xf32>
    %219 = tpu.matmul %218, %216, %cst_95 {dimension_numbers = #tpu.dot_dimension_numbers<[1], [0], [0], [1], [0, 0, 1, 1], [], []>} : vector<4x4xf32>, vector<4x32xf32>, vector<4x32xf32> -> vector<4x32xf32>
    %220 = vector.extract_strided_slice %141 {offsets = [2, 0, 0], sizes = [1, 1, 4], strides = [1, 1, 1]} : vector<3x1x4xf32> to vector<1x1x4xf32>
    %221 = vector.shape_cast %220 : vector<1x1x4xf32> to vector<1x4xf32>
    %cst_96 = arith.constant dense<0.000000e+00> : vector<1x32xf32>
    %222 = tpu.matmul %221, %219, %cst_96 {dimension_numbers = #tpu.dot_dimension_numbers<[1], [0], [0], [1], [0, 0, 1, 1], [], []>} : vector<1x4xf32>, vector<4x32xf32>, vector<1x32xf32> -> vector<1x32xf32>
    %223 = vector.extract_strided_slice %143 {offsets = [2, 0, 0], sizes = [1, 1, 4], strides = [1, 1, 1]} : vector<3x1x4xf32> to vector<1x1x4xf32>
    %224 = vector.shape_cast %223 : vector<1x1x4xf32> to vector<1x4xf32>
    %cst_97 = arith.constant dense<0.000000e+00> : vector<1x32xf32>
    %225 = tpu.matmul %224, %219, %cst_97 {dimension_numbers = #tpu.dot_dimension_numbers<[1], [0], [0], [1], [0, 0, 1, 1], [], []>} : vector<1x4xf32>, vector<4x32xf32>, vector<1x32xf32> -> vector<1x32xf32>
    %226 = tpu.transpose %222, [1, 0] : vector<1x32xf32> -> vector<32x1xf32>
    %227 = vector.broadcast %226 : vector<32x1xf32> to vector<32x32xf32>
    %228 = vector.broadcast %225 : vector<1x32xf32> to vector<32x32xf32>
    %229 = arith.addf %227, %228 : vector<32x32xf32>
    %cst_98 = arith.constant 0.000000e+00 : f32
    %230 = vector.broadcast %cst_98 : f32 to vector<32x32xf32>
    %231 = arith.cmpf ogt, %229, %230 : vector<32x32xf32>
    %cst_99 = arith.constant 2.000000e-01 : f32
    %232 = vector.broadcast %cst_99 : f32 to vector<32x32xf32>
    %233 = arith.mulf %232, %229 : vector<32x32xf32>
    %234 = arith.select %231, %229, %233 : vector<32x32xi1>, vector<32x32xf32>
    %cst_100 = arith.constant dense<0xFF800000> : vector<32xf32>
    %235 = vector.multi_reduction <maximumf>, %234, %cst_100 [1] : vector<32x32xf32> to vector<32xf32>
    %236 = vector.shape_cast %235 : vector<32xf32> to vector<32x1xf32>
    %237 = vector.broadcast %236 : vector<32x1xf32> to vector<32x32xf32>
    %238 = arith.subf %234, %237 : vector<32x32xf32>
    %239 = math.exp %238 : vector<32x32xf32>
    %cst_101 = arith.constant dense<0.000000e+00> : vector<32xf32>
    %240 = vector.multi_reduction <add>, %239, %cst_101 [1] : vector<32x32xf32> to vector<32xf32>
    %241 = vector.shape_cast %240 : vector<32xf32> to vector<32x1xf32>
    %242 = tpu.reciprocal %241 {approx = true} : vector<32x1xf32> -> vector<32x1xf32>
    %243 = vector.broadcast %242 : vector<32x1xf32> to vector<32x32xf32>
    %244 = arith.mulf %239, %243 : vector<32x32xf32>
    %cst_102 = arith.constant dense<0.000000e+00> : vector<4x32xf32>
    %245 = tpu.matmul %219, %244, %cst_102 {dimension_numbers = #tpu.dot_dimension_numbers<[1], [1], [0], [0], [0, 0, 1, 0], [], []>} : vector<4x32xf32>, vector<32x32xf32>, vector<4x32xf32> -> vector<4x32xf32>
    %cst_103 = arith.constant 0.000000e+00 : f32
    %246 = vector.broadcast %cst_103 : f32 to vector<4x32xf32>
    %247 = arith.cmpf ogt, %245, %246 : vector<4x32xf32>
    %248 = math.exp %245 : vector<4x32xf32>
    %cst_104 = arith.constant 1.000000e+00 : f32
    %249 = vector.broadcast %cst_104 : f32 to vector<4x32xf32>
    %250 = arith.subf %248, %249 : vector<4x32xf32>
    %251 = arith.select %247, %245, %250 : vector<4x32xi1>, vector<4x32xf32>
    %252 = tpu.concatenate %179, %215, %251 in 1 : vector<4x32xf32>, vector<4x32xf32>, vector<4x32xf32> -> vector<4x96xf32>
    %c1_105 = arith.constant 1 : index
    %c0_106 = arith.constant 0 : index
    %c0_107 = arith.constant 0 : index
    %253 = vector.load %arg7[%c1_105, %c0_106, %c0_107] : memref<2x96x256xf32, #tpu.memory_space<vmem>>, vector<1x96x256xf32>
    %254 = vector.shape_cast %253 : vector<1x96x256xf32> to vector<96x256xf32>
    %cst_108 = arith.constant dense<0.000000e+00> : vector<4x256xf32>
    %255 = tpu.matmul %252, %254, %cst_108 {dimension_numbers = #tpu.dot_dimension_numbers<[1], [0], [0], [1], [0, 0, 1, 1], [], []>} : vector<4x96xf32>, vector<96x256xf32>, vector<4x256xf32> -> vector<4x256xf32>
    %c1_109 = arith.constant 1 : index
    %c0_110 = arith.constant 0 : index
    %c0_111 = arith.constant 0 : index
    %256 = vector.load %arg8[%c1_109, %c0_110, %c0_111] : memref<2x1x256xf32, #tpu.memory_space<vmem>>, vector<1x1x256xf32>
    %257 = vector.shape_cast %256 : vector<1x1x256xf32> to vector<1x256xf32>
    %258 = vector.broadcast %257 : vector<1x256xf32> to vector<4x256xf32>
    %259 = arith.addf %255, %258 : vector<4x256xf32>
    %c0_112 = arith.constant 0 : index
    %c0_113 = arith.constant 0 : index
    %c0_114 = arith.constant 0 : index
    %260 = vector.load %arg9[%c0_112, %c0_113, %c0_114] : memref<1x4x256xf32, #tpu.memory_space<vmem>>, vector<1x4x256xf32>
    %261 = vector.shape_cast %260 : vector<1x4x256xf32> to vector<4x256xf32>
    %262 = vector.shape_cast %259 : vector<4x256xf32> to vector<1x4x256xf32>
    tpu.vector_store %arg9[%c0_112, %c0_113, %c0_114], %262 {strides = array<i32>} : memref<1x4x256xf32, #tpu.memory_space<vmem>>, vector<1x4x256xf32>,
    return
  }
  func.func @transform_0(%arg0: i32) -> (i32, i32, i32) {
    %c0_i32 = arith.constant 0 : i32
    %c0_i32_0 = arith.constant 0 : i32
    %c0_i32_1 = arith.constant 0 : i32
    return %arg0, %c0_i32, %c0_i32_0 : i32, i32, i32
  }
  func.func @transform_1(%arg0: i32) -> (i32, i32, i32) {
    %c0_i32 = arith.constant 0 : i32
    %c0_i32_0 = arith.constant 0 : i32
    %c0_i32_1 = arith.constant 0 : i32
    %c0_i32_2 = arith.constant 0 : i32
    return %c0_i32, %c0_i32_0, %c0_i32_1 : i32, i32, i32
  }
  func.func @transform_2(%arg0: i32) -> (i32, i32, i32) {
    %c0_i32 = arith.constant 0 : i32
    %c0_i32_0 = arith.constant 0 : i32
    %c0_i32_1 = arith.constant 0 : i32
    %c0_i32_2 = arith.constant 0 : i32
    return %c0_i32, %c0_i32_0, %c0_i32_1 : i32, i32, i32
  }
  func.func @transform_3(%arg0: i32) -> (i32, i32, i32, i32) {
    %c0_i32 = arith.constant 0 : i32
    %c0_i32_0 = arith.constant 0 : i32
    %c0_i32_1 = arith.constant 0 : i32
    %c0_i32_2 = arith.constant 0 : i32
    %c0_i32_3 = arith.constant 0 : i32
    return %c0_i32, %c0_i32_0, %c0_i32_1, %c0_i32_2 : i32, i32, i32, i32
  }
  func.func @transform_4(%arg0: i32) -> (i32, i32, i32, i32) {
    %c0_i32 = arith.constant 0 : i32
    %c0_i32_0 = arith.constant 0 : i32
    %c0_i32_1 = arith.constant 0 : i32
    %c0_i32_2 = arith.constant 0 : i32
    %c0_i32_3 = arith.constant 0 : i32
    return %c0_i32, %c0_i32_0, %c0_i32_1, %c0_i32_2 : i32, i32, i32, i32
  }
  func.func @transform_5(%arg0: i32) -> (i32, i32, i32, i32) {
    %c0_i32 = arith.constant 0 : i32
    %c0_i32_0 = arith.constant 0 : i32
    %c0_i32_1 = arith.constant 0 : i32
    %c0_i32_2 = arith.constant 0 : i32
    %c0_i32_3 = arith.constant 0 : i32
    return %c0_i32, %c0_i32_0, %c0_i32_1, %c0_i32_2 : i32, i32, i32, i32
  }
  func.func @transform_6(%arg0: i32) -> (i32, i32, i32) {
    %c0_i32 = arith.constant 0 : i32
    %c0_i32_0 = arith.constant 0 : i32
    %c0_i32_1 = arith.constant 0 : i32
    %c0_i32_2 = arith.constant 0 : i32
    return %c0_i32, %c0_i32_0, %c0_i32_1 : i32, i32, i32
  }
  func.func @transform_7(%arg0: i32) -> (i32, i32, i32) {
    %c0_i32 = arith.constant 0 : i32
    %c0_i32_0 = arith.constant 0 : i32
    %c0_i32_1 = arith.constant 0 : i32
    %c0_i32_2 = arith.constant 0 : i32
    return %c0_i32, %c0_i32_0, %c0_i32_1 : i32, i32, i32
  }
  func.func @transform_8(%arg0: i32) -> (i32, i32, i32) {
    %c0_i32 = arith.constant 0 : i32
    %c0_i32_0 = arith.constant 0 : i32
    %c0_i32_1 = arith.constant 0 : i32
    return %arg0, %c0_i32, %c0_i32_0 : i32, i32, i32
  }
}

</mosaic_0001>

<llo_original>
// kernel: tpu_custom_call.1
$region0: #{tpu_custom_call.1}
  #allocation0 [shape = 'u32[]', space=smem, size = 0x4, offset = 0x4, fixed_abs, tag = 'smem constant byte address 0x4 - core index']
  #allocation1 [shape = 'u32[144,128]{1,0:T(1,128)}', space=vmem, size = 0x12000, scoped, tag = 'internal scratch']
  %s0 = inlined_call_operand.vmem [shape: f32[2,4,256], index: 0, kind: input, shape index: {}]
  %s1 = inlined_call_operand.vmem [shape: f32[2,256,96], index: 1, kind: input, shape index: {}]
  %s2 = inlined_call_operand.vmem [shape: f32[2,1,96], index: 2, kind: input, shape index: {}]
  %s3 = inlined_call_operand.vmem [shape: f32[2,3,4,4], index: 3, kind: input, shape index: {}]
  %s4 = inlined_call_operand.vmem [shape: f32[2,3,1,4], index: 4, kind: input, shape index: {}]
  %s5 = inlined_call_operand.vmem [shape: f32[2,3,1,4], index: 5, kind: input, shape index: {}]
  %s6 = inlined_call_operand.vmem [shape: f32[2,96,256], index: 6, kind: input, shape index: {}]
  %s7 = inlined_call_operand.vmem [shape: f32[2,1,256], index: 7, kind: input, shape index: {}]
  %s8 = inlined_call_operand.hbm [shape: f32[2,4,256], index: 8, kind: output, shape index: {}]
  %s9 = sld [smem:[#allocation0]]
  $region65: #{tpu_custom_call.1} parent=0
    _
  %s11 = ssub.s32 1, %s9
  %s12 = scalar_select 0, %s11, %s9
  $region1: #{tpu_custom_call.1} parent=0
    #allocation2 [shape = 'u8[8192]{0}', space=vmem, size = 0x2000, scoped, tag = 'output window, operand 0']
    #allocation3 [shape = 's32[2]{0}', space=sflag, size = 0x8, scoped, tag = 'scoped memory for tpu_custom_call.1']
    %13 = vsyncpa [#allocation3], 0
    %s14 = scalar_lea.sflag [#allocation3], 1
    %15 = vsyncpa %s14, 0
    loop: start=0, step=1, limit=4
    $region2: #{tpu_custom_call.1} parent=1 // loop_pre_header
      _
    $region3: #{tpu_custom_call.1} parent=1 // loop_header
      %s17 = sphi 0, %s21
      %p18 = scmp.ge.s32.totalorder %s17, 4
      %s27 = sphi 0, %s29
      %s30 = sphi 0, %s27
      %s31 = sphi 0, %s30
      %s47 = sphi 0, %s31
      %s51 = sphi 0, %s51
      %s53 = sphi 0, %s51
      %s54 = sphi 0, %s53
      %s68 = sphi 0, %s54
      %s72 = sphi 0, %s72
      %s74 = sphi 0, %s72
      %s75 = sphi 0, %s74
      %s89 = sphi 0, %s75
      %s93 = sphi 0, %s93
      %s95 = sphi 0, %s93
      %s96 = sphi 0, %s95
      %s110 = sphi 0, %s96
      %s114 = sphi 0, %s114
      %s116 = sphi 0, %s114
      %s117 = sphi 0, %s116
      %s131 = sphi 0, %s117
      %s135 = sphi 0, %s135
      %s137 = sphi 0, %s135
      %s138 = sphi 0, %s137
      %s152 = sphi 0, %s138
      %s156 = sphi 0, %s156
      %s158 = sphi 0, %s156
      %s159 = sphi 0, %s158
      %s173 = sphi 0, %s159
      %s177 = sphi 0, %s177
      %s179 = sphi 0, %s177
      %s180 = sphi 0, %s179
      %s194 = sphi 0, %s180
      %s200 = sphi 0, %s202
      %s203 = sphi 0, %s200
      %s204 = sphi 0, %s203
      %s220 = sphi 0, %s204
    $region4: #{tpu_custom_call.1} parent=1 // loop_header_branch
      %20 = sbr.rel (%p18) target = $region8
    $region5: #{tpu_custom_call.1} parent=1 // loop_body
      %s22 = ssub.s32 %s17, 1
      %s23 = ssub.s32 %s17, 2
      %s24 = sadd.s32 %s17, 1
      %s25 = ssub.s32 %s17, %s24
      %p26 = scmp.eq.s32.totalorder %s25, 0
      %s28 = sadd.s32 %s27, 1
      %s29 = scalar_select %p26, %s27, %s28
      %p32 = pneg %p26
      %p33 = scmp.eq.s32.totalorder %s17, 1
      %p34 = por %p32, %p33
      %p35 = scmp.ne.s32.totalorder %s27, %s30
      %p36 = scmp.eq.s32.totalorder %s17, 0
      %p37 = por %p35, %p36
      %p38 = scmp.ne.s32.totalorder %s27, %s30
      %p39 = scmp.eq.s32.totalorder %s22, 1
      %p40 = por %p38, %p39
      %p41 = scmp.ne.s32.totalorder %s30, %s31
      %p42 = scmp.eq.s32.totalorder %s22, 0
      %p43 = por %p41, %p42
      %p44 = scmp.ne.s32.totalorder %s30, %s31
      %p45 = scmp.eq.s32.totalorder %s23, 1
      %p46 = por %p44, %p45
      %p48 = scmp.ne.s32.totalorder %s31, %s47
      %p49 = scmp.eq.s32.totalorder %s23, 0
      %p50 = por %p48, %p49
      %s52 = sadd.s32 %s51, 1
      %p55 = scmp.eq.s32.totalorder %s17, 1
      %p56 = scmp.ne.s32.totalorder %s51, %s53
      %p57 = scmp.eq.s32.totalorder %s17, 0
      %p58 = por %p56, %p57
      %p59 = scmp.ne.s32.totalorder %s51, %s53
      %p60 = scmp.eq.s32.totalorder %s22, 1
      %p61 = por %p59, %p60
      %p62 = scmp.ne.s32.totalorder %s53, %s54
      %p63 = scmp.eq.s32.totalorder %s22, 0
      %p64 = por %p62, %p63
      %p65 = scmp.ne.s32.totalorder %s53, %s54
      %p66 = scmp.eq.s32.totalorder %s23, 1
      %p67 = por %p65, %p66
      %p69 = scmp.ne.s32.totalorder %s54, %s68
      %p70 = scmp.eq.s32.totalorder %s23, 0
      %p71 = por %p69, %p70
      %s73 = sadd.s32 %s72, 1
      %p76 = scmp.eq.s32.totalorder %s17, 1
      %p77 = scmp.ne.s32.totalorder %s72, %s74
      %p78 = scmp.eq.s32.totalorder %s17, 0
      %p79 = por %p77, %p78
      %p80 = scmp.ne.s32.totalorder %s72, %s74
      %p81 = scmp.eq.s32.totalorder %s22, 1
      %p82 = por %p80, %p81
      %p83 = scmp.ne.s32.totalorder %s74, %s75
      %p84 = scmp.eq.s32.totalorder %s22, 0
      %p85 = por %p83, %p84
      %p86 = scmp.ne.s32.totalorder %s74, %s75
      %p87 = scmp.eq.s32.totalorder %s23, 1
      %p88 = por %p86, %p87
      %p90 = scmp.ne.s32.totalorder %s75, %s89
      %p91 = scmp.eq.s32.totalorder %s23, 0
      %p92 = por %p90, %p91
      %s94 = sadd.s32 %s93, 1
      %p97 = scmp.eq.s32.totalorder %s17, 1
      %p98 = scmp.ne.s32.totalorder %s93, %s95
      %p99 = scmp.eq.s32.totalorder %s17, 0
      %p100 = por %p98, %p99
      %p101 = scmp.ne.s32.totalorder %s93, %s95
      %p102 = scmp.eq.s32.totalorder %s22, 1
      %p103 = por %p101, %p102
      %p104 = scmp.ne.s32.totalorder %s95, %s96
      %p105 = scmp.eq.s32.totalorder %s22, 0
      %p106 = por %p104, %p105
      %p107 = scmp.ne.s32.totalorder %s95, %s96
      %p108 = scmp.eq.s32.totalorder %s23, 1
      %p109 = por %p107, %p108
      %p111 = scmp.ne.s32.totalorder %s96, %s110
      %p112 = scmp.eq.s32.totalorder %s23, 0
      %p113 = por %p111, %p112
      %s115 = sadd.s32 %s114, 1
      %p118 = scmp.eq.s32.totalorder %s17, 1
      %p119 = scmp.ne.s32.totalorder %s114, %s116
      %p120 = scmp.eq.s32.totalorder %s17, 0
      %p121 = por %p119, %p120
      %p122 = scmp.ne.s32.totalorder %s114, %s116
      %p123 = scmp.eq.s32.totalorder %s22, 1
      %p124 = por %p122, %p123
      %p125 = scmp.ne.s32.totalorder %s116, %s117
      %p126 = scmp.eq.s32.totalorder %s22, 0
      %p127 = por %p125, %p126
      %p128 = scmp.ne.s32.totalorder %s116, %s117
      %p129 = scmp.eq.s32.totalorder %s23, 1
      %p130 = por %p128, %p129
      %p132 = scmp.ne.s32.totalorder %s117, %s131
      %p133 = scmp.eq.s32.totalorder %s23, 0
      %p134 = por %p132, %p133
      %s136 = sadd.s32 %s135, 1
      %p139 = scmp.eq.s32.totalorder %s17, 1
      %p140 = scmp.ne.s32.totalorder %s135, %s137
      %p141 = scmp.eq.s32.totalorder %s17, 0
      %p142 = por %p140, %p141
      %p143 = scmp.ne.s32.totalorder %s135, %s137
      %p144 = scmp.eq.s32.totalorder %s22, 1
      %p145 = por %p143, %p144
      %p146 = scmp.ne.s32.totalorder %s137, %s138
      %p147 = scmp.eq.s32.totalorder %s22, 0
      %p148 = por %p146, %p147
      %p149 = scmp.ne.s32.totalorder %s137, %s138
      %p150 = scmp.eq.s32.totalorder %s23, 1
      %p151 = por %p149, %p150
      %p153 = scmp.ne.s32.totalorder %s138, %s152
      %p154 = scmp.eq.s32.totalorder %s23, 0
      %p155 = por %p153, %p154
      %s157 = sadd.s32 %s156, 1
      %p160 = scmp.eq.s32.totalorder %s17, 1
      %p161 = scmp.ne.s32.totalorder %s156, %s158
      %p162 = scmp.eq.s32.totalorder %s17, 0
      %p163 = por %p161, %p162
      %p164 = scmp.ne.s32.totalorder %s156, %s158
      %p165 = scmp.eq.s32.totalorder %s22, 1
      %p166 = por %p164, %p165
      %p167 = scmp.ne.s32.totalorder %s158, %s159
      %p168 = scmp.eq.s32.totalorder %s22, 0
      %p169 = por %p167, %p168
      %p170 = scmp.ne.s32.totalorder %s158, %s159
      %p171 = scmp.eq.s32.totalorder %s23, 1
      %p172 = por %p170, %p171
      %p174 = scmp.ne.s32.totalorder %s159, %s173
      %p175 = scmp.eq.s32.totalorder %s23, 0
      %p176 = por %p174, %p175
      %s178 = sadd.s32 %s177, 1
      %p181 = scmp.eq.s32.totalorder %s17, 1
      %p182 = scmp.ne.s32.totalorder %s177, %s179
      %p183 = scmp.eq.s32.totalorder %s17, 0
      %p184 = por %p182, %p183
      %p185 = scmp.ne.s32.totalorder %s177, %s179
      %p186 = scmp.eq.s32.totalorder %s22, 1
      %p187 = por %p185, %p186
      %p188 = scmp.ne.s32.totalorder %s179, %s180
      %p189 = scmp.eq.s32.totalorder %s22, 0
      %p190 = por %p188, %p189
      %p191 = scmp.ne.s32.totalorder %s179, %s180
      %p192 = scmp.eq.s32.totalorder %s23, 1
      %p193 = por %p191, %p192
      %p195 = scmp.ne.s32.totalorder %s180, %s194
      %p196 = scmp.eq.s32.totalorder %s23, 0
      %p197 = por %p195, %p196
      %s198 = ssub.s32 %s17, %s24
      %p199 = scmp.eq.s32.totalorder %s198, 0
      %s201 = sadd.s32 %s200, 1
      %s202 = scalar_select %p199, %s200, %s201
      %p205 = pneg %p199
      %p206 = scmp.eq.s32.totalorder %s17, 1
      %p207 = por %p205, %p206
      %p208 = scmp.ne.s32.totalorder %s200, %s203
      %p209 = scmp.eq.s32.totalorder %s17, 0
      %p210 = por %p208, %p209
      %p211 = scmp.ne.s32.totalorder %s200, %s203
      %p212 = scmp.eq.s32.totalorder %s22, 1
      %p213 = por %p211, %p212
      %p214 = scmp.ne.s32.totalorder %s203, %s204
      %p215 = scmp.eq.s32.totalorder %s22, 0
      %p216 = por %p214, %p215
      %p217 = scmp.ne.s32.totalorder %s203, %s204
      %p218 = scmp.eq.s32.totalorder %s23, 1
      %p219 = por %p217, %p218
      %p221 = scmp.ne.s32.totalorder %s204, %s220
      %p222 = scmp.eq.s32.totalorder %s23, 0
      %p223 = por %p221, %p222
      %p224 = scmp.le.s32.totalorder 1, %s17
      %p225 = scmp.lt.s32.totalorder %s17, 3
      %p226 = pnand %p224, %p225
      %p227 = pneg %p226
      // Predicated region
      $region9: #{tpu_custom_call.1} parent=5 // pred_check
        _
      $region10: #{tpu_custom_call.1} parent=5 // pred_check_branch
        %229 = sbr.rel (%p226) target = $region12
      $region11: #{tpu_custom_call.1} parent=5 // pred_region
        %s230 = ssub.s32 %s17, 1
        // Predicated region
        $region13: #{tpu_custom_call.1} parent=11 // pred_check
          %p231 = pneg %p64
        $region14: #{tpu_custom_call.1} parent=11 // pred_check_branch
          %233 = sbr.rel (%p231) target = $region16
        $region15: #{tpu_custom_call.1} parent=11 // pred_region
          _
        $region16: #{tpu_custom_call.1} parent=11 // pred_fallthru
          _
        // Predicated region
        $region17: #{tpu_custom_call.1} parent=11 // pred_check
          %p234 = pneg %p85
        $region18: #{tpu_custom_call.1} parent=11 // pred_check_branch
          %236 = sbr.rel (%p234) target = $region20
        $region19: #{tpu_custom_call.1} parent=11 // pred_region
          _
        $region20: #{tpu_custom_call.1} parent=11 // pred_fallthru
          _
        // Predicated region
        $region21: #{tpu_custom_call.1} parent=11 // pred_check
          %p237 = pneg %p106
        $region22: #{tpu_custom_call.1} parent=11 // pred_check_branch
          %239 = sbr.rel (%p237) target = $region24
        $region23: #{tpu_custom_call.1} parent=11 // pred_region
          _
        $region24: #{tpu_custom_call.1} parent=11 // pred_fallthru
          _
        // Predicated region
        $region25: #{tpu_custom_call.1} parent=11 // pred_check
          %p240 = pneg %p127
        $region26: #{tpu_custom_call.1} parent=11 // pred_check_branch
          %242 = sbr.rel (%p240) target = $region28
        $region27: #{tpu_custom_call.1} parent=11 // pred_region
          _
        $region28: #{tpu_custom_call.1} parent=11 // pred_fallthru
          _
        // Predicated region
        $region29: #{tpu_custom_call.1} parent=11 // pred_check
          %p243 = pneg %p148
        $region30: #{tpu_custom_call.1} parent=11 // pred_check_branch
          %245 = sbr.rel (%p243) target = $region32
        $region31: #{tpu_custom_call.1} parent=11 // pred_region
          _
        $region32: #{tpu_custom_call.1} parent=11 // pred_fallthru
          _
        // Predicated region
        $region33: #{tpu_custom_call.1} parent=11 // pred_check
          %p246 = pneg %p169
        $region34: #{tpu_custom_call.1} parent=11 // pred_check_branch
          %248 = sbr.rel (%p246) target = $region36
        $region35: #{tpu_custom_call.1} parent=11 // pred_region
          _
        $region36: #{tpu_custom_call.1} parent=11 // pred_fallthru
          _
        // Predicated region
        $region37: #{tpu_custom_call.1} parent=11 // pred_check
          %p249 = pneg %p190
        $region38: #{tpu_custom_call.1} parent=11 // pred_check_branch
          %251 = sbr.rel (%p249) target = $region40
        $region39: #{tpu_custom_call.1} parent=11 // pred_region
          _
        $region40: #{tpu_custom_call.1} parent=11 // pred_fallthru
          _
      $region12: #{tpu_custom_call.1} parent=5 // pred_fallthru
        _
      %p252 = scmp.lt.s32.totalorder %s17, 2
      // Predicated region
      $region41: #{tpu_custom_call.1} parent=5 // pred_check
        %p253 = pneg %p252
      $region42: #{tpu_custom_call.1} parent=5 // pred_check_branch
        %255 = sbr.rel (%p253) target = $region44
      $region43: #{tpu_custom_call.1} parent=5 // pred_region
        // Predicated region
        $region45: #{tpu_custom_call.1} parent=43 // pred_check
          %p256 = pneg %p37
        $region46: #{tpu_custom_call.1} parent=43 // pred_check_branch
          %258 = sbr.rel (%p256) target = $region48
        $region47: #{tpu_custom_call.1} parent=43 // pred_region
          %p259 = scmp.lt.s32.totalorder %s17, 1
          %s260 = scalar_select %p259, %s17, 1
          %s261 = smul.addr %s260, 2
          %s262 = smul.addr %s261, 4
          %s263 = scalar_lea.vmem %s0, %s262
        $region48: #{tpu_custom_call.1} parent=43 // pred_fallthru
          _
      $region44: #{tpu_custom_call.1} parent=5 // pred_fallthru
        _
      %p264 = scmp.le.s32.totalorder 1, %s17
      %p265 = scmp.lt.s32.totalorder %s17, 3
      %p266 = pnand %p264, %p265
      %p267 = pneg %p266
      // Predicated region
      $region49: #{tpu_custom_call.1} parent=5 // pred_check
        _
      $region50: #{tpu_custom_call.1} parent=5 // pred_check_branch
        %269 = sbr.rel (%p266) target = $region52
      $region51: #{tpu_custom_call.1} parent=5 // pred_region
        %s270 = ssub.s32 %s17, 1
        %p271 = scmp.lt.s32.totalorder %s22, 1
        %s272 = scalar_select %p271, %s22, 1
        %s273 = smul.addr %s272, 2
        %s274 = smul.addr %s273, 4
        %s275 = scalar_lea.vmem %s0, %s274
        %p276 = pneg %p43
        %p277 = pneg %p40
        %p278 = pneg %p64
        %p279 = pneg %p61
        %p280 = pneg %p85
        %p281 = pneg %p82
        %p282 = pneg %p106
        %p283 = pneg %p103
        %p284 = pneg %p127
        %p285 = pneg %p124
        %p286 = pneg %p148
        %p287 = pneg %p145
        %p288 = pneg %p169
        %p289 = pneg %p166
        %p290 = pneg %p190
        %p291 = pneg %p187
        %p292 = pneg %p216
        %p293 = pneg %p213
        %s294 = sand.u32 %s203, 1
        %s295 = scalar_lea.sflag [#allocation3], %s294
        %s296 = sand.u32 %s203, 1
        %s297 = smul.addr %s296, 8
        %s298 = scalar_lea.vmem [#allocation2], %s297
        %p299 = scmp.lt.s32.totalorder %s22, 1
        %s300 = scalar_select %p299, %s22, 1
        %s301 = smul.addr %s300, 2
        %s302 = smul.addr %s301, 4
        %s303 = scalar_lea.vmem %s0, %s302
        %v304 = vld [vmem:[%s303] sm:$0xff]
        %v305 = vld [vmem:[%s1] sm:$0xff]
        %v306 = vld [vmem:[%s1 + $0x8] sm:$0xff]
        %v307 = vld [vmem:[%s1 + $0x10] sm:$0xff]
        %v308 = vld [vmem:[%s1 + $0x18] sm:$0xff]
        %v309 = vld [vmem:[%s1 + $0x20] sm:$0xff]
        %v310 = vld [vmem:[%s1 + $0x28] sm:$0xff]
        %v311 = vld [vmem:[%s1 + $0x30] sm:$0xff]
        %v312 = vld [vmem:[%s1 + $0x38] sm:$0xff]
        %v313 = vld [vmem:[%s1 + $0x40] sm:$0xff]
        %v314 = vld [vmem:[%s1 + $0x48] sm:$0xff]
        %v315 = vld [vmem:[%s1 + $0x50] sm:$0xff]
        %v316 = vld [vmem:[%s1 + $0x58] sm:$0xff]
        %v317 = vld [vmem:[%s1 + $0x60] sm:$0xff]
        %v318 = vld [vmem:[%s1 + $0x68] sm:$0xff]
        %v319 = vld [vmem:[%s1 + $0x70] sm:$0xff]
        %v320 = vld [vmem:[%s1 + $0x78] sm:$0xff]
        %v321 = vld [vmem:[%s1 + $0x80] sm:$0xff]
        %v322 = vld [vmem:[%s1 + $0x88] sm:$0xff]
        %v323 = vld [vmem:[%s1 + $0x90] sm:$0xff]
        %v324 = vld [vmem:[%s1 + $0x98] sm:$0xff]
        %v325 = vld [vmem:[%s1 + $0xa0] sm:$0xff]
        %v326 = vld [vmem:[%s1 + $0xa8] sm:$0xff]
        %v327 = vld [vmem:[%s1 + $0xb0] sm:$0xff]
        %v328 = vld [vmem:[%s1 + $0xb8] sm:$0xff]
        %v329 = vld [vmem:[%s1 + $0xc0] sm:$0xff]
        %v330 = vld [vmem:[%s1 + $0xc8] sm:$0xff]
        %v331 = vld [vmem:[%s1 + $0xd0] sm:$0xff]
        %v332 = vld [vmem:[%s1 + $0xd8] sm:$0xff]
        %v333 = vld [vmem:[%s1 + $0xe0] sm:$0xff]
        %v334 = vld [vmem:[%s1 + $0xe8] sm:$0xff]
        %v335 = vld [vmem:[%s1 + $0xf0] sm:$0xff]
        %v336 = vld [vmem:[%s1 + $0xf8] sm:$0xff]
        %v337 = vld [vmem:[%s2] sm:$0x1]
        %v339 = vlaneseq
        %v340 = vshrl.u32 %v339, 7
        %v341 = vsub.s32 0, %v340
        %v342 = vrot.slane %v337, %v341
        %v345 = vcombine.high %v304, %v304
        %347 = vmatprep.subr.mxu0 0.0
        %348 = vmatpush1.msra.mxu0 %v320
        %349 = vmatprep.subr.mxu0 0.0
        %350 = vmatpush1.msra.mxu0 %v319
        %351 = vmatprep.subr.mxu0 0.0
        %352 = vmatpush1.msra.mxu0 %v318
        %353 = vmatprep.subr.mxu0 0.0
        %354 = vmatpush1.msra.mxu0 %v317
        %355 = vmatprep.subr.mxu0 0.0
        %356 = vmatpush1.msra.mxu0 %v316
        %357 = vmatprep.subr.mxu0 0.0
        %358 = vmatpush1.msra.mxu0 %v315
        %359 = vmatprep.subr.mxu0 0.0
        %360 = vmatpush1.msra.mxu0 %v314
        %361 = vmatprep.subr.mxu0 0.0
        %362 = vmatpush1.msra.mxu0 %v313
        %363 = vmatprep.subr.mxu0 0.0
        %364 = vmatpush1.msra.mxu0 %v312
        %365 = vmatprep.subr.mxu0 0.0
        %366 = vmatpush1.msra.mxu0 %v311
        %367 = vmatprep.subr.mxu0 0.0
        %368 = vmatpush1.msra.mxu0 %v310
        %369 = vmatprep.subr.mxu0 0.0
        %370 = vmatpush1.msra.mxu0 %v309
        %371 = vmatprep.subr.mxu0 0.0
        %372 = vmatpush1.msra.mxu0 %v308
        %373 = vmatprep.subr.mxu0 0.0
        %374 = vmatpush1.msra.mxu0 %v307
        %375 = vmatprep.subr.mxu0 0.0
        %376 = vmatpush1.msra.mxu0 %v306
        %377 = vmatprep.subr.mxu0 0.0
        %378 = vmatpush1.msra.mxu0 %v305
        %379 = vmatprep.subr.mxu0 0.0
        %380 = vmatpush2.msra.mxu0 %v336
        %381 = vmatprep.subr.mxu0 0.0
        %382 = vmatpush2.msra.mxu0 %v335
        %383 = vmatprep.subr.mxu0 0.0
        %384 = vmatpush2.msra.mxu0 %v334
        %385 = vmatprep.subr.mxu0 0.0
        %386 = vmatpush2.msra.mxu0 %v333
        %387 = vmatprep.subr.mxu0 0.0
        %388 = vmatpush2.msra.mxu0 %v332
        %389 = vmatprep.subr.mxu0 0.0
        %390 = vmatpush2.msra.mxu0 %v331
        %391 = vmatprep.subr.mxu0 0.0
        %392 = vmatpush2.msra.mxu0 %v330
        %393 = vmatprep.subr.mxu0 0.0
        %394 = vmatpush2.msra.mxu0 %v329
        %395 = vmatprep.subr.mxu0 0.0
        %396 = vmatpush2.msra.mxu0 %v328
        %397 = vmatprep.subr.mxu0 0.0
        %398 = vmatpush2.msra.mxu0 %v327
        %399 = vmatprep.subr.mxu0 0.0
        %400 = vmatpush2.msra.mxu0 %v326
        %401 = vmatprep.subr.mxu0 0.0
        %402 = vmatpush2.msra.mxu0 %v325
        %403 = vmatprep.subr.mxu0 0.0
        %404 = vmatpush2.msra.mxu0 %v324
        %405 = vmatprep.subr.mxu0 0.0
        %406 = vmatpush2.msra.mxu0 %v323
        %407 = vmatprep.subr.mxu0 0.0
        %408 = vmatpush2.msra.mxu0 %v322
        %409 = vmatprep.subr.mxu0 0.0
        %410 = vmatpush2.msra.mxu0 %v321
        %411 = vmatprep.mubr.f32.mxu0 %v345
        %412 = vmatmul.mubr.f32.gmra.mxu0 %v304
        %v413 = vpop.f32.mrf.mxu0
        %v414 = vadd.f32 %v342, %v413
        %v415 = vpop.f32.mrf.mxu0
        %416 = vdwg.mxu0
        %v417 = vld [vmem:[%s3] sm:$0xf]
        %v418 = vld [vmem:[%s3 + $0x4] sm:$0xf]
        %v419 = vld [vmem:[%s3 + $0x8] sm:$0xf]
        %v420 = vld [vmem:[%s4] sm:$0x1]
        %v421 = vld [vmem:[%s4 + $0x1] sm:$0x1]
        %v422 = vld [vmem:[%s4 + $0x2] sm:$0x1]
        %v423 = vld [vmem:[%s5] sm:$0x1]
        %v424 = vld [vmem:[%s5 + $0x1] sm:$0x1]
        %v425 = vld [vmem:[%s5 + $0x2] sm:$0x1]
        %vm426 = vcmask 31744
        %v428 = vsel %vm426, %v417, 0
        %vm430 = vcmask 1043456
        %v432 = vsel %vm430, %v414, 0
        %434 = vmatprep.subr.mxu0 0.0
        %435 = vmatpush1.msra.mxu0 0.0
        %436 = vmatprep.subr.mxu0 0.0
        %437 = vmatpush1.msra.mxu0 0.0
        %438 = vmatprep.subr.mxu0 0.0
        %439 = vmatpush1.msra.mxu0 0.0
        %440 = vmatprep.subr.mxu0 0.0
        %441 = vmatpush1.msra.mxu0 0.0
        %442 = vmatprep.subr.mxu0 0.0
        %443 = vmatpush1.msra.mxu0 0.0
        %444 = vmatprep.subr.mxu0 0.0
        %445 = vmatpush1.msra.mxu0 0.0
        %446 = vmatprep.subr.mxu0 0.0
        %447 = vmatpush1.msra.mxu0 0.0
        %448 = vmatprep.subr.mxu0 0.0
        %449 = vmatpush1.msra.mxu0 0.0
        %450 = vmatprep.subr.mxu0 0.0
        %451 = vmatpush1.msra.mxu0 0.0
        %452 = vmatprep.subr.mxu0 0.0
        %453 = vmatpush1.msra.mxu0 0.0
        %454 = vmatprep.subr.mxu0 0.0
        %455 = vmatpush1.msra.mxu0 0.0
        %456 = vmatprep.subr.mxu0 0.0
        %457 = vmatpush1.msra.mxu0 0.0
        %458 = vmatprep.subr.mxu0 0.0
        %459 = vmatpush1.msra.mxu0 0.0
        %460 = vmatprep.subr.mxu0 0.0
        %461 = vmatpush1.msra.mxu0 0.0
        %462 = vmatprep.subr.mxu0 0.0
        %463 = vmatpush1.msra.mxu0 0.0
        %464 = vmatprep.subr.mxu0 0.0
        %465 = vmatpush1.msra.mxu0 %v432
        %466 = vmatprep.subr.mxu0 0.0
        %467 = vmatpush2.msra.mxu0 0.0
        %468 = vmatprep.subr.mxu0 0.0
        %469 = vmatpush2.msra.mxu0 0.0
        %470 = vmatprep.subr.mxu0 0.0
        %471 = vmatpush2.msra.mxu0 0.0
        %472 = vmatprep.subr.mxu0 0.0
        %473 = vmatpush2.msra.mxu0 0.0
        %474 = vmatprep.subr.mxu0 0.0
        %475 = vmatpush2.msra.mxu0 0.0
        %476 = vmatprep.subr.mxu0 0.0
        %477 = vmatpush2.msra.mxu0 0.0
        %478 = vmatprep.subr.mxu0 0.0
        %479 = vmatpush2.msra.mxu0 0.0
        %480 = vmatprep.subr.mxu0 0.0
        %481 = vmatpush2.msra.mxu0 0.0
        %482 = vmatprep.subr.mxu0 0.0
        %483 = vmatpush2.msra.mxu0 0.0
        %484 = vmatprep.subr.mxu0 0.0
        %485 = vmatpush2.msra.mxu0 0.0
        %486 = vmatprep.subr.mxu0 0.0
        %487 = vmatpush2.msra.mxu0 0.0
        %488 = vmatprep.subr.mxu0 0.0
        %489 = vmatpush2.msra.mxu0 0.0
        %490 = vmatprep.subr.mxu0 0.0
        %491 = vmatpush2.msra.mxu0 0.0
        %492 = vmatprep.subr.mxu0 0.0
        %493 = vmatpush2.msra.mxu0 0.0
        %494 = vmatprep.subr.mxu0 0.0
        %495 = vmatpush2.msra.mxu0 0.0
        %496 = vmatprep.subr.mxu0 0.0
        %497 = vmatpush2.msra.mxu0 0.0
        %498 = vmatprep.mubr.f32.mxu0 0.0
        %499 = vmatmul.mubr.f32.gmra.mxu0 %v428
        %v500 = vpop.f32.mrf.mxu0
        %v501 = vadd.f32 0.0, %v500
        %v502 = vpop.f32.mrf.mxu0
        %503 = vdwg.mxu0
        %v505 = vsel %vm426, %v420, 0
        %v508 = vsel %vm430, %v501, 0
        %510 = vmatprep.subr.mxu0 0.0
        %511 = vmatpush1.msra.mxu0 0.0
        %512 = vmatprep.subr.mxu0 0.0
        %513 = vmatpush1.msra.mxu0 0.0
        %514 = vmatprep.subr.mxu0 0.0
        %515 = vmatpush1.msra.mxu0 0.0
        %516 = vmatprep.subr.mxu0 0.0
        %517 = vmatpush1.msra.mxu0 0.0
        %518 = vmatprep.subr.mxu0 0.0
        %519 = vmatpush1.msra.mxu0 0.0
        %520 = vmatprep.subr.mxu0 0.0
        %521 = vmatpush1.msra.mxu0 0.0
        %522 = vmatprep.subr.mxu0 0.0
        %523 = vmatpush1.msra.mxu0 0.0
        %524 = vmatprep.subr.mxu0 0.0
        %525 = vmatpush1.msra.mxu0 0.0
        %526 = vmatprep.subr.mxu0 0.0
        %527 = vmatpush1.msra.mxu0 0.0
        %528 = vmatprep.subr.mxu0 0.0
        %529 = vmatpush1.msra.mxu0 0.0
        %530 = vmatprep.subr.mxu0 0.0
        %531 = vmatpush1.msra.mxu0 0.0
        %532 = vmatprep.subr.mxu0 0.0
        %533 = vmatpush1.msra.mxu0 0.0
        %534 = vmatprep.subr.mxu0 0.0
        %535 = vmatpush1.msra.mxu0 0.0
        %536 = vmatprep.subr.mxu0 0.0
        %537 = vmatpush1.msra.mxu0 0.0
        %538 = vmatprep.subr.mxu0 0.0
        %539 = vmatpush1.msra.mxu0 0.0
        %540 = vmatprep.subr.mxu0 0.0
        %541 = vmatpush1.msra.mxu0 %v508
        %542 = vmatprep.subr.mxu0 0.0
        %543 = vmatpush2.msra.mxu0 0.0
        %544 = vmatprep.subr.mxu0 0.0
        %545 = vmatpush2.msra.mxu0 0.0
        %546 = vmatprep.subr.mxu0 0.0
        %547 = vmatpush2.msra.mxu0 0.0
        %548 = vmatprep.subr.mxu0 0.0
        %549 = vmatpush2.msra.mxu0 0.0
        %550 = vmatprep.subr.mxu0 0.0
        %551 = vmatpush2.msra.mxu0 0.0
        %552 = vmatprep.subr.mxu0 0.0
        %553 = vmatpush2.msra.mxu0 0.0
        %554 = vmatprep.subr.mxu0 0.0
        %555 = vmatpush2.msra.mxu0 0.0
        %556 = vmatprep.subr.mxu0 0.0
        %557 = vmatpush2.msra.mxu0 0.0
        %558 = vmatprep.subr.mxu0 0.0
        %559 = vmatpush2.msra.mxu0 0.0
        %560 = vmatprep.subr.mxu0 0.0
        %561 = vmatpush2.msra.mxu0 0.0
        %562 = vmatprep.subr.mxu0 0.0
        %563 = vmatpush2.msra.mxu0 0.0
        %564 = vmatprep.subr.mxu0 0.0
        %565 = vmatpush2.msra.mxu0 0.0
        %566 = vmatprep.subr.mxu0 0.0
        %567 = vmatpush2.msra.mxu0 0.0
        %568 = vmatprep.subr.mxu0 0.0
        %569 = vmatpush2.msra.mxu0 0.0
        %570 = vmatprep.subr.mxu0 0.0
        %571 = vmatpush2.msra.mxu0 0.0
        %572 = vmatprep.subr.mxu0 0.0
        %573 = vmatpush2.msra.mxu0 0.0
        %574 = vmatprep.mubr.f32.mxu0 0.0
        %575 = vmatmul.mubr.f32.gmra.mxu0 %v505
        %v576 = vpop.f32.mrf.mxu0
        %v577 = vadd.f32 0.0, %v576
        %v578 = vpop.f32.mrf.mxu0
        %579 = vdwg.mxu0
        %v581 = vsel %vm426, %v423, 0
        %583 = vmatprep.subr.mxu0 0.0
        %584 = vmatpush1.msra.mxu0 0.0
        %585 = vmatprep.subr.mxu0 0.0
        %586 = vmatpush1.msra.mxu0 0.0
        %587 = vmatprep.subr.mxu0 0.0
        %588 = vmatpush1.msra.mxu0 0.0
        %589 = vmatprep.subr.mxu0 0.0
        %590 = vmatpush1.msra.mxu0 0.0
        %591 = vmatprep.subr.mxu0 0.0
        %592 = vmatpush1.msra.mxu0 0.0
        %593 = vmatprep.subr.mxu0 0.0
        %594 = vmatpush1.msra.mxu0 0.0
        %595 = vmatprep.subr.mxu0 0.0
        %596 = vmatpush1.msra.mxu0 0.0
        %597 = vmatprep.subr.mxu0 0.0
        %598 = vmatpush1.msra.mxu0 0.0
        %599 = vmatprep.subr.mxu0 0.0
        %600 = vmatpush1.msra.mxu0 0.0
        %601 = vmatprep.subr.mxu0 0.0
        %602 = vmatpush1.msra.mxu0 0.0
        %603 = vmatprep.subr.mxu0 0.0
        %604 = vmatpush1.msra.mxu0 0.0
        %605 = vmatprep.subr.mxu0 0.0
        %606 = vmatpush1.msra.mxu0 0.0
        %607 = vmatprep.subr.mxu0 0.0
        %608 = vmatpush1.msra.mxu0 0.0
        %609 = vmatprep.subr.mxu0 0.0
        %610 = vmatpush1.msra.mxu0 0.0
        %611 = vmatprep.subr.mxu0 0.0
        %612 = vmatpush1.msra.mxu0 0.0
        %613 = vmatprep.subr.mxu0 0.0
        %614 = vmatpush1.msra.mxu0 %v508
        %615 = vmatprep.subr.mxu0 0.0
        %616 = vmatpush2.msra.mxu0 0.0
        %617 = vmatprep.subr.mxu0 0.0
        %618 = vmatpush2.msra.mxu0 0.0
        %619 = vmatprep.subr.mxu0 0.0
        %620 = vmatpush2.msra.mxu0 0.0
        %621 = vmatprep.subr.mxu0 0.0
        %622 = vmatpush2.msra.mxu0 0.0
        %623 = vmatprep.subr.mxu0 0.0
        %624 = vmatpush2.msra.mxu0 0.0
        %625 = vmatprep.subr.mxu0 0.0
        %626 = vmatpush2.msra.mxu0 0.0
        %627 = vmatprep.subr.mxu0 0.0
        %628 = vmatpush2.msra.mxu0 0.0
        %629 = vmatprep.subr.mxu0 0.0
        %630 = vmatpush2.msra.mxu0 0.0
        %631 = vmatprep.subr.mxu0 0.0
        %632 = vmatpush2.msra.mxu0 0.0
        %633 = vmatprep.subr.mxu0 0.0
        %634 = vmatpush2.msra.mxu0 0.0
        %635 = vmatprep.subr.mxu0 0.0
        %636 = vmatpush2.msra.mxu0 0.0
        %637 = vmatprep.subr.mxu0 0.0
        %638 = vmatpush2.msra.mxu0 0.0
        %639 = vmatprep.subr.mxu0 0.0
        %640 = vmatpush2.msra.mxu0 0.0
        %641 = vmatprep.subr.mxu0 0.0
        %642 = vmatpush2.msra.mxu0 0.0
        %643 = vmatprep.subr.mxu0 0.0
        %644 = vmatpush2.msra.mxu0 0.0
        %645 = vmatprep.subr.mxu0 0.0
        %646 = vmatpush2.msra.mxu0 0.0
        %647 = vmatprep.mubr.f32.mxu0 0.0
        %648 = vmatmul.mubr.f32.gmra.mxu0 %v581
        %v649 = vpop.f32.mrf.mxu0
        %v650 = vadd.f32 0.0, %v649
        %v651 = vpop.f32.mrf.mxu0
        %652 = vdwg.mxu0
        %653 = vxpose.xlu0.b32.start [1/16] %v577, 128
        %654 = vxpose.xlu0.b32.cont [2/16] 0.0, 128
        %655 = vxpose.xlu0.b32.cont [3/16] 0.0, 128
        %656 = vxpose.xlu0.b32.cont [4/16] 0.0, 128
        %657 = vxpose.xlu0.b32.cont [5/16] 0.0, 128
        %658 = vxpose.xlu0.b32.cont [6/16] 0.0, 128
        %659 = vxpose.xlu0.b32.cont [7/16] 0.0, 128
        %660 = vxpose.xlu0.b32.cont [8/16] 0.0, 128
        %661 = vxpose.xlu0.b32.cont [9/16] 0.0, 128
        %662 = vxpose.xlu0.b32.cont [10/16] 0.0, 128
        %663 = vxpose.xlu0.b32.cont [11/16] 0.0, 128
        %664 = vxpose.xlu0.b32.cont [12/16] 0.0, 128
        %665 = vxpose.xlu0.b32.cont [13/16] 0.0, 128
        %666 = vxpose.xlu0.b32.cont [14/16] 0.0, 128
        %667 = vxpose.xlu0.b32.cont [15/16] 0.0, 128
        %668 = vxpose.xlu0.b32.end [16/16] 0.0, 128
        %v669 = vpop.trf.xlu0
        %v670 = vpop.trf.xlu0
        %v671 = vpop.trf.xlu0
        %v672 = vpop.trf.xlu0
        %v673 = vpop.trf.xlu0
        %v674 = vpop.trf.xlu0
        %v675 = vpop.trf.xlu0
        %v676 = vpop.trf.xlu0
        %v677 = vpop.trf.xlu0
        %v678 = vpop.trf.xlu0
        %v679 = vpop.trf.xlu0
        %v680 = vpop.trf.xlu0
        %v681 = vpop.trf.xlu0
        %v682 = vpop.trf.xlu0
        %v683 = vpop.trf.xlu0
        %v684 = vpop.trf.xlu0
        %686 = vset.pattern.permute.xlu0 0
        %687 = vperm.xlu0 %686, %v669
        %v688 = vpop.permute.xlu0 %687
        %691 = vset.pattern.permute.xlu0 0
        %692 = vperm.xlu0 %691, %v670
        %v693 = vpop.permute.xlu0 %692
        %696 = vset.pattern.permute.xlu0 0
        %697 = vperm.xlu0 %696, %v671
        %v698 = vpop.permute.xlu0 %697
        %701 = vset.pattern.permute.xlu0 0
        %702 = vperm.xlu0 %701, %v672
        %v703 = vpop.permute.xlu0 %702
        %v705 = vlaneseq
        %v706 = vshrl.u32 %v705, 7
        %v707 = vsub.s32 0, %v706
        %v708 = vrot.slane %v650, %v707
        %v709 = vadd.f32 %v688, %v708
        %v710 = vadd.f32 %v693, %v708
        %v711 = vadd.f32 %v698, %v708
        %v712 = vadd.f32 %v703, %v708
        %vm713 = vcmp.gt.f32.partialorder %v709, 0.0
        %vm714 = vcmp.gt.f32.partialorder %v710, 0.0
        %vm715 = vcmp.gt.f32.partialorder %v711, 0.0
        %vm716 = vcmp.gt.f32.partialorder %v712, 0.0
        %v717 = vmul.f32 %v709, 0.2
        %v718 = vmul.f32 %v710, 0.2
        %v719 = vmul.f32 %v711, 0.2
        %v720 = vmul.f32 %v712, 0.2
        %v721 = vsel %vm713, %v709, %v717
        %v722 = vsel %vm714, %v710, %v718
        %v723 = vsel %vm715, %v711, %v719
        %v724 = vsel %vm716, %v712, %v720
        %vm725 = vcmask 261120
        %v726 = vsel %vm725, %v721, -inf
        %727 = vmax.xlane.f32.xlu0 %v726
        %v728 = vpop.xlane.xlu0 %727
        %v729 = vsel %vm725, %v722, -inf
        %730 = vmax.xlane.f32.xlu0 %v729
        %v731 = vpop.xlane.xlu0 %730
        %v732 = vsel %vm725, %v723, -inf
        %733 = vmax.xlane.f32.xlu0 %v732
        %v734 = vpop.xlane.xlu0 %733
        %v735 = vsel %vm725, %v724, -inf
        %736 = vmax.xlane.f32.xlu0 %v735
        %v737 = vpop.xlane.xlu0 %736
        %v738 = vsub.f32 %v721, %v728
        %v739 = vsub.f32 %v722, %v731
        %v740 = vsub.f32 %v723, %v734
        %v741 = vsub.f32 %v724, %v737
        %v742 = vmul.f32 %v738, 1.442695
        %v743 = vpow.pop %v742
        %v744 = vmul.f32 %v739, 1.442695
        %v745 = vpow.pop %v744
        %v746 = vmul.f32 %v740, 1.442695
        %v747 = vpow.pop %v746
        %v748 = vmul.f32 %v741, 1.442695
        %v749 = vpow.pop %v748
        %v750 = vsel %vm725, %v743, 0.0
        %751 = vadd.xlane.f32.xlu0 %v750
        %v752 = vpop.xlane.xlu0 %751
        %v753 = vsel %vm725, %v745, 0.0
        %754 = vadd.xlane.f32.xlu0 %v753
        %v755 = vpop.xlane.xlu0 %754
        %v756 = vsel %vm725, %v747, 0.0
        %757 = vadd.xlane.f32.xlu0 %v756
        %v758 = vpop.xlane.xlu0 %757
        %v759 = vsel %vm725, %v749, 0.0
        %760 = vadd.xlane.f32.xlu0 %v759
        %v761 = vpop.xlane.xlu0 %760
        %v762 = vrcp.pop %v752
        %v763 = vrcp.pop %v755
        %v764 = vrcp.pop %v758
        %v765 = vrcp.pop %v761
        %v766 = vmul.f32 %v743, %v762
        %v767 = vmul.f32 %v745, %v763
        %v768 = vmul.f32 %v747, %v764
        %v769 = vmul.f32 %v749, %v765
        %v770 = vsel %vm725, %v501, 0
        %v773 = vsel %vm725, %v766, 0
        %v776 = vsel %vm725, %v767, 0
        %v779 = vsel %vm725, %v768, 0
        %v782 = vsel %vm725, %v769, 0
        %784 = vmatprep.subr.mxu0 0.0
        %785 = vmatpush1.xpose.msra.mxu0 0.0
        %786 = vmatprep.subr.mxu0 0.0
        %787 = vmatpush1.xpose.msra.mxu0 0.0
        %788 = vmatprep.subr.mxu0 0.0
        %789 = vmatpush1.xpose.msra.mxu0 0.0
        %790 = vmatprep.subr.mxu0 0.0
        %791 = vmatpush1.xpose.msra.mxu0 0.0
        %792 = vmatprep.subr.mxu0 0.0
        %793 = vmatpush1.xpose.msra.mxu0 0.0
        %794 = vmatprep.subr.mxu0 0.0
        %795 = vmatpush1.xpose.msra.mxu0 0.0
        %796 = vmatprep.subr.mxu0 0.0
        %797 = vmatpush1.xpose.msra.mxu0 0.0
        %798 = vmatprep.subr.mxu0 0.0
        %799 = vmatpush1.xpose.msra.mxu0 0.0
        %800 = vmatprep.subr.mxu0 0.0
        %801 = vmatpush1.xpose.msra.mxu0 0.0
        %802 = vmatprep.subr.mxu0 0.0
        %803 = vmatpush1.xpose.msra.mxu0 0.0
        %804 = vmatprep.subr.mxu0 0.0
        %805 = vmatpush1.xpose.msra.mxu0 0.0
        %806 = vmatprep.subr.mxu0 0.0
        %807 = vmatpush1.xpose.msra.mxu0 0.0
        %808 = vmatprep.subr.mxu0 0.0
        %809 = vmatpush1.xpose.msra.mxu0 %v782
        %810 = vmatprep.subr.mxu0 0.0
        %811 = vmatpush1.xpose.msra.mxu0 %v779
        %812 = vmatprep.subr.mxu0 0.0
        %813 = vmatpush1.xpose.msra.mxu0 %v776
        %814 = vmatprep.subr.mxu0 0.0
        %815 = vmatpush1.xpose.msra.mxu0 %v773
        %816 = vmatprep.subr.mxu0 0.0
        %817 = vmatpush2.xpose.msra.mxu0 0.0
        %818 = vmatprep.subr.mxu0 0.0
        %819 = vmatpush2.xpose.msra.mxu0 0.0
        %820 = vmatprep.subr.mxu0 0.0
        %821 = vmatpush2.xpose.msra.mxu0 0.0
        %822 = vmatprep.subr.mxu0 0.0
        %823 = vmatpush2.xpose.msra.mxu0 0.0
        %824 = vmatprep.subr.mxu0 0.0
        %825 = vmatpush2.xpose.msra.mxu0 0.0
        %826 = vmatprep.subr.mxu0 0.0
        %827 = vmatpush2.xpose.msra.mxu0 0.0
        %828 = vmatprep.subr.mxu0 0.0
        %829 = vmatpush2.xpose.msra.mxu0 0.0
        %830 = vmatprep.subr.mxu0 0.0
        %831 = vmatpush2.xpose.msra.mxu0 0.0
        %832 = vmatprep.subr.mxu0 0.0
        %833 = vmatpush2.xpose.msra.mxu0 0.0
        %834 = vmatprep.subr.mxu0 0.0
        %835 = vmatpush2.xpose.msra.mxu0 0.0
        %836 = vmatprep.subr.mxu0 0.0
        %837 = vmatpush2.xpose.msra.mxu0 0.0
        %838 = vmatprep.subr.mxu0 0.0
        %839 = vmatpush2.xpose.msra.mxu0 0.0
        %840 = vmatprep.subr.mxu0 0.0
        %841 = vmatpush2.xpose.msra.mxu0 0.0
        %842 = vmatprep.subr.mxu0 0.0
        %843 = vmatpush2.xpose.msra.mxu0 0.0
        %844 = vmatprep.subr.mxu0 0.0
        %845 = vmatpush2.xpose.msra.mxu0 0.0
        %846 = vmatprep.subr.mxu0 0.0
        %847 = vmatpush2.xpose.msra.mxu0 0.0
        %848 = vmatprep.mubr.f32.mxu0 0.0
        %849 = vmatmul.mubr.f32.gmra.mxu0 %v770
        %v850 = vpop.f32.mrf.mxu0
        %v851 = vadd.f32 0.0, %v850
        %v852 = vpop.f32.mrf.mxu0
        %853 = vdwg.mxu0
        %vm854 = vcmp.gt.f32.partialorder %v851, 0.0
        %v855 = vmul.f32 %v851, 1.442695
        %v856 = vpow.pop %v855
        %v857 = vsub.f32 %v856, 1.0
        %v858 = vsel %vm854, %v851, %v857
        %859 = vrot.lane.b32.xlu0 %v414, 96
        %v860 = vpop.permute.xlu0 %859
        %v862 = vsel %vm426, %v418, 0
        %v864 = vsel %vm430, %v860, 0
        %866 = vmatprep.subr.mxu0 0.0
        %867 = vmatpush1.msra.mxu0 0.0
        %868 = vmatprep.subr.mxu0 0.0
        %869 = vmatpush1.msra.mxu0 0.0
        %870 = vmatprep.subr.mxu0 0.0
        %871 = vmatpush1.msra.mxu0 0.0
        %872 = vmatprep.subr.mxu0 0.0
        %873 = vmatpush1.msra.mxu0 0.0
        %874 = vmatprep.subr.mxu0 0.0
        %875 = vmatpush1.msra.mxu0 0.0
        %876 = vmatprep.subr.mxu0 0.0
        %877 = vmatpush1.msra.mxu0 0.0
        %878 = vmatprep.subr.mxu0 0.0
        %879 = vmatpush1.msra.mxu0 0.0
        %880 = vmatprep.subr.mxu0 0.0
        %881 = vmatpush1.msra.mxu0 0.0
        %882 = vmatprep.subr.mxu0 0.0
        %883 = vmatpush1.msra.mxu0 0.0
        %884 = vmatprep.subr.mxu0 0.0
        %885 = vmatpush1.msra.mxu0 0.0
        %886 = vmatprep.subr.mxu0 0.0
        %887 = vmatpush1.msra.mxu0 0.0
        %888 = vmatprep.subr.mxu0 0.0
        %889 = vmatpush1.msra.mxu0 0.0
        %890 = vmatprep.subr.mxu0 0.0
        %891 = vmatpush1.msra.mxu0 0.0
        %892 = vmatprep.subr.mxu0 0.0
        %893 = vmatpush1.msra.mxu0 0.0
        %894 = vmatprep.subr.mxu0 0.0
        %895 = vmatpush1.msra.mxu0 0.0
        %896 = vmatprep.subr.mxu0 0.0
        %897 = vmatpush1.msra.mxu0 %v864
        %898 = vmatprep.subr.mxu0 0.0
        %899 = vmatpush2.msra.mxu0 0.0
        %900 = vmatprep.subr.mxu0 0.0
        %901 = vmatpush2.msra.mxu0 0.0
        %902 = vmatprep.subr.mxu0 0.0
        %903 = vmatpush2.msra.mxu0 0.0
        %904 = vmatprep.subr.mxu0 0.0
        %905 = vmatpush2.msra.mxu0 0.0
        %906 = vmatprep.subr.mxu0 0.0
        %907 = vmatpush2.msra.mxu0 0.0
        %908 = vmatprep.subr.mxu0 0.0
        %909 = vmatpush2.msra.mxu0 0.0
        %910 = vmatprep.subr.mxu0 0.0
        %911 = vmatpush2.msra.mxu0 0.0
        %912 = vmatprep.subr.mxu0 0.0
        %913 = vmatpush2.msra.mxu0 0.0
        %914 = vmatprep.subr.mxu0 0.0
        %915 = vmatpush2.msra.mxu0 0.0
        %916 = vmatprep.subr.mxu0 0.0
        %917 = vmatpush2.msra.mxu0 0.0
        %918 = vmatprep.subr.mxu0 0.0
        %919 = vmatpush2.msra.mxu0 0.0
        %920 = vmatprep.subr.mxu0 0.0
        %921 = vmatpush2.msra.mxu0 0.0
        %922 = vmatprep.subr.mxu0 0.0
        %923 = vmatpush2.msra.mxu0 0.0
        %924 = vmatprep.subr.mxu0 0.0
        %925 = vmatpush2.msra.mxu0 0.0
        %926 = vmatprep.subr.mxu0 0.0
        %927 = vmatpush2.msra.mxu0 0.0
        %928 = vmatprep.subr.mxu0 0.0
        %929 = vmatpush2.msra.mxu0 0.0
        %930 = vmatprep.mubr.f32.mxu0 0.0
        %931 = vmatmul.mubr.f32.gmra.mxu0 %v862
        %v932 = vpop.f32.mrf.mxu0
        %v933 = vadd.f32 0.0, %v932
        %v934 = vpop.f32.mrf.mxu0
        %935 = vdwg.mxu0
        %v937 = vsel %vm426, %v421, 0
        %v940 = vsel %vm430, %v933, 0
        %942 = vmatprep.subr.mxu0 0.0
        %943 = vmatpush1.msra.mxu0 0.0
        %944 = vmatprep.subr.mxu0 0.0
        %945 = vmatpush1.msra.mxu0 0.0
        %946 = vmatprep.subr.mxu0 0.0
        %947 = vmatpush1.msra.mxu0 0.0
        %948 = vmatprep.subr.mxu0 0.0
        %949 = vmatpush1.msra.mxu0 0.0
        %950 = vmatprep.subr.mxu0 0.0
        %951 = vmatpush1.msra.mxu0 0.0
        %952 = vmatprep.subr.mxu0 0.0
        %953 = vmatpush1.msra.mxu0 0.0
        %954 = vmatprep.subr.mxu0 0.0
        %955 = vmatpush1.msra.mxu0 0.0
        %956 = vmatprep.subr.mxu0 0.0
        %957 = vmatpush1.msra.mxu0 0.0
        %958 = vmatprep.subr.mxu0 0.0
        %959 = vmatpush1.msra.mxu0 0.0
        %960 = vmatprep.subr.mxu0 0.0
        %961 = vmatpush1.msra.mxu0 0.0
        %962 = vmatprep.subr.mxu0 0.0
        %963 = vmatpush1.msra.mxu0 0.0
        %964 = vmatprep.subr.mxu0 0.0
        %965 = vmatpush1.msra.mxu0 0.0
        %966 = vmatprep.subr.mxu0 0.0
        %967 = vmatpush1.msra.mxu0 0.0
        %968 = vmatprep.subr.mxu0 0.0
        %969 = vmatpush1.msra.mxu0 0.0
        %970 = vmatprep.subr.mxu0 0.0
        %971 = vmatpush1.msra.mxu0 0.0
        %972 = vmatprep.subr.mxu0 0.0
        %973 = vmatpush1.msra.mxu0 %v940
        %974 = vmatprep.subr.mxu0 0.0
        %975 = vmatpush2.msra.mxu0 0.0
        %976 = vmatprep.subr.mxu0 0.0
        %977 = vmatpush2.msra.mxu0 0.0
        %978 = vmatprep.subr.mxu0 0.0
        %979 = vmatpush2.msra.mxu0 0.0
        %980 = vmatprep.subr.mxu0 0.0
        %981 = vmatpush2.msra.mxu0 0.0
        %982 = vmatprep.subr.mxu0 0.0
        %983 = vmatpush2.msra.mxu0 0.0
        %984 = vmatprep.subr.mxu0 0.0
        %985 = vmatpush2.msra.mxu0 0.0
        %986 = vmatprep.subr.mxu0 0.0
        %987 = vmatpush2.msra.mxu0 0.0
        %988 = vmatprep.subr.mxu0 0.0
        %989 = vmatpush2.msra.mxu0 0.0
        %990 = vmatprep.subr.mxu0 0.0
        %991 = vmatpush2.msra.mxu0 0.0
        %992 = vmatprep.subr.mxu0 0.0
        %993 = vmatpush2.msra.mxu0 0.0
        %994 = vmatprep.subr.mxu0 0.0
        %995 = vmatpush2.msra.mxu0 0.0
        %996 = vmatprep.subr.mxu0 0.0
        %997 = vmatpush2.msra.mxu0 0.0
        %998 = vmatprep.subr.mxu0 0.0
        %999 = vmatpush2.msra.mxu0 0.0
        %1000 = vmatprep.subr.mxu0 0.0
        %1001 = vmatpush2.msra.mxu0 0.0
        %1002 = vmatprep.subr.mxu0 0.0
        %1003 = vmatpush2.msra.mxu0 0.0
        %1004 = vmatprep.subr.mxu0 0.0
        %1005 = vmatpush2.msra.mxu0 0.0
        %1006 = vmatprep.mubr.f32.mxu0 0.0
        %1007 = vmatmul.mubr.f32.gmra.mxu0 %v937
        %v1008 = vpop.f32.mrf.mxu0
        %v1009 = vadd.f32 0.0, %v1008
        %v1010 = vpop.f32.mrf.mxu0
        %1011 = vdwg.mxu0
        %v1013 = vsel %vm426, %v424, 0
        %1015 = vmatprep.subr.mxu0 0.0
        %1016 = vmatpush1.msra.mxu0 0.0
        %1017 = vmatprep.subr.mxu0 0.0
        %1018 = vmatpush1.msra.mxu0 0.0
        %1019 = vmatprep.subr.mxu0 0.0
        %1020 = vmatpush1.msra.mxu0 0.0
        %1021 = vmatprep.subr.mxu0 0.0
        %1022 = vmatpush1.msra.mxu0 0.0
        %1023 = vmatprep.subr.mxu0 0.0
        %1024 = vmatpush1.msra.mxu0 0.0
        %1025 = vmatprep.subr.mxu0 0.0
        %1026 = vmatpush1.msra.mxu0 0.0
        %1027 = vmatprep.subr.mxu0 0.0
        %1028 = vmatpush1.msra.mxu0 0.0
        %1029 = vmatprep.subr.mxu0 0.0
        %1030 = vmatpush1.msra.mxu0 0.0
        %1031 = vmatprep.subr.mxu0 0.0
        %1032 = vmatpush1.msra.mxu0 0.0
        %1033 = vmatprep.subr.mxu0 0.0
        %1034 = vmatpush1.msra.mxu0 0.0
        %1035 = vmatprep.subr.mxu0 0.0
        %1036 = vmatpush1.msra.mxu0 0.0
        %1037 = vmatprep.subr.mxu0 0.0
        %1038 = vmatpush1.msra.mxu0 0.0
        %1039 = vmatprep.subr.mxu0 0.0
        %1040 = vmatpush1.msra.mxu0 0.0
        %1041 = vmatprep.subr.mxu0 0.0
        %1042 = vmatpush1.msra.mxu0 0.0
        %1043 = vmatprep.subr.mxu0 0.0
        %1044 = vmatpush1.msra.mxu0 0.0
        %1045 = vmatprep.subr.mxu0 0.0
        %1046 = vmatpush1.msra.mxu0 %v940
        %1047 = vmatprep.subr.mxu0 0.0
        %1048 = vmatpush2.msra.mxu0 0.0
        %1049 = vmatprep.subr.mxu0 0.0
        %1050 = vmatpush2.msra.mxu0 0.0
        %1051 = vmatprep.subr.mxu0 0.0
        %1052 = vmatpush2.msra.mxu0 0.0
        %1053 = vmatprep.subr.mxu0 0.0
        %1054 = vmatpush2.msra.mxu0 0.0
        %1055 = vmatprep.subr.mxu0 0.0
        %1056 = vmatpush2.msra.mxu0 0.0
        %1057 = vmatprep.subr.mxu0 0.0
        %1058 = vmatpush2.msra.mxu0 0.0
        %1059 = vmatprep.subr.mxu0 0.0
        %1060 = vmatpush2.msra.mxu0 0.0
        %1061 = vmatprep.subr.mxu0 0.0
        %1062 = vmatpush2.msra.mxu0 0.0
        %1063 = vmatprep.subr.mxu0 0.0
        %1064 = vmatpush2.msra.mxu0 0.0
        %1065 = vmatprep.subr.mxu0 0.0
        %1066 = vmatpush2.msra.mxu0 0.0
        %1067 = vmatprep.subr.mxu0 0.0
        %1068 = vmatpush2.msra.mxu0 0.0
        %1069 = vmatprep.subr.mxu0 0.0
        %1070 = vmatpush2.msra.mxu0 0.0
        %1071 = vmatprep.subr.mxu0 0.0
        %1072 = vmatpush2.msra.mxu0 0.0
        %1073 = vmatprep.subr.mxu0 0.0
        %1074 = vmatpush2.msra.mxu0 0.0
        %1075 = vmatprep.subr.mxu0 0.0
        %1076 = vmatpush2.msra.mxu0 0.0
        %1077 = vmatprep.subr.mxu0 0.0
        %1078 = vmatpush2.msra.mxu0 0.0
        %1079 = vmatprep.mubr.f32.mxu0 0.0
        %1080 = vmatmul.mubr.f32.gmra.mxu0 %v1013
        %v1081 = vpop.f32.mrf.mxu0
        %v1082 = vadd.f32 0.0, %v1081
        %v1083 = vpop.f32.mrf.mxu0
        %1084 = vdwg.mxu0
        %1085 = vxpose.xlu0.b32.start [1/16] %v1009, 128
        %1086 = vxpose.xlu0.b32.cont [2/16] 0.0, 128
        %1087 = vxpose.xlu0.b32.cont [3/16] 0.0, 128
        %1088 = vxpose.xlu0.b32.cont [4/16] 0.0, 128
        %1089 = vxpose.xlu0.b32.cont [5/16] 0.0, 128
        %1090 = vxpose.xlu0.b32.cont [6/16] 0.0, 128
        %1091 = vxpose.xlu0.b32.cont [7/16] 0.0, 128
        %1092 = vxpose.xlu0.b32.cont [8/16] 0.0, 128
        %1093 = vxpose.xlu0.b32.cont [9/16] 0.0, 128
        %1094 = vxpose.xlu0.b32.cont [10/16] 0.0, 128
        %1095 = vxpose.xlu0.b32.cont [11/16] 0.0, 128
        %1096 = vxpose.xlu0.b32.cont [12/16] 0.0, 128
        %1097 = vxpose.xlu0.b32.cont [13/16] 0.0, 128
        %1098 = vxpose.xlu0.b32.cont [14/16] 0.0, 128
        %1099 = vxpose.xlu0.b32.cont [15/16] 0.0, 128
        %1100 = vxpose.xlu0.b32.end [16/16] 0.0, 128
        %v1101 = vpop.trf.xlu0
        %v1102 = vpop.trf.xlu0
        %v1103 = vpop.trf.xlu0
        %v1104 = vpop.trf.xlu0
        %v1105 = vpop.trf.xlu0
        %v1106 = vpop.trf.xlu0
        %v1107 = vpop.trf.xlu0
        %v1108 = vpop.trf.xlu0
        %v1109 = vpop.trf.xlu0
        %v1110 = vpop.trf.xlu0
        %v1111 = vpop.trf.xlu0
        %v1112 = vpop.trf.xlu0
        %v1113 = vpop.trf.xlu0
        %v1114 = vpop.trf.xlu0
        %v1115 = vpop.trf.xlu0
        %v1116 = vpop.trf.xlu0
        %1118 = vset.pattern.permute.xlu0 0
        %1119 = vperm.xlu0 %1118, %v1101
        %v1120 = vpop.permute.xlu0 %1119
        %1123 = vset.pattern.permute.xlu0 0
        %1124 = vperm.xlu0 %1123, %v1102
        %v1125 = vpop.permute.xlu0 %1124
        %1128 = vset.pattern.permute.xlu0 0
        %1129 = vperm.xlu0 %1128, %v1103
        %v1130 = vpop.permute.xlu0 %1129
        %1133 = vset.pattern.permute.xlu0 0
        %1134 = vperm.xlu0 %1133, %v1104
        %v1135 = vpop.permute.xlu0 %1134
        %v1137 = vlaneseq
        %v1138 = vshrl.u32 %v1137, 7
        %v1139 = vsub.s32 0, %v1138
        %v1140 = vrot.slane %v1082, %v1139
        %v1141 = vadd.f32 %v1120, %v1140
        %v1142 = vadd.f32 %v1125, %v1140
        %v1143 = vadd.f32 %v1130, %v1140
        %v1144 = vadd.f32 %v1135, %v1140
        %vm1145 = vcmp.gt.f32.partialorder %v1141, 0.0
        %vm1146 = vcmp.gt.f32.partialorder %v1142, 0.0
        %vm1147 = vcmp.gt.f32.partialorder %v1143, 0.0
        %vm1148 = vcmp.gt.f32.partialorder %v1144, 0.0
        %v1149 = vmul.f32 %v1141, 0.2
        %v1150 = vmul.f32 %v1142, 0.2
        %v1151 = vmul.f32 %v1143, 0.2
        %v1152 = vmul.f32 %v1144, 0.2
        %v1153 = vsel %vm1145, %v1141, %v1149
        %v1154 = vsel %vm1146, %v1142, %v1150
        %v1155 = vsel %vm1147, %v1143, %v1151
        %v1156 = vsel %vm1148, %v1144, %v1152
        %v1157 = vsel %vm725, %v1153, -inf
        %1158 = vmax.xlane.f32.xlu0 %v1157
        %v1159 = vpop.xlane.xlu0 %1158
        %v1160 = vsel %vm725, %v1154, -inf
        %1161 = vmax.xlane.f32.xlu0 %v1160
        %v1162 = vpop.xlane.xlu0 %1161
        %v1163 = vsel %vm725, %v1155, -inf
        %1164 = vmax.xlane.f32.xlu0 %v1163
        %v1165 = vpop.xlane.xlu0 %1164
        %v1166 = vsel %vm725, %v1156, -inf
        %1167 = vmax.xlane.f32.xlu0 %v1166
        %v1168 = vpop.xlane.xlu0 %1167
        %v1169 = vsub.f32 %v1153, %v1159
        %v1170 = vsub.f32 %v1154, %v1162
        %v1171 = vsub.f32 %v1155, %v1165
        %v1172 = vsub.f32 %v1156, %v1168
        %v1173 = vmul.f32 %v1169, 1.442695
        %v1174 = vpow.pop %v1173
        %v1175 = vmul.f32 %v1170, 1.442695
        %v1176 = vpow.pop %v1175
        %v1177 = vmul.f32 %v1171, 1.442695
        %v1178 = vpow.pop %v1177
        %v1179 = vmul.f32 %v1172, 1.442695
        %v1180 = vpow.pop %v1179
        %v1181 = vsel %vm725, %v1174, 0.0
        %1182 = vadd.xlane.f32.xlu0 %v1181
        %v1183 = vpop.xlane.xlu0 %1182
        %v1184 = vsel %vm725, %v1176, 0.0
        %1185 = vadd.xlane.f32.xlu0 %v1184
        %v1186 = vpop.xlane.xlu0 %1185
        %v1187 = vsel %vm725, %v1178, 0.0
        %1188 = vadd.xlane.f32.xlu0 %v1187
        %v1189 = vpop.xlane.xlu0 %1188
        %v1190 = vsel %vm725, %v1180, 0.0
        %1191 = vadd.xlane.f32.xlu0 %v1190
        %v1192 = vpop.xlane.xlu0 %1191
        %v1193 = vrcp.pop %v1183
        %v1194 = vrcp.pop %v1186
        %v1195 = vrcp.pop %v1189
        %v1196 = vrcp.pop %v1192
        %v1197 = vmul.f32 %v1174, %v1193
        %v1198 = vmul.f32 %v1176, %v1194
        %v1199 = vmul.f32 %v1178, %v1195
        %v1200 = vmul.f32 %v1180, %v1196
        %v1201 = vsel %vm725, %v933, 0
        %v1204 = vsel %vm725, %v1197, 0
        %v1207 = vsel %vm725, %v1198, 0
        %v1210 = vsel %vm725, %v1199, 0
        %v1213 = vsel %vm725, %v1200, 0
        %1215 = vmatprep.subr.mxu0 0.0
        %1216 = vmatpush1.xpose.msra.mxu0 0.0
        %1217 = vmatprep.subr.mxu0 0.0
        %1218 = vmatpush1.xpose.msra.mxu0 0.0
        %1219 = vmatprep.subr.mxu0 0.0
        %1220 = vmatpush1.xpose.msra.mxu0 0.0
        %1221 = vmatprep.subr.mxu0 0.0
        %1222 = vmatpush1.xpose.msra.mxu0 0.0
        %1223 = vmatprep.subr.mxu0 0.0
        %1224 = vmatpush1.xpose.msra.mxu0 0.0
        %1225 = vmatprep.subr.mxu0 0.0
        %1226 = vmatpush1.xpose.msra.mxu0 0.0
        %1227 = vmatprep.subr.mxu0 0.0
        %1228 = vmatpush1.xpose.msra.mxu0 0.0
        %1229 = vmatprep.subr.mxu0 0.0
        %1230 = vmatpush1.xpose.msra.mxu0 0.0
        %1231 = vmatprep.subr.mxu0 0.0
        %1232 = vmatpush1.xpose.msra.mxu0 0.0
        %1233 = vmatprep.subr.mxu0 0.0
        %1234 = vmatpush1.xpose.msra.mxu0 0.0
        %1235 = vmatprep.subr.mxu0 0.0
        %1236 = vmatpush1.xpose.msra.mxu0 0.0
        %1237 = vmatprep.subr.mxu0 0.0
        %1238 = vmatpush1.xpose.msra.mxu0 0.0
        %1239 = vmatprep.subr.mxu0 0.0
        %1240 = vmatpush1.xpose.msra.mxu0 %v1213
        %1241 = vmatprep.subr.mxu0 0.0
        %1242 = vmatpush1.xpose.msra.mxu0 %v1210
        %1243 = vmatprep.subr.mxu0 0.0
        %1244 = vmatpush1.xpose.msra.mxu0 %v1207
        %1245 = vmatprep.subr.mxu0 0.0
        %1246 = vmatpush1.xpose.msra.mxu0 %v1204
        %1247 = vmatprep.subr.mxu0 0.0
        %1248 = vmatpush2.xpose.msra.mxu0 0.0
        %1249 = vmatprep.subr.mxu0 0.0
        %1250 = vmatpush2.xpose.msra.mxu0 0.0
        %1251 = vmatprep.subr.mxu0 0.0
        %1252 = vmatpush2.xpose.msra.mxu0 0.0
        %1253 = vmatprep.subr.mxu0 0.0
        %1254 = vmatpush2.xpose.msra.mxu0 0.0
        %1255 = vmatprep.subr.mxu0 0.0
        %1256 = vmatpush2.xpose.msra.mxu0 0.0
        %1257 = vmatprep.subr.mxu0 0.0
        %1258 = vmatpush2.xpose.msra.mxu0 0.0
        %1259 = vmatprep.subr.mxu0 0.0
        %1260 = vmatpush2.xpose.msra.mxu0 0.0
        %1261 = vmatprep.subr.mxu0 0.0
        %1262 = vmatpush2.xpose.msra.mxu0 0.0
        %1263 = vmatprep.subr.mxu0 0.0
        %1264 = vmatpush2.xpose.msra.mxu0 0.0
        %1265 = vmatprep.subr.mxu0 0.0
        %1266 = vmatpush2.xpose.msra.mxu0 0.0
        %1267 = vmatprep.subr.mxu0 0.0
        %1268 = vmatpush2.xpose.msra.mxu0 0.0
        %1269 = vmatprep.subr.mxu0 0.0
        %1270 = vmatpush2.xpose.msra.mxu0 0.0
        %1271 = vmatprep.subr.mxu0 0.0
        %1272 = vmatpush2.xpose.msra.mxu0 0.0
        %1273 = vmatprep.subr.mxu0 0.0
        %1274 = vmatpush2.xpose.msra.mxu0 0.0
        %1275 = vmatprep.subr.mxu0 0.0
        %1276 = vmatpush2.xpose.msra.mxu0 0.0
        %1277 = vmatprep.subr.mxu0 0.0
        %1278 = vmatpush2.xpose.msra.mxu0 0.0
        %1279 = vmatprep.mubr.f32.mxu0 0.0
        %1280 = vmatmul.mubr.f32.gmra.mxu0 %v1201
        %v1281 = vpop.f32.mrf.mxu0
        %v1282 = vadd.f32 0.0, %v1281
        %v1283 = vpop.f32.mrf.mxu0
        %1284 = vdwg.mxu0
        %vm1285 = vcmp.gt.f32.partialorder %v1282, 0.0
        %v1286 = vmul.f32 %v1282, 1.442695
        %v1287 = vpow.pop %v1286
        %v1288 = vsub.f32 %v1287, 1.0
        %v1289 = vsel %vm1285, %v1282, %v1288
        %1290 = vrot.lane.b32.xlu0 %v414, 64
        %v1291 = vpop.permute.xlu0 %1290
        %v1293 = vsel %vm426, %v419, 0
        %v1295 = vsel %vm430, %v1291, 0
        %1297 = vmatprep.subr.mxu0 0.0
        %1298 = vmatpush1.msra.mxu0 0.0
        %1299 = vmatprep.subr.mxu0 0.0
        %1300 = vmatpush1.msra.mxu0 0.0
        %1301 = vmatprep.subr.mxu0 0.0
        %1302 = vmatpush1.msra.mxu0 0.0
        %1303 = vmatprep.subr.mxu0 0.0
        %1304 = vmatpush1.msra.mxu0 0.0
        %1305 = vmatprep.subr.mxu0 0.0
        %1306 = vmatpush1.msra.mxu0 0.0
        %1307 = vmatprep.subr.mxu0 0.0
        %1308 = vmatpush1.msra.mxu0 0.0
        %1309 = vmatprep.subr.mxu0 0.0
        %1310 = vmatpush1.msra.mxu0 0.0
        %1311 = vmatprep.subr.mxu0 0.0
        %1312 = vmatpush1.msra.mxu0 0.0
        %1313 = vmatprep.subr.mxu0 0.0
        %1314 = vmatpush1.msra.mxu0 0.0
        %1315 = vmatprep.subr.mxu0 0.0
        %1316 = vmatpush1.msra.mxu0 0.0
        %1317 = vmatprep.subr.mxu0 0.0
        %1318 = vmatpush1.msra.mxu0 0.0
        %1319 = vmatprep.subr.mxu0 0.0
        %1320 = vmatpush1.msra.mxu0 0.0
        %1321 = vmatprep.subr.mxu0 0.0
        %1322 = vmatpush1.msra.mxu0 0.0
        %1323 = vmatprep.subr.mxu0 0.0
        %1324 = vmatpush1.msra.mxu0 0.0
        %1325 = vmatprep.subr.mxu0 0.0
        %1326 = vmatpush1.msra.mxu0 0.0
        %1327 = vmatprep.subr.mxu0 0.0
        %1328 = vmatpush1.msra.mxu0 %v1295
        %1329 = vmatprep.subr.mxu0 0.0
        %1330 = vmatpush2.msra.mxu0 0.0
        %1331 = vmatprep.subr.mxu0 0.0
        %1332 = vmatpush2.msra.mxu0 0.0
        %1333 = vmatprep.subr.mxu0 0.0
        %1334 = vmatpush2.msra.mxu0 0.0
        %1335 = vmatprep.subr.mxu0 0.0
        %1336 = vmatpush2.msra.mxu0 0.0
        %1337 = vmatprep.subr.mxu0 0.0
        %1338 = vmatpush2.msra.mxu0 0.0
        %1339 = vmatprep.subr.mxu0 0.0
        %1340 = vmatpush2.msra.mxu0 0.0
        %1341 = vmatprep.subr.mxu0 0.0
        %1342 = vmatpush2.msra.mxu0 0.0
        %1343 = vmatprep.subr.mxu0 0.0
        %1344 = vmatpush2.msra.mxu0 0.0
        %1345 = vmatprep.subr.mxu0 0.0
        %1346 = vmatpush2.msra.mxu0 0.0
        %1347 = vmatprep.subr.mxu0 0.0
        %1348 = vmatpush2.msra.mxu0 0.0
        %1349 = vmatprep.subr.mxu0 0.0
        %1350 = vmatpush2.msra.mxu0 0.0
        %1351 = vmatprep.subr.mxu0 0.0
        %1352 = vmatpush2.msra.mxu0 0.0
        %1353 = vmatprep.subr.mxu0 0.0
        %1354 = vmatpush2.msra.mxu0 0.0
        %1355 = vmatprep.subr.mxu0 0.0
        %1356 = vmatpush2.msra.mxu0 0.0
        %1357 = vmatprep.subr.mxu0 0.0
        %1358 = vmatpush2.msra.mxu0 0.0
        %1359 = vmatprep.subr.mxu0 0.0
        %1360 = vmatpush2.msra.mxu0 0.0
        %1361 = vmatprep.mubr.f32.mxu0 0.0
        %1362 = vmatmul.mubr.f32.gmra.mxu0 %v1293
        %v1363 = vpop.f32.mrf.mxu0
        %v1364 = vadd.f32 0.0, %v1363
        %v1365 = vpop.f32.mrf.mxu0
        %1366 = vdwg.mxu0
        %v1368 = vsel %vm426, %v422, 0
        %v1371 = vsel %vm430, %v1364, 0
        %1373 = vmatprep.subr.mxu0 0.0
        %1374 = vmatpush1.msra.mxu0 0.0
        %1375 = vmatprep.subr.mxu0 0.0
        %1376 = vmatpush1.msra.mxu0 0.0
        %1377 = vmatprep.subr.mxu0 0.0
        %1378 = vmatpush1.msra.mxu0 0.0
        %1379 = vmatprep.subr.mxu0 0.0
        %1380 = vmatpush1.msra.mxu0 0.0
        %1381 = vmatprep.subr.mxu0 0.0
        %1382 = vmatpush1.msra.mxu0 0.0
        %1383 = vmatprep.subr.mxu0 0.0
        %1384 = vmatpush1.msra.mxu0 0.0
        %1385 = vmatprep.subr.mxu0 0.0
        %1386 = vmatpush1.msra.mxu0 0.0
        %1387 = vmatprep.subr.mxu0 0.0
        %1388 = vmatpush1.msra.mxu0 0.0
        %1389 = vmatprep.subr.mxu0 0.0
        %1390 = vmatpush1.msra.mxu0 0.0
        %1391 = vmatprep.subr.mxu0 0.0
        %1392 = vmatpush1.msra.mxu0 0.0
        %1393 = vmatprep.subr.mxu0 0.0
        %1394 = vmatpush1.msra.mxu0 0.0
        %1395 = vmatprep.subr.mxu0 0.0
        %1396 = vmatpush1.msra.mxu0 0.0
        %1397 = vmatprep.subr.mxu0 0.0
        %1398 = vmatpush1.msra.mxu0 0.0
        %1399 = vmatprep.subr.mxu0 0.0
        %1400 = vmatpush1.msra.mxu0 0.0
        %1401 = vmatprep.subr.mxu0 0.0
        %1402 = vmatpush1.msra.mxu0 0.0
        %1403 = vmatprep.subr.mxu0 0.0
        %1404 = vmatpush1.msra.mxu0 %v1371
        %1405 = vmatprep.subr.mxu0 0.0
        %1406 = vmatpush2.msra.mxu0 0.0
        %1407 = vmatprep.subr.mxu0 0.0
        %1408 = vmatpush2.msra.mxu0 0.0
        %1409 = vmatprep.subr.mxu0 0.0
        %1410 = vmatpush2.msra.mxu0 0.0
        %1411 = vmatprep.subr.mxu0 0.0
        %1412 = vmatpush2.msra.mxu0 0.0
        %1413 = vmatprep.subr.mxu0 0.0
        %1414 = vmatpush2.msra.mxu0 0.0
        %1415 = vmatprep.subr.mxu0 0.0
        %1416 = vmatpush2.msra.mxu0 0.0
        %1417 = vmatprep.subr.mxu0 0.0
        %1418 = vmatpush2.msra.mxu0 0.0
        %1419 = vmatprep.subr.mxu0 0.0
        %1420 = vmatpush2.msra.mxu0 0.0
        %1421 = vmatprep.subr.mxu0 0.0
        %1422 = vmatpush2.msra.mxu0 0.0
        %1423 = vmatprep.subr.mxu0 0.0
        %1424 = vmatpush2.msra.mxu0 0.0
        %1425 = vmatprep.subr.mxu0 0.0
        %1426 = vmatpush2.msra.mxu0 0.0
        %1427 = vmatprep.subr.mxu0 0.0
        %1428 = vmatpush2.msra.mxu0 0.0
        %1429 = vmatprep.subr.mxu0 0.0
        %1430 = vmatpush2.msra.mxu0 0.0
        %1431 = vmatprep.subr.mxu0 0.0
        %1432 = vmatpush2.msra.mxu0 0.0
        %1433 = vmatprep.subr.mxu0 0.0
        %1434 = vmatpush2.msra.mxu0 0.0
        %1435 = vmatprep.subr.mxu0 0.0
        %1436 = vmatpush2.msra.mxu0 0.0
        %1437 = vmatprep.mubr.f32.mxu0 0.0
        %1438 = vmatmul.mubr.f32.gmra.mxu0 %v1368
        %v1439 = vpop.f32.mrf.mxu0
        %v1440 = vadd.f32 0.0, %v1439
        %v1441 = vpop.f32.mrf.mxu0
        %1442 = vdwg.mxu0
        %v1444 = vsel %vm426, %v425, 0
        %1446 = vmatprep.subr.mxu0 0.0
        %1447 = vmatpush1.msra.mxu0 0.0
        %1448 = vmatprep.subr.mxu0 0.0
        %1449 = vmatpush1.msra.mxu0 0.0
        %1450 = vmatprep.subr.mxu0 0.0
        %1451 = vmatpush1.msra.mxu0 0.0
        %1452 = vmatprep.subr.mxu0 0.0
        %1453 = vmatpush1.msra.mxu0 0.0
        %1454 = vmatprep.subr.mxu0 0.0
        %1455 = vmatpush1.msra.mxu0 0.0
        %1456 = vmatprep.subr.mxu0 0.0
        %1457 = vmatpush1.msra.mxu0 0.0
        %1458 = vmatprep.subr.mxu0 0.0
        %1459 = vmatpush1.msra.mxu0 0.0
        %1460 = vmatprep.subr.mxu0 0.0
        %1461 = vmatpush1.msra.mxu0 0.0
        %1462 = vmatprep.subr.mxu0 0.0
        %1463 = vmatpush1.msra.mxu0 0.0
        %1464 = vmatprep.subr.mxu0 0.0
        %1465 = vmatpush1.msra.mxu0 0.0
        %1466 = vmatprep.subr.mxu0 0.0
        %1467 = vmatpush1.msra.mxu0 0.0
        %1468 = vmatprep.subr.mxu0 0.0
        %1469 = vmatpush1.msra.mxu0 0.0
        %1470 = vmatprep.subr.mxu0 0.0
        %1471 = vmatpush1.msra.mxu0 0.0
        %1472 = vmatprep.subr.mxu0 0.0
        %1473 = vmatpush1.msra.mxu0 0.0
        %1474 = vmatprep.subr.mxu0 0.0
        %1475 = vmatpush1.msra.mxu0 0.0
        %1476 = vmatprep.subr.mxu0 0.0
        %1477 = vmatpush1.msra.mxu0 %v1371
        %1478 = vmatprep.subr.mxu0 0.0
        %1479 = vmatpush2.msra.mxu0 0.0
        %1480 = vmatprep.subr.mxu0 0.0
        %1481 = vmatpush2.msra.mxu0 0.0
        %1482 = vmatprep.subr.mxu0 0.0
        %1483 = vmatpush2.msra.mxu0 0.0
        %1484 = vmatprep.subr.mxu0 0.0
        %1485 = vmatpush2.msra.mxu0 0.0
        %1486 = vmatprep.subr.mxu0 0.0
        %1487 = vmatpush2.msra.mxu0 0.0
        %1488 = vmatprep.subr.mxu0 0.0
        %1489 = vmatpush2.msra.mxu0 0.0
        %1490 = vmatprep.subr.mxu0 0.0
        %1491 = vmatpush2.msra.mxu0 0.0
        %1492 = vmatprep.subr.mxu0 0.0
        %1493 = vmatpush2.msra.mxu0 0.0
        %1494 = vmatprep.subr.mxu0 0.0
        %1495 = vmatpush2.msra.mxu0 0.0
        %1496 = vmatprep.subr.mxu0 0.0
        %1497 = vmatpush2.msra.mxu0 0.0
        %1498 = vmatprep.subr.mxu0 0.0
        %1499 = vmatpush2.msra.mxu0 0.0
        %1500 = vmatprep.subr.mxu0 0.0
        %1501 = vmatpush2.msra.mxu0 0.0
        %1502 = vmatprep.subr.mxu0 0.0
        %1503 = vmatpush2.msra.mxu0 0.0
        %1504 = vmatprep.subr.mxu0 0.0
        %1505 = vmatpush2.msra.mxu0 0.0
        %1506 = vmatprep.subr.mxu0 0.0
        %1507 = vmatpush2.msra.mxu0 0.0
        %1508 = vmatprep.subr.mxu0 0.0
        %1509 = vmatpush2.msra.mxu0 0.0
        %1510 = vmatprep.mubr.f32.mxu0 0.0
        %1511 = vmatmul.mubr.f32.gmra.mxu0 %v1444
        %v1512 = vpop.f32.mrf.mxu0
        %v1513 = vadd.f32 0.0, %v1512
        %v1514 = vpop.f32.mrf.mxu0
        %1515 = vdwg.mxu0
        %1516 = vxpose.xlu0.b32.start [1/16] %v1440, 128
        %1517 = vxpose.xlu0.b32.cont [2/16] 0.0, 128
        %1518 = vxpose.xlu0.b32.cont [3/16] 0.0, 128
        %1519 = vxpose.xlu0.b32.cont [4/16] 0.0, 128
        %1520 = vxpose.xlu0.b32.cont [5/16] 0.0, 128
        %1521 = vxpose.xlu0.b32.cont [6/16] 0.0, 128
        %1522 = vxpose.xlu0.b32.cont [7/16] 0.0, 128
        %1523 = vxpose.xlu0.b32.cont [8/16] 0.0, 128
        %1524 = vxpose.xlu0.b32.cont [9/16] 0.0, 128
        %1525 = vxpose.xlu0.b32.cont [10/16] 0.0, 128
        %1526 = vxpose.xlu0.b32.cont [11/16] 0.0, 128
        %1527 = vxpose.xlu0.b32.cont [12/16] 0.0, 128
        %1528 = vxpose.xlu0.b32.cont [13/16] 0.0, 128
        %1529 = vxpose.xlu0.b32.cont [14/16] 0.0, 128
        %1530 = vxpose.xlu0.b32.cont [15/16] 0.0, 128
        %1531 = vxpose.xlu0.b32.end [16/16] 0.0, 128
        %v1532 = vpop.trf.xlu0
        %v1533 = vpop.trf.xlu0
        %v1534 = vpop.trf.xlu0
        %v1535 = vpop.trf.xlu0
        %v1536 = vpop.trf.xlu0
        %v1537 = vpop.trf.xlu0
        %v1538 = vpop.trf.xlu0
        %v1539 = vpop.trf.xlu0
        %v1540 = vpop.trf.xlu0
        %v1541 = vpop.trf.xlu0
        %v1542 = vpop.trf.xlu0
        %v1543 = vpop.trf.xlu0
        %v1544 = vpop.trf.xlu0
        %v1545 = vpop.trf.xlu0
        %v1546 = vpop.trf.xlu0
        %v1547 = vpop.trf.xlu0
        %1549 = vset.pattern.permute.xlu0 0
        %1550 = vperm.xlu0 %1549, %v1532
        %v1551 = vpop.permute.xlu0 %1550
        %1554 = vset.pattern.permute.xlu0 0
        %1555 = vperm.xlu0 %1554, %v1533
        %v1556 = vpop.permute.xlu0 %1555
        %1559 = vset.pattern.permute.xlu0 0
        %1560 = vperm.xlu0 %1559, %v1534
        %v1561 = vpop.permute.xlu0 %1560
        %1564 = vset.pattern.permute.xlu0 0
        %1565 = vperm.xlu0 %1564, %v1535
        %v1566 = vpop.permute.xlu0 %1565
        %v1568 = vlaneseq
        %v1569 = vshrl.u32 %v1568, 7
        %v1570 = vsub.s32 0, %v1569
        %v1571 = vrot.slane %v1513, %v1570
        %v1572 = vadd.f32 %v1551, %v1571
        %v1573 = vadd.f32 %v1556, %v1571
        %v1574 = vadd.f32 %v1561, %v1571
        %v1575 = vadd.f32 %v1566, %v1571
        %vm1576 = vcmp.gt.f32.partialorder %v1572, 0.0
        %vm1577 = vcmp.gt.f32.partialorder %v1573, 0.0
        %vm1578 = vcmp.gt.f32.partialorder %v1574, 0.0
        %vm1579 = vcmp.gt.f32.partialorder %v1575, 0.0
        %v1580 = vmul.f32 %v1572, 0.2
        %v1581 = vmul.f32 %v1573, 0.2
        %v1582 = vmul.f32 %v1574, 0.2
        %v1583 = vmul.f32 %v1575, 0.2
        %v1584 = vsel %vm1576, %v1572, %v1580
        %v1585 = vsel %vm1577, %v1573, %v1581
        %v1586 = vsel %vm1578, %v1574, %v1582
        %v1587 = vsel %vm1579, %v1575, %v1583
        %v1588 = vsel %vm725, %v1584, -inf
        %1589 = vmax.xlane.f32.xlu0 %v1588
        %v1590 = vpop.xlane.xlu0 %1589
        %v1591 = vsel %vm725, %v1585, -inf
        %1592 = vmax.xlane.f32.xlu0 %v1591
        %v1593 = vpop.xlane.xlu0 %1592
        %v1594 = vsel %vm725, %v1586, -inf
        %1595 = vmax.xlane.f32.xlu0 %v1594
        %v1596 = vpop.xlane.xlu0 %1595
        %v1597 = vsel %vm725, %v1587, -inf
        %1598 = vmax.xlane.f32.xlu0 %v1597
        %v1599 = vpop.xlane.xlu0 %1598
        %v1600 = vsub.f32 %v1584, %v1590
        %v1601 = vsub.f32 %v1585, %v1593
        %v1602 = vsub.f32 %v1586, %v1596
        %v1603 = vsub.f32 %v1587, %v1599
        %v1604 = vmul.f32 %v1600, 1.442695
        %v1605 = vpow.pop %v1604
        %v1606 = vmul.f32 %v1601, 1.442695
        %v1607 = vpow.pop %v1606
        %v1608 = vmul.f32 %v1602, 1.442695
        %v1609 = vpow.pop %v1608
        %v1610 = vmul.f32 %v1603, 1.442695
        %v1611 = vpow.pop %v1610
        %v1612 = vsel %vm725, %v1605, 0.0
        %1613 = vadd.xlane.f32.xlu0 %v1612
        %v1614 = vpop.xlane.xlu0 %1613
        %v1615 = vsel %vm725, %v1607, 0.0
        %1616 = vadd.xlane.f32.xlu0 %v1615
        %v1617 = vpop.xlane.xlu0 %1616
        %v1618 = vsel %vm725, %v1609, 0.0
        %1619 = vadd.xlane.f32.xlu0 %v1618
        %v1620 = vpop.xlane.xlu0 %1619
        %v1621 = vsel %vm725, %v1611, 0.0
        %1622 = vadd.xlane.f32.xlu0 %v1621
        %v1623 = vpop.xlane.xlu0 %1622
        %v1624 = vrcp.pop %v1614
        %v1625 = vrcp.pop %v1617
        %v1626 = vrcp.pop %v1620
        %v1627 = vrcp.pop %v1623
        %v1628 = vmul.f32 %v1605, %v1624
        %v1629 = vmul.f32 %v1607, %v1625
        %v1630 = vmul.f32 %v1609, %v1626
        %v1631 = vmul.f32 %v1611, %v1627
        %v1632 = vsel %vm725, %v1364, 0
        %v1635 = vsel %vm725, %v1628, 0
        %v1638 = vsel %vm725, %v1629, 0
        %v1641 = vsel %vm725, %v1630, 0
        %v1644 = vsel %vm725, %v1631, 0
        %1646 = vmatprep.subr.mxu0 0.0
        %1647 = vmatpush1.xpose.msra.mxu0 0.0
        %1648 = vmatprep.subr.mxu0 0.0
        %1649 = vmatpush1.xpose.msra.mxu0 0.0
        %1650 = vmatprep.subr.mxu0 0.0
        %1651 = vmatpush1.xpose.msra.mxu0 0.0
        %1652 = vmatprep.subr.mxu0 0.0
        %1653 = vmatpush1.xpose.msra.mxu0 0.0
        %1654 = vmatprep.subr.mxu0 0.0
        %1655 = vmatpush1.xpose.msra.mxu0 0.0
        %1656 = vmatprep.subr.mxu0 0.0
        %1657 = vmatpush1.xpose.msra.mxu0 0.0
        %1658 = vmatprep.subr.mxu0 0.0
        %1659 = vmatpush1.xpose.msra.mxu0 0.0
        %1660 = vmatprep.subr.mxu0 0.0
        %1661 = vmatpush1.xpose.msra.mxu0 0.0
        %1662 = vmatprep.subr.mxu0 0.0
        %1663 = vmatpush1.xpose.msra.mxu0 0.0
        %1664 = vmatprep.subr.mxu0 0.0
        %1665 = vmatpush1.xpose.msra.mxu0 0.0
        %1666 = vmatprep.subr.mxu0 0.0
        %1667 = vmatpush1.xpose.msra.mxu0 0.0
        %1668 = vmatprep.subr.mxu0 0.0
        %1669 = vmatpush1.xpose.msra.mxu0 0.0
        %1670 = vmatprep.subr.mxu0 0.0
        %1671 = vmatpush1.xpose.msra.mxu0 %v1644
        %1672 = vmatprep.subr.mxu0 0.0
        %1673 = vmatpush1.xpose.msra.mxu0 %v1641
        %1674 = vmatprep.subr.mxu0 0.0
        %1675 = vmatpush1.xpose.msra.mxu0 %v1638
        %1676 = vmatprep.subr.mxu0 0.0
        %1677 = vmatpush1.xpose.msra.mxu0 %v1635
        %1678 = vmatprep.subr.mxu0 0.0
        %1679 = vmatpush2.xpose.msra.mxu0 0.0
        %1680 = vmatprep.subr.mxu0 0.0
        %1681 = vmatpush2.xpose.msra.mxu0 0.0
        %1682 = vmatprep.subr.mxu0 0.0
        %1683 = vmatpush2.xpose.msra.mxu0 0.0
        %1684 = vmatprep.subr.mxu0 0.0
        %1685 = vmatpush2.xpose.msra.mxu0 0.0
        %1686 = vmatprep.subr.mxu0 0.0
        %1687 = vmatpush2.xpose.msra.mxu0 0.0
        %1688 = vmatprep.subr.mxu0 0.0
        %1689 = vmatpush2.xpose.msra.mxu0 0.0
        %1690 = vmatprep.subr.mxu0 0.0
        %1691 = vmatpush2.xpose.msra.mxu0 0.0
        %1692 = vmatprep.subr.mxu0 0.0
        %1693 = vmatpush2.xpose.msra.mxu0 0.0
        %1694 = vmatprep.subr.mxu0 0.0
        %1695 = vmatpush2.xpose.msra.mxu0 0.0
        %1696 = vmatprep.subr.mxu0 0.0
        %1697 = vmatpush2.xpose.msra.mxu0 0.0
        %1698 = vmatprep.subr.mxu0 0.0
        %1699 = vmatpush2.xpose.msra.mxu0 0.0
        %1700 = vmatprep.subr.mxu0 0.0
        %1701 = vmatpush2.xpose.msra.mxu0 0.0
        %1702 = vmatprep.subr.mxu0 0.0
        %1703 = vmatpush2.xpose.msra.mxu0 0.0
        %1704 = vmatprep.subr.mxu0 0.0
        %1705 = vmatpush2.xpose.msra.mxu0 0.0
        %1706 = vmatprep.subr.mxu0 0.0
        %1707 = vmatpush2.xpose.msra.mxu0 0.0
        %1708 = vmatprep.subr.mxu0 0.0
        %1709 = vmatpush2.xpose.msra.mxu0 0.0
        %1710 = vmatprep.mubr.f32.mxu0 0.0
        %1711 = vmatmul.mubr.f32.gmra.mxu0 %v1632
        %v1712 = vpop.f32.mrf.mxu0
        %v1713 = vadd.f32 0.0, %v1712
        %v1714 = vpop.f32.mrf.mxu0
        %1715 = vdwg.mxu0
        %vm1716 = vcmp.gt.f32.partialorder %v1713, 0.0
        %v1717 = vmul.f32 %v1713, 1.442695
        %v1718 = vpow.pop %v1717
        %v1719 = vsub.f32 %v1718, 1.0
        %v1720 = vsel %vm1716, %v1713, %v1719
        %1722 = vrot.lane.b32.xlu0 %v1289, 32
        %v1723 = vpop.permute.xlu0 %1722
        %1726 = vrot.lane.b32.xlu0 %v1720, 64
        %v1727 = vpop.permute.xlu0 %1726
        %v1729 = vsel %vm725, %v858, %v1723
        %vm1730 = vcmask 523264
        %v1731 = vsel %vm1730, %v1729, %v1727
        %v1732 = vld [vmem:[%s6] sm:$0xff]
        %v1733 = vld [vmem:[%s6 + $0x8] sm:$0xff]
        %v1734 = vld [vmem:[%s6 + $0x10] sm:$0xff]
        %v1735 = vld [vmem:[%s6 + $0x18] sm:$0xff]
        %v1736 = vld [vmem:[%s6 + $0x20] sm:$0xff]
        %v1737 = vld [vmem:[%s6 + $0x28] sm:$0xff]
        %v1738 = vld [vmem:[%s6 + $0x30] sm:$0xff]
        %v1739 = vld [vmem:[%s6 + $0x38] sm:$0xff]
        %v1740 = vld [vmem:[%s6 + $0x40] sm:$0xff]
        %v1741 = vld [vmem:[%s6 + $0x48] sm:$0xff]
        %v1742 = vld [vmem:[%s6 + $0x50] sm:$0xff]
        %v1743 = vld [vmem:[%s6 + $0x58] sm:$0xff]
        %v1744 = vld [vmem:[%s6 + $0x60] sm:$0xff]
        %v1745 = vld [vmem:[%s6 + $0x68] sm:$0xff]
        %v1746 = vld [vmem:[%s6 + $0x70] sm:$0xff]
        %v1747 = vld [vmem:[%s6 + $0x78] sm:$0xff]
        %v1748 = vld [vmem:[%s6 + $0x80] sm:$0xff]
        %v1749 = vld [vmem:[%s6 + $0x88] sm:$0xff]
        %v1750 = vld [vmem:[%s6 + $0x90] sm:$0xff]
        %v1751 = vld [vmem:[%s6 + $0x98] sm:$0xff]
        %v1752 = vld [vmem:[%s6 + $0xa0] sm:$0xff]
        %v1753 = vld [vmem:[%s6 + $0xa8] sm:$0xff]
        %v1754 = vld [vmem:[%s6 + $0xb0] sm:$0xff]
        %v1755 = vld [vmem:[%s6 + $0xb8] sm:$0xff]
        %v1756 = vld [vmem:[%s7] sm:$0x3]
        %v1758 = vlaneseq
        %v1759 = vshrl.u32 %v1758, 7
        %v1760 = vsub.s32 0, %v1759
        %v1761 = vrot.slane %v1756, %v1760
        %v1762 = vlaneseq
        %v1763 = vshrl.u32 %v1762, 7
        %v1764 = vsub.s32 1, %v1763
        %v1765 = vrot.slane %v1756, %v1764
        %vm1768 = vcmask 785408
        %v1770 = vsel %vm1768, %v1731, 0
        %1772 = vmatprep.subr.mxu0 0.0
        %1773 = vmatpush1.msra.mxu0 0.0
        %1774 = vmatprep.subr.mxu0 0.0
        %1775 = vmatpush1.msra.mxu0 0.0
        %1776 = vmatprep.subr.mxu0 0.0
        %1777 = vmatpush1.msra.mxu0 0.0
        %1778 = vmatprep.subr.mxu0 0.0
        %1779 = vmatpush1.msra.mxu0 0.0
        %1780 = vmatprep.subr.mxu0 %v1755
        %1781 = vmatpush1.msra.mxu0 %v1754
        %1782 = vmatprep.subr.mxu0 %v1753
        %1783 = vmatpush1.msra.mxu0 %v1752
        %1784 = vmatprep.subr.mxu0 %v1751
        %1785 = vmatpush1.msra.mxu0 %v1750
        %1786 = vmatprep.subr.mxu0 %v1749
        %1787 = vmatpush1.msra.mxu0 %v1748
        %1788 = vmatprep.subr.mxu0 %v1747
        %1789 = vmatpush1.msra.mxu0 %v1746
        %1790 = vmatprep.subr.mxu0 %v1745
        %1791 = vmatpush1.msra.mxu0 %v1744
        %1792 = vmatprep.subr.mxu0 %v1743
        %1793 = vmatpush1.msra.mxu0 %v1742
        %1794 = vmatprep.subr.mxu0 %v1741
        %1795 = vmatpush1.msra.mxu0 %v1740
        %1796 = vmatprep.subr.mxu0 %v1739
        %1797 = vmatpush1.msra.mxu0 %v1738
        %1798 = vmatprep.subr.mxu0 %v1737
        %1799 = vmatpush1.msra.mxu0 %v1736
        %1800 = vmatprep.subr.mxu0 %v1735
        %1801 = vmatpush1.msra.mxu0 %v1734
        %1802 = vmatprep.subr.mxu0 %v1733
        %1803 = vmatpush1.msra.mxu0 %v1732
        %1804 = vmatprep.subr.mxu0 0.0
        %1805 = vmatpush2.msra.mxu0 0.0
        %1806 = vmatprep.subr.mxu0 0.0
        %1807 = vmatpush2.msra.mxu0 0.0
        %1808 = vmatprep.subr.mxu0 0.0
        %1809 = vmatpush2.msra.mxu0 0.0
        %1810 = vmatprep.subr.mxu0 0.0
        %1811 = vmatpush2.msra.mxu0 0.0
        %1812 = vmatprep.subr.mxu0 0.0
        %1813 = vmatpush2.msra.mxu0 0.0
        %1814 = vmatprep.subr.mxu0 0.0
        %1815 = vmatpush2.msra.mxu0 0.0
        %1816 = vmatprep.subr.mxu0 0.0
        %1817 = vmatpush2.msra.mxu0 0.0
        %1818 = vmatprep.subr.mxu0 0.0
        %1819 = vmatpush2.msra.mxu0 0.0
        %1820 = vmatprep.subr.mxu0 0.0
        %1821 = vmatpush2.msra.mxu0 0.0
        %1822 = vmatprep.subr.mxu0 0.0
        %1823 = vmatpush2.msra.mxu0 0.0
        %1824 = vmatprep.subr.mxu0 0.0
        %1825 = vmatpush2.msra.mxu0 0.0
        %1826 = vmatprep.subr.mxu0 0.0
        %1827 = vmatpush2.msra.mxu0 0.0
        %1828 = vmatprep.subr.mxu0 0.0
        %1829 = vmatpush2.msra.mxu0 0.0
        %1830 = vmatprep.subr.mxu0 0.0
        %1831 = vmatpush2.msra.mxu0 0.0
        %1832 = vmatprep.subr.mxu0 0.0
        %1833 = vmatpush2.msra.mxu0 0.0
        %1834 = vmatprep.subr.mxu0 0.0
        %1835 = vmatpush2.msra.mxu0 0.0
        %1836 = vmatprep.mubr.f32.mxu0 0.0
        %1837 = vmatmul.mubr.f32.gmra.mxu0 %v1770
        %v1838 = vpop.f32.mrf.mxu0
        %v1839 = vadd.f32 %v1761, %v1838
        %v1840 = vpop.f32.mrf.mxu0
        %v1841 = vadd.f32 %v1765, %v1840
        %1842 = vdwg.mxu0
        %s1843 = scalar_lea.vmem %s1, 256
        %v1844 = vld [vmem:[%s1843] sm:$0xff]
        %v1845 = vld [vmem:[%s1843 + $0x8] sm:$0xff]
        %v1846 = vld [vmem:[%s1843 + $0x10] sm:$0xff]
        %v1847 = vld [vmem:[%s1843 + $0x18] sm:$0xff]
        %v1848 = vld [vmem:[%s1843 + $0x20] sm:$0xff]
        %v1849 = vld [vmem:[%s1843 + $0x28] sm:$0xff]
        %v1850 = vld [vmem:[%s1843 + $0x30] sm:$0xff]
        %v1851 = vld [vmem:[%s1843 + $0x38] sm:$0xff]
        %v1852 = vld [vmem:[%s1843 + $0x40] sm:$0xff]
        %v1853 = vld [vmem:[%s1843 + $0x48] sm:$0xff]
        %v1854 = vld [vmem:[%s1843 + $0x50] sm:$0xff]
        %v1855 = vld [vmem:[%s1843 + $0x58] sm:$0xff]
        %v1856 = vld [vmem:[%s1843 + $0x60] sm:$0xff]
        %v1857 = vld [vmem:[%s1843 + $0x68] sm:$0xff]
        %v1858 = vld [vmem:[%s1843 + $0x70] sm:$0xff]
        %v1859 = vld [vmem:[%s1843 + $0x78] sm:$0xff]
        %v1860 = vld [vmem:[%s1843 + $0x80] sm:$0xff]
        %v1861 = vld [vmem:[%s1843 + $0x88] sm:$0xff]
        %v1862 = vld [vmem:[%s1843 + $0x90] sm:$0xff]
        %v1863 = vld [vmem:[%s1843 + $0x98] sm:$0xff]
        %v1864 = vld [vmem:[%s1843 + $0xa0] sm:$0xff]
        %v1865 = vld [vmem:[%s1843 + $0xa8] sm:$0xff]
        %v1866 = vld [vmem:[%s1843 + $0xb0] sm:$0xff]
        %v1867 = vld [vmem:[%s1843 + $0xb8] sm:$0xff]
        %v1868 = vld [vmem:[%s1843 + $0xc0] sm:$0xff]
        %v1869 = vld [vmem:[%s1843 + $0xc8] sm:$0xff]
        %v1870 = vld [vmem:[%s1843 + $0xd0] sm:$0xff]
        %v1871 = vld [vmem:[%s1843 + $0xd8] sm:$0xff]
        %v1872 = vld [vmem:[%s1843 + $0xe0] sm:$0xff]
        %v1873 = vld [vmem:[%s1843 + $0xe8] sm:$0xff]
        %v1874 = vld [vmem:[%s1843 + $0xf0] sm:$0xff]
        %v1875 = vld [vmem:[%s1843 + $0xf8] sm:$0xff]
        %s1876 = scalar_lea.vmem %s2, 1
        %v1877 = vld [vmem:[%s1876] sm:$0x1]
        %v1879 = vlaneseq
        %v1880 = vshrl.u32 %v1879, 7
        %v1881 = vsub.s32 0, %v1880
        %v1882 = vrot.slane %v1877, %v1881
        %1884 = vmatprep.subr.mxu0 0.0
        %1885 = vmatpush1.msra.mxu0 %v1859
        %1886 = vmatprep.subr.mxu0 0.0
        %1887 = vmatpush1.msra.mxu0 %v1858
        %1888 = vmatprep.subr.mxu0 0.0
        %1889 = vmatpush1.msra.mxu0 %v1857
        %1890 = vmatprep.subr.mxu0 0.0
        %1891 = vmatpush1.msra.mxu0 %v1856
        %1892 = vmatprep.subr.mxu0 0.0
        %1893 = vmatpush1.msra.mxu0 %v1855
        %1894 = vmatprep.subr.mxu0 0.0
        %1895 = vmatpush1.msra.mxu0 %v1854
        %1896 = vmatprep.subr.mxu0 0.0
        %1897 = vmatpush1.msra.mxu0 %v1853
        %1898 = vmatprep.subr.mxu0 0.0
        %1899 = vmatpush1.msra.mxu0 %v1852
        %1900 = vmatprep.subr.mxu0 0.0
        %1901 = vmatpush1.msra.mxu0 %v1851
        %1902 = vmatprep.subr.mxu0 0.0
        %1903 = vmatpush1.msra.mxu0 %v1850
        %1904 = vmatprep.subr.mxu0 0.0
        %1905 = vmatpush1.msra.mxu0 %v1849
        %1906 = vmatprep.subr.mxu0 0.0
        %1907 = vmatpush1.msra.mxu0 %v1848
        %1908 = vmatprep.subr.mxu0 0.0
        %1909 = vmatpush1.msra.mxu0 %v1847
        %1910 = vmatprep.subr.mxu0 0.0
        %1911 = vmatpush1.msra.mxu0 %v1846
        %1912 = vmatprep.subr.mxu0 0.0
        %1913 = vmatpush1.msra.mxu0 %v1845
        %1914 = vmatprep.subr.mxu0 0.0
        %1915 = vmatpush1.msra.mxu0 %v1844
        %1916 = vmatprep.subr.mxu0 0.0
        %1917 = vmatpush2.msra.mxu0 %v1875
        %1918 = vmatprep.subr.mxu0 0.0
        %1919 = vmatpush2.msra.mxu0 %v1874
        %1920 = vmatprep.subr.mxu0 0.0
        %1921 = vmatpush2.msra.mxu0 %v1873
        %1922 = vmatprep.subr.mxu0 0.0
        %1923 = vmatpush2.msra.mxu0 %v1872
        %1924 = vmatprep.subr.mxu0 0.0
        %1925 = vmatpush2.msra.mxu0 %v1871
        %1926 = vmatprep.subr.mxu0 0.0
        %1927 = vmatpush2.msra.mxu0 %v1870
        %1928 = vmatprep.subr.mxu0 0.0
        %1929 = vmatpush2.msra.mxu0 %v1869
        %1930 = vmatprep.subr.mxu0 0.0
        %1931 = vmatpush2.msra.mxu0 %v1868
        %1932 = vmatprep.subr.mxu0 0.0
        %1933 = vmatpush2.msra.mxu0 %v1867
        %1934 = vmatprep.subr.mxu0 0.0
        %1935 = vmatpush2.msra.mxu0 %v1866
        %1936 = vmatprep.subr.mxu0 0.0
        %1937 = vmatpush2.msra.mxu0 %v1865
        %1938 = vmatprep.subr.mxu0 0.0
        %1939 = vmatpush2.msra.mxu0 %v1864
        %1940 = vmatprep.subr.mxu0 0.0
        %1941 = vmatpush2.msra.mxu0 %v1863
        %1942 = vmatprep.subr.mxu0 0.0
        %1943 = vmatpush2.msra.mxu0 %v1862
        %1944 = vmatprep.subr.mxu0 0.0
        %1945 = vmatpush2.msra.mxu0 %v1861
        %1946 = vmatprep.subr.mxu0 0.0
        %1947 = vmatpush2.msra.mxu0 %v1860
        %1948 = vmatprep.mubr.f32.mxu0 %v1841
        %1949 = vmatmul.mubr.f32.gmra.mxu0 %v1839
        %v1950 = vpop.f32.mrf.mxu0
        %v1951 = vadd.f32 %v1882, %v1950
        %v1952 = vpop.f32.mrf.mxu0
        %1953 = vdwg.mxu0
        %s1954 = scalar_lea.vmem %s3, 12
        %v1955 = vld [vmem:[%s1954] sm:$0xf]
        %v1956 = vld [vmem:[%s1954 + $0x4] sm:$0xf]
        %v1957 = vld [vmem:[%s1954 + $0x8] sm:$0xf]
        %s1958 = scalar_lea.vmem %s4, 3
        %v1959 = vld [vmem:[%s1958] sm:$0x1]
        %v1960 = vld [vmem:[%s1958 + $0x1] sm:$0x1]
        %v1961 = vld [vmem:[%s1958 + $0x2] sm:$0x1]
        %s1962 = scalar_lea.vmem %s5, 3
        %v1963 = vld [vmem:[%s1962] sm:$0x1]
        %v1964 = vld [vmem:[%s1962 + $0x1] sm:$0x1]
        %v1965 = vld [vmem:[%s1962 + $0x2] sm:$0x1]
        %v1967 = vsel %vm426, %v1955, 0
        %v1970 = vsel %vm430, %v1951, 0
        %1972 = vmatprep.subr.mxu0 0.0
        %1973 = vmatpush1.msra.mxu0 0.0
        %1974 = vmatprep.subr.mxu0 0.0
        %1975 = vmatpush1.msra.mxu0 0.0
        %1976 = vmatprep.subr.mxu0 0.0
        %1977 = vmatpush1.msra.mxu0 0.0
        %1978 = vmatprep.subr.mxu0 0.0
        %1979 = vmatpush1.msra.mxu0 0.0
        %1980 = vmatprep.subr.mxu0 0.0
        %1981 = vmatpush1.msra.mxu0 0.0
        %1982 = vmatprep.subr.mxu0 0.0
        %1983 = vmatpush1.msra.mxu0 0.0
        %1984 = vmatprep.subr.mxu0 0.0
        %1985 = vmatpush1.msra.mxu0 0.0
        %1986 = vmatprep.subr.mxu0 0.0
        %1987 = vmatpush1.msra.mxu0 0.0
        %1988 = vmatprep.subr.mxu0 0.0
        %1989 = vmatpush1.msra.mxu0 0.0
        %1990 = vmatprep.subr.mxu0 0.0
        %1991 = vmatpush1.msra.mxu0 0.0
        %1992 = vmatprep.subr.mxu0 0.0
        %1993 = vmatpush1.msra.mxu0 0.0
        %1994 = vmatprep.subr.mxu0 0.0
        %1995 = vmatpush1.msra.mxu0 0.0
        %1996 = vmatprep.subr.mxu0 0.0
        %1997 = vmatpush1.msra.mxu0 0.0
        %1998 = vmatprep.subr.mxu0 0.0
        %1999 = vmatpush1.msra.mxu0 0.0
        %2000 = vmatprep.subr.mxu0 0.0
        %2001 = vmatpush1.msra.mxu0 0.0
        %2002 = vmatprep.subr.mxu0 0.0
        %2003 = vmatpush1.msra.mxu0 %v1970
        %2004 = vmatprep.subr.mxu0 0.0
        %2005 = vmatpush2.msra.mxu0 0.0
        %2006 = vmatprep.subr.mxu0 0.0
        %2007 = vmatpush2.msra.mxu0 0.0
        %2008 = vmatprep.subr.mxu0 0.0
        %2009 = vmatpush2.msra.mxu0 0.0
        %2010 = vmatprep.subr.mxu0 0.0
        %2011 = vmatpush2.msra.mxu0 0.0
        %2012 = vmatprep.subr.mxu0 0.0
        %2013 = vmatpush2.msra.mxu0 0.0
        %2014 = vmatprep.subr.mxu0 0.0
        %2015 = vmatpush2.msra.mxu0 0.0
        %2016 = vmatprep.subr.mxu0 0.0
        %2017 = vmatpush2.msra.mxu0 0.0
        %2018 = vmatprep.subr.mxu0 0.0
        %2019 = vmatpush2.msra.mxu0 0.0
        %2020 = vmatprep.subr.mxu0 0.0
        %2021 = vmatpush2.msra.mxu0 0.0
        %2022 = vmatprep.subr.mxu0 0.0
        %2023 = vmatpush2.msra.mxu0 0.0
        %2024 = vmatprep.subr.mxu0 0.0
        %2025 = vmatpush2.msra.mxu0 0.0
        %2026 = vmatprep.subr.mxu0 0.0
        %2027 = vmatpush2.msra.mxu0 0.0
        %2028 = vmatprep.subr.mxu0 0.0
        %2029 = vmatpush2.msra.mxu0 0.0
        %2030 = vmatprep.subr.mxu0 0.0
        %2031 = vmatpush2.msra.mxu0 0.0
        %2032 = vmatprep.subr.mxu0 0.0
        %2033 = vmatpush2.msra.mxu0 0.0
        %2034 = vmatprep.subr.mxu0 0.0
        %2035 = vmatpush2.msra.mxu0 0.0
        %2036 = vmatprep.mubr.f32.mxu0 0.0
        %2037 = vmatmul.mubr.f32.gmra.mxu0 %v1967
        %v2038 = vpop.f32.mrf.mxu0
        %v2039 = vadd.f32 0.0, %v2038
        %v2040 = vpop.f32.mrf.mxu0
        %2041 = vdwg.mxu0
        %v2043 = vsel %vm426, %v1959, 0
        %v2046 = vsel %vm430, %v2039, 0
        %2048 = vmatprep.subr.mxu0 0.0
        %2049 = vmatpush1.msra.mxu0 0.0
        %2050 = vmatprep.subr.mxu0 0.0
        %2051 = vmatpush1.msra.mxu0 0.0
        %2052 = vmatprep.subr.mxu0 0.0
        %2053 = vmatpush1.msra.mxu0 0.0
        %2054 = vmatprep.subr.mxu0 0.0
        %2055 = vmatpush1.msra.mxu0 0.0
        %2056 = vmatprep.subr.mxu0 0.0
        %2057 = vmatpush1.msra.mxu0 0.0
        %2058 = vmatprep.subr.mxu0 0.0
        %2059 = vmatpush1.msra.mxu0 0.0
        %2060 = vmatprep.subr.mxu0 0.0
        %2061 = vmatpush1.msra.mxu0 0.0
        %2062 = vmatprep.subr.mxu0 0.0
        %2063 = vmatpush1.msra.mxu0 0.0
        %2064 = vmatprep.subr.mxu0 0.0
        %2065 = vmatpush1.msra.mxu0 0.0
        %2066 = vmatprep.subr.mxu0 0.0
        %2067 = vmatpush1.msra.mxu0 0.0
        %2068 = vmatprep.subr.mxu0 0.0
        %2069 = vmatpush1.msra.mxu0 0.0
        %2070 = vmatprep.subr.mxu0 0.0
        %2071 = vmatpush1.msra.mxu0 0.0
        %2072 = vmatprep.subr.mxu0 0.0
        %2073 = vmatpush1.msra.mxu0 0.0
        %2074 = vmatprep.subr.mxu0 0.0
        %2075 = vmatpush1.msra.mxu0 0.0
        %2076 = vmatprep.subr.mxu0 0.0
        %2077 = vmatpush1.msra.mxu0 0.0
        %2078 = vmatprep.subr.mxu0 0.0
        %2079 = vmatpush1.msra.mxu0 %v2046
        %2080 = vmatprep.subr.mxu0 0.0
        %2081 = vmatpush2.msra.mxu0 0.0
        %2082 = vmatprep.subr.mxu0 0.0
        %2083 = vmatpush2.msra.mxu0 0.0
        %2084 = vmatprep.subr.mxu0 0.0
        %2085 = vmatpush2.msra.mxu0 0.0
        %2086 = vmatprep.subr.mxu0 0.0
        %2087 = vmatpush2.msra.mxu0 0.0
        %2088 = vmatprep.subr.mxu0 0.0
        %2089 = vmatpush2.msra.mxu0 0.0
        %2090 = vmatprep.subr.mxu0 0.0
        %2091 = vmatpush2.msra.mxu0 0.0
        %2092 = vmatprep.subr.mxu0 0.0
        %2093 = vmatpush2.msra.mxu0 0.0
        %2094 = vmatprep.subr.mxu0 0.0
        %2095 = vmatpush2.msra.mxu0 0.0
        %2096 = vmatprep.subr.mxu0 0.0
        %2097 = vmatpush2.msra.mxu0 0.0
        %2098 = vmatprep.subr.mxu0 0.0
        %2099 = vmatpush2.msra.mxu0 0.0
        %2100 = vmatprep.subr.mxu0 0.0
        %2101 = vmatpush2.msra.mxu0 0.0
        %2102 = vmatprep.subr.mxu0 0.0
        %2103 = vmatpush2.msra.mxu0 0.0
        %2104 = vmatprep.subr.mxu0 0.0
        %2105 = vmatpush2.msra.mxu0 0.0
        %2106 = vmatprep.subr.mxu0 0.0
        %2107 = vmatpush2.msra.mxu0 0.0
        %2108 = vmatprep.subr.mxu0 0.0
        %2109 = vmatpush2.msra.mxu0 0.0
        %2110 = vmatprep.subr.mxu0 0.0
        %2111 = vmatpush2.msra.mxu0 0.0
        %2112 = vmatprep.mubr.f32.mxu0 0.0
        %2113 = vmatmul.mubr.f32.gmra.mxu0 %v2043
        %v2114 = vpop.f32.mrf.mxu0
        %v2115 = vadd.f32 0.0, %v2114
        %v2116 = vpop.f32.mrf.mxu0
        %2117 = vdwg.mxu0
        %v2119 = vsel %vm426, %v1963, 0
        %2121 = vmatprep.subr.mxu0 0.0
        %2122 = vmatpush1.msra.mxu0 0.0
        %2123 = vmatprep.subr.mxu0 0.0
        %2124 = vmatpush1.msra.mxu0 0.0
        %2125 = vmatprep.subr.mxu0 0.0
        %2126 = vmatpush1.msra.mxu0 0.0
        %2127 = vmatprep.subr.mxu0 0.0
        %2128 = vmatpush1.msra.mxu0 0.0
        %2129 = vmatprep.subr.mxu0 0.0
        %2130 = vmatpush1.msra.mxu0 0.0
        %2131 = vmatprep.subr.mxu0 0.0
        %2132 = vmatpush1.msra.mxu0 0.0
        %2133 = vmatprep.subr.mxu0 0.0
        %2134 = vmatpush1.msra.mxu0 0.0
        %2135 = vmatprep.subr.mxu0 0.0
        %2136 = vmatpush1.msra.mxu0 0.0
        %2137 = vmatprep.subr.mxu0 0.0
        %2138 = vmatpush1.msra.mxu0 0.0
        %2139 = vmatprep.subr.mxu0 0.0
        %2140 = vmatpush1.msra.mxu0 0.0
        %2141 = vmatprep.subr.mxu0 0.0
        %2142 = vmatpush1.msra.mxu0 0.0
        %2143 = vmatprep.subr.mxu0 0.0
        %2144 = vmatpush1.msra.mxu0 0.0
        %2145 = vmatprep.subr.mxu0 0.0
        %2146 = vmatpush1.msra.mxu0 0.0
        %2147 = vmatprep.subr.mxu0 0.0
        %2148 = vmatpush1.msra.mxu0 0.0
        %2149 = vmatprep.subr.mxu0 0.0
        %2150 = vmatpush1.msra.mxu0 0.0
        %2151 = vmatprep.subr.mxu0 0.0
        %2152 = vmatpush1.msra.mxu0 %v2046
        %2153 = vmatprep.subr.mxu0 0.0
        %2154 = vmatpush2.msra.mxu0 0.0
        %2155 = vmatprep.subr.mxu0 0.0
        %2156 = vmatpush2.msra.mxu0 0.0
        %2157 = vmatprep.subr.mxu0 0.0
        %2158 = vmatpush2.msra.mxu0 0.0
        %2159 = vmatprep.subr.mxu0 0.0
        %2160 = vmatpush2.msra.mxu0 0.0
        %2161 = vmatprep.subr.mxu0 0.0
        %2162 = vmatpush2.msra.mxu0 0.0
        %2163 = vmatprep.subr.mxu0 0.0
        %2164 = vmatpush2.msra.mxu0 0.0
        %2165 = vmatprep.subr.mxu0 0.0
        %2166 = vmatpush2.msra.mxu0 0.0
        %2167 = vmatprep.subr.mxu0 0.0
        %2168 = vmatpush2.msra.mxu0 0.0
        %2169 = vmatprep.subr.mxu0 0.0
        %2170 = vmatpush2.msra.mxu0 0.0
        %2171 = vmatprep.subr.mxu0 0.0
        %2172 = vmatpush2.msra.mxu0 0.0
        %2173 = vmatprep.subr.mxu0 0.0
        %2174 = vmatpush2.msra.mxu0 0.0
        %2175 = vmatprep.subr.mxu0 0.0
        %2176 = vmatpush2.msra.mxu0 0.0
        %2177 = vmatprep.subr.mxu0 0.0
        %2178 = vmatpush2.msra.mxu0 0.0
        %2179 = vmatprep.subr.mxu0 0.0
        %2180 = vmatpush2.msra.mxu0 0.0
        %2181 = vmatprep.subr.mxu0 0.0
        %2182 = vmatpush2.msra.mxu0 0.0
        %2183 = vmatprep.subr.mxu0 0.0
        %2184 = vmatpush2.msra.mxu0 0.0
        %2185 = vmatprep.mubr.f32.mxu0 0.0
        %2186 = vmatmul.mubr.f32.gmra.mxu0 %v2119
        %v2187 = vpop.f32.mrf.mxu0
        %v2188 = vadd.f32 0.0, %v2187
        %v2189 = vpop.f32.mrf.mxu0
        %2190 = vdwg.mxu0
        %2191 = vxpose.xlu0.b32.start [1/16] %v2115, 128
        %2192 = vxpose.xlu0.b32.cont [2/16] 0.0, 128
        %2193 = vxpose.xlu0.b32.cont [3/16] 0.0, 128
        %2194 = vxpose.xlu0.b32.cont [4/16] 0.0, 128
        %2195 = vxpose.xlu0.b32.cont [5/16] 0.0, 128
        %2196 = vxpose.xlu0.b32.cont [6/16] 0.0, 128
        %2197 = vxpose.xlu0.b32.cont [7/16] 0.0, 128
        %2198 = vxpose.xlu0.b32.cont [8/16] 0.0, 128
        %2199 = vxpose.xlu0.b32.cont [9/16] 0.0, 128
        %2200 = vxpose.xlu0.b32.cont [10/16] 0.0, 128
        %2201 = vxpose.xlu0.b32.cont [11/16] 0.0, 128
        %2202 = vxpose.xlu0.b32.cont [12/16] 0.0, 128
        %2203 = vxpose.xlu0.b32.cont [13/16] 0.0, 128
        %2204 = vxpose.xlu0.b32.cont [14/16] 0.0, 128
        %2205 = vxpose.xlu0.b32.cont [15/16] 0.0, 128
        %2206 = vxpose.xlu0.b32.end [16/16] 0.0, 128
        %v2207 = vpop.trf.xlu0
        %v2208 = vpop.trf.xlu0
        %v2209 = vpop.trf.xlu0
        %v2210 = vpop.trf.xlu0
        %v2211 = vpop.trf.xlu0
        %v2212 = vpop.trf.xlu0
        %v2213 = vpop.trf.xlu0
        %v2214 = vpop.trf.xlu0
        %v2215 = vpop.trf.xlu0
        %v2216 = vpop.trf.xlu0
        %v2217 = vpop.trf.xlu0
        %v2218 = vpop.trf.xlu0
        %v2219 = vpop.trf.xlu0
        %v2220 = vpop.trf.xlu0
        %v2221 = vpop.trf.xlu0
        %v2222 = vpop.trf.xlu0
        %2224 = vset.pattern.permute.xlu0 0
        %2225 = vperm.xlu0 %2224, %v2207
        %v2226 = vpop.permute.xlu0 %2225
        %2229 = vset.pattern.permute.xlu0 0
        %2230 = vperm.xlu0 %2229, %v2208
        %v2231 = vpop.permute.xlu0 %2230
        %2234 = vset.pattern.permute.xlu0 0
        %2235 = vperm.xlu0 %2234, %v2209
        %v2236 = vpop.permute.xlu0 %2235
        %2239 = vset.pattern.permute.xlu0 0
        %2240 = vperm.xlu0 %2239, %v2210
        %v2241 = vpop.permute.xlu0 %2240
        %v2243 = vlaneseq
        %v2244 = vshrl.u32 %v2243, 7
        %v2245 = vsub.s32 0, %v2244
        %v2246 = vrot.slane %v2188, %v2245
        %v2247 = vadd.f32 %v2226, %v2246
        %v2248 = vadd.f32 %v2231, %v2246
        %v2249 = vadd.f32 %v2236, %v2246
        %v2250 = vadd.f32 %v2241, %v2246
        %vm2251 = vcmp.gt.f32.partialorder %v2247, 0.0
        %vm2252 = vcmp.gt.f32.partialorder %v2248, 0.0
        %vm2253 = vcmp.gt.f32.partialorder %v2249, 0.0
        %vm2254 = vcmp.gt.f32.partialorder %v2250, 0.0
        %v2255 = vmul.f32 %v2247, 0.2
        %v2256 = vmul.f32 %v2248, 0.2
        %v2257 = vmul.f32 %v2249, 0.2
        %v2258 = vmul.f32 %v2250, 0.2
        %v2259 = vsel %vm2251, %v2247, %v2255
        %v2260 = vsel %vm2252, %v2248, %v2256
        %v2261 = vsel %vm2253, %v2249, %v2257
        %v2262 = vsel %vm2254, %v2250, %v2258
        %v2263 = vsel %vm725, %v2259, -inf
        %2264 = vmax.xlane.f32.xlu0 %v2263
        %v2265 = vpop.xlane.xlu0 %2264
        %v2266 = vsel %vm725, %v2260, -inf
        %2267 = vmax.xlane.f32.xlu0 %v2266
        %v2268 = vpop.xlane.xlu0 %2267
        %v2269 = vsel %vm725, %v2261, -inf
        %2270 = vmax.xlane.f32.xlu0 %v2269
        %v2271 = vpop.xlane.xlu0 %2270
        %v2272 = vsel %vm725, %v2262, -inf
        %2273 = vmax.xlane.f32.xlu0 %v2272
        %v2274 = vpop.xlane.xlu0 %2273
        %v2275 = vsub.f32 %v2259, %v2265
        %v2276 = vsub.f32 %v2260, %v2268
        %v2277 = vsub.f32 %v2261, %v2271
        %v2278 = vsub.f32 %v2262, %v2274
        %v2279 = vmul.f32 %v2275, 1.442695
        %v2280 = vpow.pop %v2279
        %v2281 = vmul.f32 %v2276, 1.442695
        %v2282 = vpow.pop %v2281
        %v2283 = vmul.f32 %v2277, 1.442695
        %v2284 = vpow.pop %v2283
        %v2285 = vmul.f32 %v2278, 1.442695
        %v2286 = vpow.pop %v2285
        %v2287 = vsel %vm725, %v2280, 0.0
        %2288 = vadd.xlane.f32.xlu0 %v2287
        %v2289 = vpop.xlane.xlu0 %2288
        %v2290 = vsel %vm725, %v2282, 0.0
        %2291 = vadd.xlane.f32.xlu0 %v2290
        %v2292 = vpop.xlane.xlu0 %2291
        %v2293 = vsel %vm725, %v2284, 0.0
        %2294 = vadd.xlane.f32.xlu0 %v2293
        %v2295 = vpop.xlane.xlu0 %2294
        %v2296 = vsel %vm725, %v2286, 0.0
        %2297 = vadd.xlane.f32.xlu0 %v2296
        %v2298 = vpop.xlane.xlu0 %2297
        %v2299 = vrcp.pop %v2289
        %v2300 = vrcp.pop %v2292
        %v2301 = vrcp.pop %v2295
        %v2302 = vrcp.pop %v2298
        %v2303 = vmul.f32 %v2280, %v2299
        %v2304 = vmul.f32 %v2282, %v2300
        %v2305 = vmul.f32 %v2284, %v2301
        %v2306 = vmul.f32 %v2286, %v2302
        %v2307 = vsel %vm725, %v2039, 0
        %v2310 = vsel %vm725, %v2303, 0
        %v2313 = vsel %vm725, %v2304, 0
        %v2316 = vsel %vm725, %v2305, 0
        %v2319 = vsel %vm725, %v2306, 0
        %2321 = vmatprep.subr.mxu0 0.0
        %2322 = vmatpush1.xpose.msra.mxu0 0.0
        %2323 = vmatprep.subr.mxu0 0.0
        %2324 = vmatpush1.xpose.msra.mxu0 0.0
        %2325 = vmatprep.subr.mxu0 0.0
        %2326 = vmatpush1.xpose.msra.mxu0 0.0
        %2327 = vmatprep.subr.mxu0 0.0
        %2328 = vmatpush1.xpose.msra.mxu0 0.0
        %2329 = vmatprep.subr.mxu0 0.0
        %2330 = vmatpush1.xpose.msra.mxu0 0.0
        %2331 = vmatprep.subr.mxu0 0.0
        %2332 = vmatpush1.xpose.msra.mxu0 0.0
        %2333 = vmatprep.subr.mxu0 0.0
        %2334 = vmatpush1.xpose.msra.mxu0 0.0
        %2335 = vmatprep.subr.mxu0 0.0
        %2336 = vmatpush1.xpose.msra.mxu0 0.0
        %2337 = vmatprep.subr.mxu0 0.0
        %2338 = vmatpush1.xpose.msra.mxu0 0.0
        %2339 = vmatprep.subr.mxu0 0.0
        %2340 = vmatpush1.xpose.msra.mxu0 0.0
        %2341 = vmatprep.subr.mxu0 0.0
        %2342 = vmatpush1.xpose.msra.mxu0 0.0
        %2343 = vmatprep.subr.mxu0 0.0
        %2344 = vmatpush1.xpose.msra.mxu0 0.0
        %2345 = vmatprep.subr.mxu0 0.0
        %2346 = vmatpush1.xpose.msra.mxu0 %v2319
        %2347 = vmatprep.subr.mxu0 0.0
        %2348 = vmatpush1.xpose.msra.mxu0 %v2316
        %2349 = vmatprep.subr.mxu0 0.0
        %2350 = vmatpush1.xpose.msra.mxu0 %v2313
        %2351 = vmatprep.subr.mxu0 0.0
        %2352 = vmatpush1.xpose.msra.mxu0 %v2310
        %2353 = vmatprep.subr.mxu0 0.0
        %2354 = vmatpush2.xpose.msra.mxu0 0.0
        %2355 = vmatprep.subr.mxu0 0.0
        %2356 = vmatpush2.xpose.msra.mxu0 0.0
        %2357 = vmatprep.subr.mxu0 0.0
        %2358 = vmatpush2.xpose.msra.mxu0 0.0
        %2359 = vmatprep.subr.mxu0 0.0
        %2360 = vmatpush2.xpose.msra.mxu0 0.0
        %2361 = vmatprep.subr.mxu0 0.0
        %2362 = vmatpush2.xpose.msra.mxu0 0.0
        %2363 = vmatprep.subr.mxu0 0.0
        %2364 = vmatpush2.xpose.msra.mxu0 0.0
        %2365 = vmatprep.subr.mxu0 0.0
        %2366 = vmatpush2.xpose.msra.mxu0 0.0
        %2367 = vmatprep.subr.mxu0 0.0
        %2368 = vmatpush2.xpose.msra.mxu0 0.0
        %2369 = vmatprep.subr.mxu0 0.0
        %2370 = vmatpush2.xpose.msra.mxu0 0.0
        %2371 = vmatprep.subr.mxu0 0.0
        %2372 = vmatpush2.xpose.msra.mxu0 0.0
        %2373 = vmatprep.subr.mxu0 0.0
        %2374 = vmatpush2.xpose.msra.mxu0 0.0
        %2375 = vmatprep.subr.mxu0 0.0
        %2376 = vmatpush2.xpose.msra.mxu0 0.0
        %2377 = vmatprep.subr.mxu0 0.0
        %2378 = vmatpush2.xpose.msra.mxu0 0.0
        %2379 = vmatprep.subr.mxu0 0.0
        %2380 = vmatpush2.xpose.msra.mxu0 0.0
        %2381 = vmatprep.subr.mxu0 0.0
        %2382 = vmatpush2.xpose.msra.mxu0 0.0
        %2383 = vmatprep.subr.mxu0 0.0
        %2384 = vmatpush2.xpose.msra.mxu0 0.0
        %2385 = vmatprep.mubr.f32.mxu0 0.0
        %2386 = vmatmul.mubr.f32.gmra.mxu0 %v2307
        %v2387 = vpop.f32.mrf.mxu0
        %v2388 = vadd.f32 0.0, %v2387
        %v2389 = vpop.f32.mrf.mxu0
        %2390 = vdwg.mxu0
        %vm2391 = vcmp.gt.f32.partialorder %v2388, 0.0
        %v2392 = vmul.f32 %v2388, 1.442695
        %v2393 = vpow.pop %v2392
        %v2394 = vsub.f32 %v2393, 1.0
        %v2395 = vsel %vm2391, %v2388, %v2394
        %2396 = vrot.lane.b32.xlu0 %v1951, 96
        %v2397 = vpop.permute.xlu0 %2396
        %v2399 = vsel %vm426, %v1956, 0
        %v2401 = vsel %vm430, %v2397, 0
        %2403 = vmatprep.subr.mxu0 0.0
        %2404 = vmatpush1.msra.mxu0 0.0
        %2405 = vmatprep.subr.mxu0 0.0
        %2406 = vmatpush1.msra.mxu0 0.0
        %2407 = vmatprep.subr.mxu0 0.0
        %2408 = vmatpush1.msra.mxu0 0.0
        %2409 = vmatprep.subr.mxu0 0.0
        %2410 = vmatpush1.msra.mxu0 0.0
        %2411 = vmatprep.subr.mxu0 0.0
        %2412 = vmatpush1.msra.mxu0 0.0
        %2413 = vmatprep.subr.mxu0 0.0
        %2414 = vmatpush1.msra.mxu0 0.0
        %2415 = vmatprep.subr.mxu0 0.0
        %2416 = vmatpush1.msra.mxu0 0.0
        %2417 = vmatprep.subr.mxu0 0.0
        %2418 = vmatpush1.msra.mxu0 0.0
        %2419 = vmatprep.subr.mxu0 0.0
        %2420 = vmatpush1.msra.mxu0 0.0
        %2421 = vmatprep.subr.mxu0 0.0
        %2422 = vmatpush1.msra.mxu0 0.0
        %2423 = vmatprep.subr.mxu0 0.0
        %2424 = vmatpush1.msra.mxu0 0.0
        %2425 = vmatprep.subr.mxu0 0.0
        %2426 = vmatpush1.msra.mxu0 0.0
        %2427 = vmatprep.subr.mxu0 0.0
        %2428 = vmatpush1.msra.mxu0 0.0
        %2429 = vmatprep.subr.mxu0 0.0
        %2430 = vmatpush1.msra.mxu0 0.0
        %2431 = vmatprep.subr.mxu0 0.0
        %2432 = vmatpush1.msra.mxu0 0.0
        %2433 = vmatprep.subr.mxu0 0.0
        %2434 = vmatpush1.msra.mxu0 %v2401
        %2435 = vmatprep.subr.mxu0 0.0
        %2436 = vmatpush2.msra.mxu0 0.0
        %2437 = vmatprep.subr.mxu0 0.0
        %2438 = vmatpush2.msra.mxu0 0.0
        %2439 = vmatprep.subr.mxu0 0.0
        %2440 = vmatpush2.msra.mxu0 0.0
        %2441 = vmatprep.subr.mxu0 0.0
        %2442 = vmatpush2.msra.mxu0 0.0
        %2443 = vmatprep.subr.mxu0 0.0
        %2444 = vmatpush2.msra.mxu0 0.0
        %2445 = vmatprep.subr.mxu0 0.0
        %2446 = vmatpush2.msra.mxu0 0.0
        %2447 = vmatprep.subr.mxu0 0.0
        %2448 = vmatpush2.msra.mxu0 0.0
        %2449 = vmatprep.subr.mxu0 0.0
        %2450 = vmatpush2.msra.mxu0 0.0
        %2451 = vmatprep.subr.mxu0 0.0
        %2452 = vmatpush2.msra.mxu0 0.0
        %2453 = vmatprep.subr.mxu0 0.0
        %2454 = vmatpush2.msra.mxu0 0.0
        %2455 = vmatprep.subr.mxu0 0.0
        %2456 = vmatpush2.msra.mxu0 0.0
        %2457 = vmatprep.subr.mxu0 0.0
        %2458 = vmatpush2.msra.mxu0 0.0
        %2459 = vmatprep.subr.mxu0 0.0
        %2460 = vmatpush2.msra.mxu0 0.0
        %2461 = vmatprep.subr.mxu0 0.0
        %2462 = vmatpush2.msra.mxu0 0.0
        %2463 = vmatprep.subr.mxu0 0.0
        %2464 = vmatpush2.msra.mxu0 0.0
        %2465 = vmatprep.subr.mxu0 0.0
        %2466 = vmatpush2.msra.mxu0 0.0
        %2467 = vmatprep.mubr.f32.mxu0 0.0
        %2468 = vmatmul.mubr.f32.gmra.mxu0 %v2399
        %v2469 = vpop.f32.mrf.mxu0
        %v2470 = vadd.f32 0.0, %v2469
        %v2471 = vpop.f32.mrf.mxu0
        %2472 = vdwg.mxu0
        %v2474 = vsel %vm426, %v1960, 0
        %v2477 = vsel %vm430, %v2470, 0
        %2479 = vmatprep.subr.mxu0 0.0
        %2480 = vmatpush1.msra.mxu0 0.0
        %2481 = vmatprep.subr.mxu0 0.0
        %2482 = vmatpush1.msra.mxu0 0.0
        %2483 = vmatprep.subr.mxu0 0.0
        %2484 = vmatpush1.msra.mxu0 0.0
        %2485 = vmatprep.subr.mxu0 0.0
        %2486 = vmatpush1.msra.mxu0 0.0
        %2487 = vmatprep.subr.mxu0 0.0
        %2488 = vmatpush1.msra.mxu0 0.0
        %2489 = vmatprep.subr.mxu0 0.0
        %2490 = vmatpush1.msra.mxu0 0.0
        %2491 = vmatprep.subr.mxu0 0.0
        %2492 = vmatpush1.msra.mxu0 0.0
        %2493 = vmatprep.subr.mxu0 0.0
        %2494 = vmatpush1.msra.mxu0 0.0
        %2495 = vmatprep.subr.mxu0 0.0
        %2496 = vmatpush1.msra.mxu0 0.0
        %2497 = vmatprep.subr.mxu0 0.0
        %2498 = vmatpush1.msra.mxu0 0.0
        %2499 = vmatprep.subr.mxu0 0.0
        %2500 = vmatpush1.msra.mxu0 0.0
        %2501 = vmatprep.subr.mxu0 0.0
        %2502 = vmatpush1.msra.mxu0 0.0
        %2503 = vmatprep.subr.mxu0 0.0
        %2504 = vmatpush1.msra.mxu0 0.0
        %2505 = vmatprep.subr.mxu0 0.0
        %2506 = vmatpush1.msra.mxu0 0.0
        %2507 = vmatprep.subr.mxu0 0.0
        %2508 = vmatpush1.msra.mxu0 0.0
        %2509 = vmatprep.subr.mxu0 0.0
        %2510 = vmatpush1.msra.mxu0 %v2477
        %2511 = vmatprep.subr.mxu0 0.0
        %2512 = vmatpush2.msra.mxu0 0.0
        %2513 = vmatprep.subr.mxu0 0.0
        %2514 = vmatpush2.msra.mxu0 0.0
        %2515 = vmatprep.subr.mxu0 0.0
        %2516 = vmatpush2.msra.mxu0 0.0
        %2517 = vmatprep.subr.mxu0 0.0
        %2518 = vmatpush2.msra.mxu0 0.0
        %2519 = vmatprep.subr.mxu0 0.0
        %2520 = vmatpush2.msra.mxu0 0.0
        %2521 = vmatprep.subr.mxu0 0.0
        %2522 = vmatpush2.msra.mxu0 0.0
        %2523 = vmatprep.subr.mxu0 0.0
        %2524 = vmatpush2.msra.mxu0 0.0
        %2525 = vmatprep.subr.mxu0 0.0
        %2526 = vmatpush2.msra.mxu0 0.0
        %2527 = vmatprep.subr.mxu0 0.0
        %2528 = vmatpush2.msra.mxu0 0.0
        %2529 = vmatprep.subr.mxu0 0.0
        %2530 = vmatpush2.msra.mxu0 0.0
        %2531 = vmatprep.subr.mxu0 0.0
        %2532 = vmatpush2.msra.mxu0 0.0
        %2533 = vmatprep.subr.mxu0 0.0
        %2534 = vmatpush2.msra.mxu0 0.0
        %2535 = vmatprep.subr.mxu0 0.0
        %2536 = vmatpush2.msra.mxu0 0.0
        %2537 = vmatprep.subr.mxu0 0.0
        %2538 = vmatpush2.msra.mxu0 0.0
        %2539 = vmatprep.subr.mxu0 0.0
        %2540 = vmatpush2.msra.mxu0 0.0
        %2541 = vmatprep.subr.mxu0 0.0
        %2542 = vmatpush2.msra.mxu0 0.0
        %2543 = vmatprep.mubr.f32.mxu0 0.0
        %2544 = vmatmul.mubr.f32.gmra.mxu0 %v2474
        %v2545 = vpop.f32.mrf.mxu0
        %v2546 = vadd.f32 0.0, %v2545
        %v2547 = vpop.f32.mrf.mxu0
        %2548 = vdwg.mxu0
        %v2550 = vsel %vm426, %v1964, 0
        %2552 = vmatprep.subr.mxu0 0.0
        %2553 = vmatpush1.msra.mxu0 0.0
        %2554 = vmatprep.subr.mxu0 0.0
        %2555 = vmatpush1.msra.mxu0 0.0
        %2556 = vmatprep.subr.mxu0 0.0
        %2557 = vmatpush1.msra.mxu0 0.0
        %2558 = vmatprep.subr.mxu0 0.0
        %2559 = vmatpush1.msra.mxu0 0.0
        %2560 = vmatprep.subr.mxu0 0.0
        %2561 = vmatpush1.msra.mxu0 0.0
        %2562 = vmatprep.subr.mxu0 0.0
        %2563 = vmatpush1.msra.mxu0 0.0
        %2564 = vmatprep.subr.mxu0 0.0
        %2565 = vmatpush1.msra.mxu0 0.0
        %2566 = vmatprep.subr.mxu0 0.0
        %2567 = vmatpush1.msra.mxu0 0.0
        %2568 = vmatprep.subr.mxu0 0.0
        %2569 = vmatpush1.msra.mxu0 0.0
        %2570 = vmatprep.subr.mxu0 0.0
        %2571 = vmatpush1.msra.mxu0 0.0
        %2572 = vmatprep.subr.mxu0 0.0
        %2573 = vmatpush1.msra.mxu0 0.0
        %2574 = vmatprep.subr.mxu0 0.0
        %2575 = vmatpush1.msra.mxu0 0.0
        %2576 = vmatprep.subr.mxu0 0.0
        %2577 = vmatpush1.msra.mxu0 0.0
        %2578 = vmatprep.subr.mxu0 0.0
        %2579 = vmatpush1.msra.mxu0 0.0
        %2580 = vmatprep.subr.mxu0 0.0
        %2581 = vmatpush1.msra.mxu0 0.0
        %2582 = vmatprep.subr.mxu0 0.0
        %2583 = vmatpush1.msra.mxu0 %v2477
        %2584 = vmatprep.subr.mxu0 0.0
        %2585 = vmatpush2.msra.mxu0 0.0
        %2586 = vmatprep.subr.mxu0 0.0
        %2587 = vmatpush2.msra.mxu0 0.0
        %2588 = vmatprep.subr.mxu0 0.0
        %2589 = vmatpush2.msra.mxu0 0.0
        %2590 = vmatprep.subr.mxu0 0.0
        %2591 = vmatpush2.msra.mxu0 0.0
        %2592 = vmatprep.subr.mxu0 0.0
        %2593 = vmatpush2.msra.mxu0 0.0
        %2594 = vmatprep.subr.mxu0 0.0
        %2595 = vmatpush2.msra.mxu0 0.0
        %2596 = vmatprep.subr.mxu0 0.0
        %2597 = vmatpush2.msra.mxu0 0.0
        %2598 = vmatprep.subr.mxu0 0.0
        %2599 = vmatpush2.msra.mxu0 0.0
        %2600 = vmatprep.subr.mxu0 0.0
        %2601 = vmatpush2.msra.mxu0 0.0
        %2602 = vmatprep.subr.mxu0 0.0
        %2603 = vmatpush2.msra.mxu0 0.0
        %2604 = vmatprep.subr.mxu0 0.0
        %2605 = vmatpush2.msra.mxu0 0.0
        %2606 = vmatprep.subr.mxu0 0.0
        %2607 = vmatpush2.msra.mxu0 0.0
        %2608 = vmatprep.subr.mxu0 0.0
        %2609 = vmatpush2.msra.mxu0 0.0
        %2610 = vmatprep.subr.mxu0 0.0
        %2611 = vmatpush2.msra.mxu0 0.0
        %2612 = vmatprep.subr.mxu0 0.0
        %2613 = vmatpush2.msra.mxu0 0.0
        %2614 = vmatprep.subr.mxu0 0.0
        %2615 = vmatpush2.msra.mxu0 0.0
        %2616 = vmatprep.mubr.f32.mxu0 0.0
        %2617 = vmatmul.mubr.f32.gmra.mxu0 %v2550
        %v2618 = vpop.f32.mrf.mxu0
        %v2619 = vadd.f32 0.0, %v2618
        %v2620 = vpop.f32.mrf.mxu0
        %2621 = vdwg.mxu0
        %2622 = vxpose.xlu0.b32.start [1/16] %v2546, 128
        %2623 = vxpose.xlu0.b32.cont [2/16] 0.0, 128
        %2624 = vxpose.xlu0.b32.cont [3/16] 0.0, 128
        %2625 = vxpose.xlu0.b32.cont [4/16] 0.0, 128
        %2626 = vxpose.xlu0.b32.cont [5/16] 0.0, 128
        %2627 = vxpose.xlu0.b32.cont [6/16] 0.0, 128
        %2628 = vxpose.xlu0.b32.cont [7/16] 0.0, 128
        %2629 = vxpose.xlu0.b32.cont [8/16] 0.0, 128
        %2630 = vxpose.xlu0.b32.cont [9/16] 0.0, 128
        %2631 = vxpose.xlu0.b32.cont [10/16] 0.0, 128
        %2632 = vxpose.xlu0.b32.cont [11/16] 0.0, 128
        %2633 = vxpose.xlu0.b32.cont [12/16] 0.0, 128
        %2634 = vxpose.xlu0.b32.cont [13/16] 0.0, 128
        %2635 = vxpose.xlu0.b32.cont [14/16] 0.0, 128
        %2636 = vxpose.xlu0.b32.cont [15/16] 0.0, 128
        %2637 = vxpose.xlu0.b32.end [16/16] 0.0, 128
        %v2638 = vpop.trf.xlu0
        %v2639 = vpop.trf.xlu0
        %v2640 = vpop.trf.xlu0
        %v2641 = vpop.trf.xlu0
        %v2642 = vpop.trf.xlu0
        %v2643 = vpop.trf.xlu0
        %v2644 = vpop.trf.xlu0
        %v2645 = vpop.trf.xlu0
        %v2646 = vpop.trf.xlu0
        %v2647 = vpop.trf.xlu0
        %v2648 = vpop.trf.xlu0
        %v2649 = vpop.trf.xlu0
        %v2650 = vpop.trf.xlu0
        %v2651 = vpop.trf.xlu0
        %v2652 = vpop.trf.xlu0
        %v2653 = vpop.trf.xlu0
        %2655 = vset.pattern.permute.xlu0 0
        %2656 = vperm.xlu0 %2655, %v2638
        %v2657 = vpop.permute.xlu0 %2656
        %2660 = vset.pattern.permute.xlu0 0
        %2661 = vperm.xlu0 %2660, %v2639
        %v2662 = vpop.permute.xlu0 %2661
        %2665 = vset.pattern.permute.xlu0 0
        %2666 = vperm.xlu0 %2665, %v2640
        %v2667 = vpop.permute.xlu0 %2666
        %2670 = vset.pattern.permute.xlu0 0
        %2671 = vperm.xlu0 %2670, %v2641
        %v2672 = vpop.permute.xlu0 %2671
        %v2674 = vlaneseq
        %v2675 = vshrl.u32 %v2674, 7
        %v2676 = vsub.s32 0, %v2675
        %v2677 = vrot.slane %v2619, %v2676
        %v2678 = vadd.f32 %v2657, %v2677
        %v2679 = vadd.f32 %v2662, %v2677
        %v2680 = vadd.f32 %v2667, %v2677
        %v2681 = vadd.f32 %v2672, %v2677
        %vm2682 = vcmp.gt.f32.partialorder %v2678, 0.0
        %vm2683 = vcmp.gt.f32.partialorder %v2679, 0.0
        %vm2684 = vcmp.gt.f32.partialorder %v2680, 0.0
        %vm2685 = vcmp.gt.f32.partialorder %v2681, 0.0
        %v2686 = vmul.f32 %v2678, 0.2
        %v2687 = vmul.f32 %v2679, 0.2
        %v2688 = vmul.f32 %v2680, 0.2
        %v2689 = vmul.f32 %v2681, 0.2
        %v2690 = vsel %vm2682, %v2678, %v2686
        %v2691 = vsel %vm2683, %v2679, %v2687
        %v2692 = vsel %vm2684, %v2680, %v2688
        %v2693 = vsel %vm2685, %v2681, %v2689
        %v2694 = vsel %vm725, %v2690, -inf
        %2695 = vmax.xlane.f32.xlu0 %v2694
        %v2696 = vpop.xlane.xlu0 %2695
        %v2697 = vsel %vm725, %v2691, -inf
        %2698 = vmax.xlane.f32.xlu0 %v2697
        %v2699 = vpop.xlane.xlu0 %2698
        %v2700 = vsel %vm725, %v2692, -inf
        %2701 = vmax.xlane.f32.xlu0 %v2700
        %v2702 = vpop.xlane.xlu0 %2701
        %v2703 = vsel %vm725, %v2693, -inf
        %2704 = vmax.xlane.f32.xlu0 %v2703
        %v2705 = vpop.xlane.xlu0 %2704
        %v2706 = vsub.f32 %v2690, %v2696
        %v2707 = vsub.f32 %v2691, %v2699
        %v2708 = vsub.f32 %v2692, %v2702
        %v2709 = vsub.f32 %v2693, %v2705
        %v2710 = vmul.f32 %v2706, 1.442695
        %v2711 = vpow.pop %v2710
        %v2712 = vmul.f32 %v2707, 1.442695
        %v2713 = vpow.pop %v2712
        %v2714 = vmul.f32 %v2708, 1.442695
        %v2715 = vpow.pop %v2714
        %v2716 = vmul.f32 %v2709, 1.442695
        %v2717 = vpow.pop %v2716
        %v2718 = vsel %vm725, %v2711, 0.0
        %2719 = vadd.xlane.f32.xlu0 %v2718
        %v2720 = vpop.xlane.xlu0 %2719
        %v2721 = vsel %vm725, %v2713, 0.0
        %2722 = vadd.xlane.f32.xlu0 %v2721
        %v2723 = vpop.xlane.xlu0 %2722
        %v2724 = vsel %vm725, %v2715, 0.0
        %2725 = vadd.xlane.f32.xlu0 %v2724
        %v2726 = vpop.xlane.xlu0 %2725
        %v2727 = vsel %vm725, %v2717, 0.0
        %2728 = vadd.xlane.f32.xlu0 %v2727
        %v2729 = vpop.xlane.xlu0 %2728
        %v2730 = vrcp.pop %v2720
        %v2731 = vrcp.pop %v2723
        %v2732 = vrcp.pop %v2726
        %v2733 = vrcp.pop %v2729
        %v2734 = vmul.f32 %v2711, %v2730
        %v2735 = vmul.f32 %v2713, %v2731
        %v2736 = vmul.f32 %v2715, %v2732
        %v2737 = vmul.f32 %v2717, %v2733
        %v2738 = vsel %vm725, %v2470, 0
        %v2741 = vsel %vm725, %v2734, 0
        %v2744 = vsel %vm725, %v2735, 0
        %v2747 = vsel %vm725, %v2736, 0
        %v2750 = vsel %vm725, %v2737, 0
        %2752 = vmatprep.subr.mxu0 0.0
        %2753 = vmatpush1.xpose.msra.mxu0 0.0
        %2754 = vmatprep.subr.mxu0 0.0
        %2755 = vmatpush1.xpose.msra.mxu0 0.0
        %2756 = vmatprep.subr.mxu0 0.0
        %2757 = vmatpush1.xpose.msra.mxu0 0.0
        %2758 = vmatprep.subr.mxu0 0.0
        %2759 = vmatpush1.xpose.msra.mxu0 0.0
        %2760 = vmatprep.subr.mxu0 0.0
        %2761 = vmatpush1.xpose.msra.mxu0 0.0
        %2762 = vmatprep.subr.mxu0 0.0
        %2763 = vmatpush1.xpose.msra.mxu0 0.0
        %2764 = vmatprep.subr.mxu0 0.0
        %2765 = vmatpush1.xpose.msra.mxu0 0.0
        %2766 = vmatprep.subr.mxu0 0.0
        %2767 = vmatpush1.xpose.msra.mxu0 0.0
        %2768 = vmatprep.subr.mxu0 0.0
        %2769 = vmatpush1.xpose.msra.mxu0 0.0
        %2770 = vmatprep.subr.mxu0 0.0
        %2771 = vmatpush1.xpose.msra.mxu0 0.0
        %2772 = vmatprep.subr.mxu0 0.0
        %2773 = vmatpush1.xpose.msra.mxu0 0.0
        %2774 = vmatprep.subr.mxu0 0.0
        %2775 = vmatpush1.xpose.msra.mxu0 0.0
        %2776 = vmatprep.subr.mxu0 0.0
        %2777 = vmatpush1.xpose.msra.mxu0 %v2750
        %2778 = vmatprep.subr.mxu0 0.0
        %2779 = vmatpush1.xpose.msra.mxu0 %v2747
        %2780 = vmatprep.subr.mxu0 0.0
        %2781 = vmatpush1.xpose.msra.mxu0 %v2744
        %2782 = vmatprep.subr.mxu0 0.0
        %2783 = vmatpush1.xpose.msra.mxu0 %v2741
        %2784 = vmatprep.subr.mxu0 0.0
        %2785 = vmatpush2.xpose.msra.mxu0 0.0
        %2786 = vmatprep.subr.mxu0 0.0
        %2787 = vmatpush2.xpose.msra.mxu0 0.0
        %2788 = vmatprep.subr.mxu0 0.0
        %2789 = vmatpush2.xpose.msra.mxu0 0.0
        %2790 = vmatprep.subr.mxu0 0.0
        %2791 = vmatpush2.xpose.msra.mxu0 0.0
        %2792 = vmatprep.subr.mxu0 0.0
        %2793 = vmatpush2.xpose.msra.mxu0 0.0
        %2794 = vmatprep.subr.mxu0 0.0
        %2795 = vmatpush2.xpose.msra.mxu0 0.0
        %2796 = vmatprep.subr.mxu0 0.0
        %2797 = vmatpush2.xpose.msra.mxu0 0.0
        %2798 = vmatprep.subr.mxu0 0.0
        %2799 = vmatpush2.xpose.msra.mxu0 0.0
        %2800 = vmatprep.subr.mxu0 0.0
        %2801 = vmatpush2.xpose.msra.mxu0 0.0
        %2802 = vmatprep.subr.mxu0 0.0
        %2803 = vmatpush2.xpose.msra.mxu0 0.0
        %2804 = vmatprep.subr.mxu0 0.0
        %2805 = vmatpush2.xpose.msra.mxu0 0.0
        %2806 = vmatprep.subr.mxu0 0.0
        %2807 = vmatpush2.xpose.msra.mxu0 0.0
        %2808 = vmatprep.subr.mxu0 0.0
        %2809 = vmatpush2.xpose.msra.mxu0 0.0
        %2810 = vmatprep.subr.mxu0 0.0
        %2811 = vmatpush2.xpose.msra.mxu0 0.0
        %2812 = vmatprep.subr.mxu0 0.0
        %2813 = vmatpush2.xpose.msra.mxu0 0.0
        %2814 = vmatprep.subr.mxu0 0.0
        %2815 = vmatpush2.xpose.msra.mxu0 0.0
        %2816 = vmatprep.mubr.f32.mxu0 0.0
        %2817 = vmatmul.mubr.f32.gmra.mxu0 %v2738
        %v2818 = vpop.f32.mrf.mxu0
        %v2819 = vadd.f32 0.0, %v2818
        %v2820 = vpop.f32.mrf.mxu0
        %2821 = vdwg.mxu0
        %vm2822 = vcmp.gt.f32.partialorder %v2819, 0.0
        %v2823 = vmul.f32 %v2819, 1.442695
        %v2824 = vpow.pop %v2823
        %v2825 = vsub.f32 %v2824, 1.0
        %v2826 = vsel %vm2822, %v2819, %v2825
        %2827 = vrot.lane.b32.xlu0 %v1951, 64
        %v2828 = vpop.permute.xlu0 %2827
        %v2830 = vsel %vm426, %v1957, 0
        %v2832 = vsel %vm430, %v2828, 0
        %2834 = vmatprep.subr.mxu0 0.0
        %2835 = vmatpush1.msra.mxu0 0.0
        %2836 = vmatprep.subr.mxu0 0.0
        %2837 = vmatpush1.msra.mxu0 0.0
        %2838 = vmatprep.subr.mxu0 0.0
        %2839 = vmatpush1.msra.mxu0 0.0
        %2840 = vmatprep.subr.mxu0 0.0
        %2841 = vmatpush1.msra.mxu0 0.0
        %2842 = vmatprep.subr.mxu0 0.0
        %2843 = vmatpush1.msra.mxu0 0.0
        %2844 = vmatprep.subr.mxu0 0.0
        %2845 = vmatpush1.msra.mxu0 0.0
        %2846 = vmatprep.subr.mxu0 0.0
        %2847 = vmatpush1.msra.mxu0 0.0
        %2848 = vmatprep.subr.mxu0 0.0
        %2849 = vmatpush1.msra.mxu0 0.0
        %2850 = vmatprep.subr.mxu0 0.0
        %2851 = vmatpush1.msra.mxu0 0.0
        %2852 = vmatprep.subr.mxu0 0.0
        %2853 = vmatpush1.msra.mxu0 0.0
        %2854 = vmatprep.subr.mxu0 0.0
        %2855 = vmatpush1.msra.mxu0 0.0
        %2856 = vmatprep.subr.mxu0 0.0
        %2857 = vmatpush1.msra.mxu0 0.0
        %2858 = vmatprep.subr.mxu0 0.0
        %2859 = vmatpush1.msra.mxu0 0.0
        %2860 = vmatprep.subr.mxu0 0.0
        %2861 = vmatpush1.msra.mxu0 0.0
        %2862 = vmatprep.subr.mxu0 0.0
        %2863 = vmatpush1.msra.mxu0 0.0
        %2864 = vmatprep.subr.mxu0 0.0
        %2865 = vmatpush1.msra.mxu0 %v2832
        %2866 = vmatprep.subr.mxu0 0.0
        %2867 = vmatpush2.msra.mxu0 0.0
        %2868 = vmatprep.subr.mxu0 0.0
        %2869 = vmatpush2.msra.mxu0 0.0
        %2870 = vmatprep.subr.mxu0 0.0
        %2871 = vmatpush2.msra.mxu0 0.0
        %2872 = vmatprep.subr.mxu0 0.0
        %2873 = vmatpush2.msra.mxu0 0.0
        %2874 = vmatprep.subr.mxu0 0.0
        %2875 = vmatpush2.msra.mxu0 0.0
        %2876 = vmatprep.subr.mxu0 0.0
        %2877 = vmatpush2.msra.mxu0 0.0
        %2878 = vmatprep.subr.mxu0 0.0
        %2879 = vmatpush2.msra.mxu0 0.0
        %2880 = vmatprep.subr.mxu0 0.0
        %2881 = vmatpush2.msra.mxu0 0.0
        %2882 = vmatprep.subr.mxu0 0.0
        %2883 = vmatpush2.msra.mxu0 0.0
        %2884 = vmatprep.subr.mxu0 0.0
        %2885 = vmatpush2.msra.mxu0 0.0
        %2886 = vmatprep.subr.mxu0 0.0
        %2887 = vmatpush2.msra.mxu0 0.0
        %2888 = vmatprep.subr.mxu0 0.0
        %2889 = vmatpush2.msra.mxu0 0.0
        %2890 = vmatprep.subr.mxu0 0.0
        %2891 = vmatpush2.msra.mxu0 0.0
        %2892 = vmatprep.subr.mxu0 0.0
        %2893 = vmatpush2.msra.mxu0 0.0
        %2894 = vmatprep.subr.mxu0 0.0
        %2895 = vmatpush2.msra.mxu0 0.0
        %2896 = vmatprep.subr.mxu0 0.0
        %2897 = vmatpush2.msra.mxu0 0.0
        %2898 = vmatprep.mubr.f32.mxu0 0.0
        %2899 = vmatmul.mubr.f32.gmra.mxu0 %v2830
        %v2900 = vpop.f32.mrf.mxu0
        %v2901 = vadd.f32 0.0, %v2900
        %v2902 = vpop.f32.mrf.mxu0
        %2903 = vdwg.mxu0
        %v2905 = vsel %vm426, %v1961, 0
        %v2908 = vsel %vm430, %v2901, 0
        %2910 = vmatprep.subr.mxu0 0.0
        %2911 = vmatpush1.msra.mxu0 0.0
        %2912 = vmatprep.subr.mxu0 0.0
        %2913 = vmatpush1.msra.mxu0 0.0
        %2914 = vmatprep.subr.mxu0 0.0
        %2915 = vmatpush1.msra.mxu0 0.0
        %2916 = vmatprep.subr.mxu0 0.0
        %2917 = vmatpush1.msra.mxu0 0.0
        %2918 = vmatprep.subr.mxu0 0.0
        %2919 = vmatpush1.msra.mxu0 0.0
        %2920 = vmatprep.subr.mxu0 0.0
        %2921 = vmatpush1.msra.mxu0 0.0
        %2922 = vmatprep.subr.mxu0 0.0
        %2923 = vmatpush1.msra.mxu0 0.0
        %2924 = vmatprep.subr.mxu0 0.0
        %2925 = vmatpush1.msra.mxu0 0.0
        %2926 = vmatprep.subr.mxu0 0.0
        %2927 = vmatpush1.msra.mxu0 0.0
        %2928 = vmatprep.subr.mxu0 0.0
        %2929 = vmatpush1.msra.mxu0 0.0
        %2930 = vmatprep.subr.mxu0 0.0
        %2931 = vmatpush1.msra.mxu0 0.0
        %2932 = vmatprep.subr.mxu0 0.0
        %2933 = vmatpush1.msra.mxu0 0.0
        %2934 = vmatprep.subr.mxu0 0.0
        %2935 = vmatpush1.msra.mxu0 0.0
        %2936 = vmatprep.subr.mxu0 0.0
        %2937 = vmatpush1.msra.mxu0 0.0
        %2938 = vmatprep.subr.mxu0 0.0
        %2939 = vmatpush1.msra.mxu0 0.0
        %2940 = vmatprep.subr.mxu0 0.0
        %2941 = vmatpush1.msra.mxu0 %v2908
        %2942 = vmatprep.subr.mxu0 0.0
        %2943 = vmatpush2.msra.mxu0 0.0
        %2944 = vmatprep.subr.mxu0 0.0
        %2945 = vmatpush2.msra.mxu0 0.0
        %2946 = vmatprep.subr.mxu0 0.0
        %2947 = vmatpush2.msra.mxu0 0.0
        %2948 = vmatprep.subr.mxu0 0.0
        %2949 = vmatpush2.msra.mxu0 0.0
        %2950 = vmatprep.subr.mxu0 0.0
        %2951 = vmatpush2.msra.mxu0 0.0
        %2952 = vmatprep.subr.mxu0 0.0
        %2953 = vmatpush2.msra.mxu0 0.0
        %2954 = vmatprep.subr.mxu0 0.0
        %2955 = vmatpush2.msra.mxu0 0.0
        %2956 = vmatprep.subr.mxu0 0.0
        %2957 = vmatpush2.msra.mxu0 0.0
        %2958 = vmatprep.subr.mxu0 0.0
        %2959 = vmatpush2.msra.mxu0 0.0
        %2960 = vmatprep.subr.mxu0 0.0
        %2961 = vmatpush2.msra.mxu0 0.0
        %2962 = vmatprep.subr.mxu0 0.0
        %2963 = vmatpush2.msra.mxu0 0.0
        %2964 = vmatprep.subr.mxu0 0.0
        %2965 = vmatpush2.msra.mxu0 0.0
        %2966 = vmatprep.subr.mxu0 0.0
        %2967 = vmatpush2.msra.mxu0 0.0
        %2968 = vmatprep.subr.mxu0 0.0
        %2969 = vmatpush2.msra.mxu0 0.0
        %2970 = vmatprep.subr.mxu0 0.0
        %2971 = vmatpush2.msra.mxu0 0.0
        %2972 = vmatprep.subr.mxu0 0.0
        %2973 = vmatpush2.msra.mxu0 0.0
        %2974 = vmatprep.mubr.f32.mxu0 0.0
        %2975 = vmatmul.mubr.f32.gmra.mxu0 %v2905
        %v2976 = vpop.f32.mrf.mxu0
        %v2977 = vadd.f32 0.0, %v2976
        %v2978 = vpop.f32.mrf.mxu0
        %2979 = vdwg.mxu0
        %v2981 = vsel %vm426, %v1965, 0
        %2983 = vmatprep.subr.mxu0 0.0
        %2984 = vmatpush1.msra.mxu0 0.0
        %2985 = vmatprep.subr.mxu0 0.0
        %2986 = vmatpush1.msra.mxu0 0.0
        %2987 = vmatprep.subr.mxu0 0.0
        %2988 = vmatpush1.msra.mxu0 0.0
        %2989 = vmatprep.subr.mxu0 0.0
        %2990 = vmatpush1.msra.mxu0 0.0
        %2991 = vmatprep.subr.mxu0 0.0
        %2992 = vmatpush1.msra.mxu0 0.0
        %2993 = vmatprep.subr.mxu0 0.0
        %2994 = vmatpush1.msra.mxu0 0.0
        %2995 = vmatprep.subr.mxu0 0.0
        %2996 = vmatpush1.msra.mxu0 0.0
        %2997 = vmatprep.subr.mxu0 0.0
        %2998 = vmatpush1.msra.mxu0 0.0
        %2999 = vmatprep.subr.mxu0 0.0
        %3000 = vmatpush1.msra.mxu0 0.0
        %3001 = vmatprep.subr.mxu0 0.0
        %3002 = vmatpush1.msra.mxu0 0.0
        %3003 = vmatprep.subr.mxu0 0.0
        %3004 = vmatpush1.msra.mxu0 0.0
        %3005 = vmatprep.subr.mxu0 0.0
        %3006 = vmatpush1.msra.mxu0 0.0
        %3007 = vmatprep.subr.mxu0 0.0
        %3008 = vmatpush1.msra.mxu0 0.0
        %3009 = vmatprep.subr.mxu0 0.0
        %3010 = vmatpush1.msra.mxu0 0.0
        %3011 = vmatprep.subr.mxu0 0.0
        %3012 = vmatpush1.msra.mxu0 0.0
        %3013 = vmatprep.subr.mxu0 0.0
        %3014 = vmatpush1.msra.mxu0 %v2908
        %3015 = vmatprep.subr.mxu0 0.0
        %3016 = vmatpush2.msra.mxu0 0.0
        %3017 = vmatprep.subr.mxu0 0.0
        %3018 = vmatpush2.msra.mxu0 0.0
        %3019 = vmatprep.subr.mxu0 0.0
        %3020 = vmatpush2.msra.mxu0 0.0
        %3021 = vmatprep.subr.mxu0 0.0
        %3022 = vmatpush2.msra.mxu0 0.0
        %3023 = vmatprep.subr.mxu0 0.0
        %3024 = vmatpush2.msra.mxu0 0.0
        %3025 = vmatprep.subr.mxu0 0.0
        %3026 = vmatpush2.msra.mxu0 0.0
        %3027 = vmatprep.subr.mxu0 0.0
        %3028 = vmatpush2.msra.mxu0 0.0
        %3029 = vmatprep.subr.mxu0 0.0
        %3030 = vmatpush2.msra.mxu0 0.0
        %3031 = vmatprep.subr.mxu0 0.0
        %3032 = vmatpush2.msra.mxu0 0.0
        %3033 = vmatprep.subr.mxu0 0.0
        %3034 = vmatpush2.msra.mxu0 0.0
        %3035 = vmatprep.subr.mxu0 0.0
        %3036 = vmatpush2.msra.mxu0 0.0
        %3037 = vmatprep.subr.mxu0 0.0
        %3038 = vmatpush2.msra.mxu0 0.0
        %3039 = vmatprep.subr.mxu0 0.0
        %3040 = vmatpush2.msra.mxu0 0.0
        %3041 = vmatprep.subr.mxu0 0.0
        %3042 = vmatpush2.msra.mxu0 0.0
        %3043 = vmatprep.subr.mxu0 0.0
        %3044 = vmatpush2.msra.mxu0 0.0
        %3045 = vmatprep.subr.mxu0 0.0
        %3046 = vmatpush2.msra.mxu0 0.0
        %3047 = vmatprep.mubr.f32.mxu0 0.0
        %3048 = vmatmul.mubr.f32.gmra.mxu0 %v2981
        %v3049 = vpop.f32.mrf.mxu0
        %v3050 = vadd.f32 0.0, %v3049
        %v3051 = vpop.f32.mrf.mxu0
        %3052 = vdwg.mxu0
        %3053 = vxpose.xlu0.b32.start [1/16] %v2977, 128
        %3054 = vxpose.xlu0.b32.cont [2/16] 0.0, 128
        %3055 = vxpose.xlu0.b32.cont [3/16] 0.0, 128
        %3056 = vxpose.xlu0.b32.cont [4/16] 0.0, 128
        %3057 = vxpose.xlu0.b32.cont [5/16] 0.0, 128
        %3058 = vxpose.xlu0.b32.cont [6/16] 0.0, 128
        %3059 = vxpose.xlu0.b32.cont [7/16] 0.0, 128
        %3060 = vxpose.xlu0.b32.cont [8/16] 0.0, 128
        %3061 = vxpose.xlu0.b32.cont [9/16] 0.0, 128
        %3062 = vxpose.xlu0.b32.cont [10/16] 0.0, 128
        %3063 = vxpose.xlu0.b32.cont [11/16] 0.0, 128
        %3064 = vxpose.xlu0.b32.cont [12/16] 0.0, 128
        %3065 = vxpose.xlu0.b32.cont [13/16] 0.0, 128
        %3066 = vxpose.xlu0.b32.cont [14/16] 0.0, 128
        %3067 = vxpose.xlu0.b32.cont [15/16] 0.0, 128
        %3068 = vxpose.xlu0.b32.end [16/16] 0.0, 128
        %v3069 = vpop.trf.xlu0
        %v3070 = vpop.trf.xlu0
        %v3071 = vpop.trf.xlu0
        %v3072 = vpop.trf.xlu0
        %v3073 = vpop.trf.xlu0
        %v3074 = vpop.trf.xlu0
        %v3075 = vpop.trf.xlu0
        %v3076 = vpop.trf.xlu0
        %v3077 = vpop.trf.xlu0
        %v3078 = vpop.trf.xlu0
        %v3079 = vpop.trf.xlu0
        %v3080 = vpop.trf.xlu0
        %v3081 = vpop.trf.xlu0
        %v3082 = vpop.trf.xlu0
        %v3083 = vpop.trf.xlu0
        %v3084 = vpop.trf.xlu0
        %3086 = vset.pattern.permute.xlu0 0
        %3087 = vperm.xlu0 %3086, %v3069
        %v3088 = vpop.permute.xlu0 %3087
        %3091 = vset.pattern.permute.xlu0 0
        %3092 = vperm.xlu0 %3091, %v3070
        %v3093 = vpop.permute.xlu0 %3092
        %3096 = vset.pattern.permute.xlu0 0
        %3097 = vperm.xlu0 %3096, %v3071
        %v3098 = vpop.permute.xlu0 %3097
        %3101 = vset.pattern.permute.xlu0 0
        %3102 = vperm.xlu0 %3101, %v3072
        %v3103 = vpop.permute.xlu0 %3102
        %v3105 = vlaneseq
        %v3106 = vshrl.u32 %v3105, 7
        %v3107 = vsub.s32 0, %v3106
        %v3108 = vrot.slane %v3050, %v3107
        %v3109 = vadd.f32 %v3088, %v3108
        %v3110 = vadd.f32 %v3093, %v3108
        %v3111 = vadd.f32 %v3098, %v3108
        %v3112 = vadd.f32 %v3103, %v3108
        %vm3113 = vcmp.gt.f32.partialorder %v3109, 0.0
        %vm3114 = vcmp.gt.f32.partialorder %v3110, 0.0
        %vm3115 = vcmp.gt.f32.partialorder %v3111, 0.0
        %vm3116 = vcmp.gt.f32.partialorder %v3112, 0.0
        %v3117 = vmul.f32 %v3109, 0.2
        %v3118 = vmul.f32 %v3110, 0.2
        %v3119 = vmul.f32 %v3111, 0.2
        %v3120 = vmul.f32 %v3112, 0.2
        %v3121 = vsel %vm3113, %v3109, %v3117
        %v3122 = vsel %vm3114, %v3110, %v3118
        %v3123 = vsel %vm3115, %v3111, %v3119
        %v3124 = vsel %vm3116, %v3112, %v3120
        %v3125 = vsel %vm725, %v3121, -inf
        %3126 = vmax.xlane.f32.xlu0 %v3125
        %v3127 = vpop.xlane.xlu0 %3126
        %v3128 = vsel %vm725, %v3122, -inf
        %3129 = vmax.xlane.f32.xlu0 %v3128
        %v3130 = vpop.xlane.xlu0 %3129
        %v3131 = vsel %vm725, %v3123, -inf
        %3132 = vmax.xlane.f32.xlu0 %v3131
        %v3133 = vpop.xlane.xlu0 %3132
        %v3134 = vsel %vm725, %v3124, -inf
        %3135 = vmax.xlane.f32.xlu0 %v3134
        %v3136 = vpop.xlane.xlu0 %3135
        %v3137 = vsub.f32 %v3121, %v3127
        %v3138 = vsub.f32 %v3122, %v3130
        %v3139 = vsub.f32 %v3123, %v3133
        %v3140 = vsub.f32 %v3124, %v3136
        %v3141 = vmul.f32 %v3137, 1.442695
        %v3142 = vpow.pop %v3141
        %v3143 = vmul.f32 %v3138, 1.442695
        %v3144 = vpow.pop %v3143
        %v3145 = vmul.f32 %v3139, 1.442695
        %v3146 = vpow.pop %v3145
        %v3147 = vmul.f32 %v3140, 1.442695
        %v3148 = vpow.pop %v3147
        %v3149 = vsel %vm725, %v3142, 0.0
        %3150 = vadd.xlane.f32.xlu0 %v3149
        %v3151 = vpop.xlane.xlu0 %3150
        %v3152 = vsel %vm725, %v3144, 0.0
        %3153 = vadd.xlane.f32.xlu0 %v3152
        %v3154 = vpop.xlane.xlu0 %3153
        %v3155 = vsel %vm725, %v3146, 0.0
        %3156 = vadd.xlane.f32.xlu0 %v3155
        %v3157 = vpop.xlane.xlu0 %3156
        %v3158 = vsel %vm725, %v3148, 0.0
        %3159 = vadd.xlane.f32.xlu0 %v3158
        %v3160 = vpop.xlane.xlu0 %3159
        %v3161 = vrcp.pop %v3151
        %v3162 = vrcp.pop %v3154
        %v3163 = vrcp.pop %v3157
        %v3164 = vrcp.pop %v3160
        %v3165 = vmul.f32 %v3142, %v3161
        %v3166 = vmul.f32 %v3144, %v3162
        %v3167 = vmul.f32 %v3146, %v3163
        %v3168 = vmul.f32 %v3148, %v3164
        %v3169 = vsel %vm725, %v2901, 0
        %v3172 = vsel %vm725, %v3165, 0
        %v3175 = vsel %vm725, %v3166, 0
        %v3178 = vsel %vm725, %v3167, 0
        %v3181 = vsel %vm725, %v3168, 0
        %3183 = vmatprep.subr.mxu0 0.0
        %3184 = vmatpush1.xpose.msra.mxu0 0.0
        %3185 = vmatprep.subr.mxu0 0.0
        %3186 = vmatpush1.xpose.msra.mxu0 0.0
        %3187 = vmatprep.subr.mxu0 0.0
        %3188 = vmatpush1.xpose.msra.mxu0 0.0
        %3189 = vmatprep.subr.mxu0 0.0
        %3190 = vmatpush1.xpose.msra.mxu0 0.0
        %3191 = vmatprep.subr.mxu0 0.0
        %3192 = vmatpush1.xpose.msra.mxu0 0.0
        %3193 = vmatprep.subr.mxu0 0.0
        %3194 = vmatpush1.xpose.msra.mxu0 0.0
        %3195 = vmatprep.subr.mxu0 0.0
        %3196 = vmatpush1.xpose.msra.mxu0 0.0
        %3197 = vmatprep.subr.mxu0 0.0
        %3198 = vmatpush1.xpose.msra.mxu0 0.0
        %3199 = vmatprep.subr.mxu0 0.0
        %3200 = vmatpush1.xpose.msra.mxu0 0.0
        %3201 = vmatprep.subr.mxu0 0.0
        %3202 = vmatpush1.xpose.msra.mxu0 0.0
        %3203 = vmatprep.subr.mxu0 0.0
        %3204 = vmatpush1.xpose.msra.mxu0 0.0
        %3205 = vmatprep.subr.mxu0 0.0
        %3206 = vmatpush1.xpose.msra.mxu0 0.0
        %3207 = vmatprep.subr.mxu0 0.0
        %3208 = vmatpush1.xpose.msra.mxu0 %v3181
        %3209 = vmatprep.subr.mxu0 0.0
        %3210 = vmatpush1.xpose.msra.mxu0 %v3178
        %3211 = vmatprep.subr.mxu0 0.0
        %3212 = vmatpush1.xpose.msra.mxu0 %v3175
        %3213 = vmatprep.subr.mxu0 0.0
        %3214 = vmatpush1.xpose.msra.mxu0 %v3172
        %3215 = vmatprep.subr.mxu0 0.0
        %3216 = vmatpush2.xpose.msra.mxu0 0.0
        %3217 = vmatprep.subr.mxu0 0.0
        %3218 = vmatpush2.xpose.msra.mxu0 0.0
        %3219 = vmatprep.subr.mxu0 0.0
        %3220 = vmatpush2.xpose.msra.mxu0 0.0
        %3221 = vmatprep.subr.mxu0 0.0
        %3222 = vmatpush2.xpose.msra.mxu0 0.0
        %3223 = vmatprep.subr.mxu0 0.0
        %3224 = vmatpush2.xpose.msra.mxu0 0.0
        %3225 = vmatprep.subr.mxu0 0.0
        %3226 = vmatpush2.xpose.msra.mxu0 0.0
        %3227 = vmatprep.subr.mxu0 0.0
        %3228 = vmatpush2.xpose.msra.mxu0 0.0
        %3229 = vmatprep.subr.mxu0 0.0
        %3230 = vmatpush2.xpose.msra.mxu0 0.0
        %3231 = vmatprep.subr.mxu0 0.0
        %3232 = vmatpush2.xpose.msra.mxu0 0.0
        %3233 = vmatprep.subr.mxu0 0.0
        %3234 = vmatpush2.xpose.msra.mxu0 0.0
        %3235 = vmatprep.subr.mxu0 0.0
        %3236 = vmatpush2.xpose.msra.mxu0 0.0
        %3237 = vmatprep.subr.mxu0 0.0
        %3238 = vmatpush2.xpose.msra.mxu0 0.0
        %3239 = vmatprep.subr.mxu0 0.0
        %3240 = vmatpush2.xpose.msra.mxu0 0.0
        %3241 = vmatprep.subr.mxu0 0.0
        %3242 = vmatpush2.xpose.msra.mxu0 0.0
        %3243 = vmatprep.subr.mxu0 0.0
        %3244 = vmatpush2.xpose.msra.mxu0 0.0
        %3245 = vmatprep.subr.mxu0 0.0
        %3246 = vmatpush2.xpose.msra.mxu0 0.0
        %3247 = vmatprep.mubr.f32.mxu0 0.0
        %3248 = vmatmul.mubr.f32.gmra.mxu0 %v3169
        %v3249 = vpop.f32.mrf.mxu0
        %v3250 = vadd.f32 0.0, %v3249
        %v3251 = vpop.f32.mrf.mxu0
        %3252 = vdwg.mxu0
        %vm3253 = vcmp.gt.f32.partialorder %v3250, 0.0
        %v3254 = vmul.f32 %v3250, 1.442695
        %v3255 = vpow.pop %v3254
        %v3256 = vsub.f32 %v3255, 1.0
        %v3257 = vsel %vm3253, %v3250, %v3256
        %3259 = vrot.lane.b32.xlu0 %v2826, 32
        %v3260 = vpop.permute.xlu0 %3259
        %3263 = vrot.lane.b32.xlu0 %v3257, 64
        %v3264 = vpop.permute.xlu0 %3263
        %v3266 = vsel %vm725, %v2395, %v3260
        %v3267 = vsel %vm1730, %v3266, %v3264
        %s3268 = scalar_lea.vmem %s6, 192
        %v3269 = vld [vmem:[%s3268] sm:$0xff]
        %v3270 = vld [vmem:[%s3268 + $0x8] sm:$0xff]
        %v3271 = vld [vmem:[%s3268 + $0x10] sm:$0xff]
        %v3272 = vld [vmem:[%s3268 + $0x18] sm:$0xff]
        %v3273 = vld [vmem:[%s3268 + $0x20] sm:$0xff]
        %v3274 = vld [vmem:[%s3268 + $0x28] sm:$0xff]
        %v3275 = vld [vmem:[%s3268 + $0x30] sm:$0xff]
        %v3276 = vld [vmem:[%s3268 + $0x38] sm:$0xff]
        %v3277 = vld [vmem:[%s3268 + $0x40] sm:$0xff]
        %v3278 = vld [vmem:[%s3268 + $0x48] sm:$0xff]
        %v3279 = vld [vmem:[%s3268 + $0x50] sm:$0xff]
        %v3280 = vld [vmem:[%s3268 + $0x58] sm:$0xff]
        %v3281 = vld [vmem:[%s3268 + $0x60] sm:$0xff]
        %v3282 = vld [vmem:[%s3268 + $0x68] sm:$0xff]
        %v3283 = vld [vmem:[%s3268 + $0x70] sm:$0xff]
        %v3284 = vld [vmem:[%s3268 + $0x78] sm:$0xff]
        %v3285 = vld [vmem:[%s3268 + $0x80] sm:$0xff]
        %v3286 = vld [vmem:[%s3268 + $0x88] sm:$0xff]
        %v3287 = vld [vmem:[%s3268 + $0x90] sm:$0xff]
        %v3288 = vld [vmem:[%s3268 + $0x98] sm:$0xff]
        %v3289 = vld [vmem:[%s3268 + $0xa0] sm:$0xff]
        %v3290 = vld [vmem:[%s3268 + $0xa8] sm:$0xff]
        %v3291 = vld [vmem:[%s3268 + $0xb0] sm:$0xff]
        %v3292 = vld [vmem:[%s3268 + $0xb8] sm:$0xff]
        %s3293 = scalar_lea.vmem %s7, 2
        %v3294 = vld [vmem:[%s3293] sm:$0x3]
        %v3296 = vlaneseq
        %v3297 = vshrl.u32 %v3296, 7
        %v3298 = vsub.s32 0, %v3297
        %v3299 = vrot.slane %v3294, %v3298
        %v3300 = vlaneseq
        %v3301 = vshrl.u32 %v3300, 7
        %v3302 = vsub.s32 1, %v3301
        %v3303 = vrot.slane %v3294, %v3302
        %v3307 = vsel %vm1768, %v3267, 0
        %3309 = vmatprep.subr.mxu0 0.0
        %3310 = vmatpush1.msra.mxu0 0.0
        %3311 = vmatprep.subr.mxu0 0.0
        %3312 = vmatpush1.msra.mxu0 0.0
        %3313 = vmatprep.subr.mxu0 0.0
        %3314 = vmatpush1.msra.mxu0 0.0
        %3315 = vmatprep.subr.mxu0 0.0
        %3316 = vmatpush1.msra.mxu0 0.0
        %3317 = vmatprep.subr.mxu0 %v3292
        %3318 = vmatpush1.msra.mxu0 %v3291
        %3319 = vmatprep.subr.mxu0 %v3290
        %3320 = vmatpush1.msra.mxu0 %v3289
        %3321 = vmatprep.subr.mxu0 %v3288
        %3322 = vmatpush1.msra.mxu0 %v3287
        %3323 = vmatprep.subr.mxu0 %v3286
        %3324 = vmatpush1.msra.mxu0 %v3285
        %3325 = vmatprep.subr.mxu0 %v3284
        %3326 = vmatpush1.msra.mxu0 %v3283
        %3327 = vmatprep.subr.mxu0 %v3282
        %3328 = vmatpush1.msra.mxu0 %v3281
        %3329 = vmatprep.subr.mxu0 %v3280
        %3330 = vmatpush1.msra.mxu0 %v3279
        %3331 = vmatprep.subr.mxu0 %v3278
        %3332 = vmatpush1.msra.mxu0 %v3277
        %3333 = vmatprep.subr.mxu0 %v3276
        %3334 = vmatpush1.msra.mxu0 %v3275
        %3335 = vmatprep.subr.mxu0 %v3274
        %3336 = vmatpush1.msra.mxu0 %v3273
        %3337 = vmatprep.subr.mxu0 %v3272
        %3338 = vmatpush1.msra.mxu0 %v3271
        %3339 = vmatprep.subr.mxu0 %v3270
        %3340 = vmatpush1.msra.mxu0 %v3269
        %3341 = vmatprep.subr.mxu0 0.0
        %3342 = vmatpush2.msra.mxu0 0.0
        %3343 = vmatprep.subr.mxu0 0.0
        %3344 = vmatpush2.msra.mxu0 0.0
        %3345 = vmatprep.subr.mxu0 0.0
        %3346 = vmatpush2.msra.mxu0 0.0
        %3347 = vmatprep.subr.mxu0 0.0
        %3348 = vmatpush2.msra.mxu0 0.0
        %3349 = vmatprep.subr.mxu0 0.0
        %3350 = vmatpush2.msra.mxu0 0.0
        %3351 = vmatprep.subr.mxu0 0.0
        %3352 = vmatpush2.msra.mxu0 0.0
        %3353 = vmatprep.subr.mxu0 0.0
        %3354 = vmatpush2.msra.mxu0 0.0
        %3355 = vmatprep.subr.mxu0 0.0
        %3356 = vmatpush2.msra.mxu0 0.0
        %3357 = vmatprep.subr.mxu0 0.0
        %3358 = vmatpush2.msra.mxu0 0.0
        %3359 = vmatprep.subr.mxu0 0.0
        %3360 = vmatpush2.msra.mxu0 0.0
        %3361 = vmatprep.subr.mxu0 0.0
        %3362 = vmatpush2.msra.mxu0 0.0
        %3363 = vmatprep.subr.mxu0 0.0
        %3364 = vmatpush2.msra.mxu0 0.0
        %3365 = vmatprep.subr.mxu0 0.0
        %3366 = vmatpush2.msra.mxu0 0.0
        %3367 = vmatprep.subr.mxu0 0.0
        %3368 = vmatpush2.msra.mxu0 0.0
        %3369 = vmatprep.subr.mxu0 0.0
        %3370 = vmatpush2.msra.mxu0 0.0
        %3371 = vmatprep.subr.mxu0 0.0
        %3372 = vmatpush2.msra.mxu0 0.0
        %3373 = vmatprep.mubr.f32.mxu0 0.0
        %3374 = vmatmul.mubr.f32.gmra.mxu0 %v3307
        %v3375 = vpop.f32.mrf.mxu0
        %v3376 = vadd.f32 %v3299, %v3375
        %v3377 = vpop.f32.mrf.mxu0
        %v3378 = vadd.f32 %v3303, %v3377
        %3379 = vdwg.mxu0
        %v3382 = vcombine.low %v3376, %v3378
        %3384 = vst [vmem:[%s298] sm:$0xff] %v3382
        %s3385 = sand.u32 %s203, 1
        %s3386 = scalar_lea.sflag [#allocation3], %s3385
        %s3387 = sand.u32 %s203, 1
        %s3388 = smul.addr %s3387, 8
        %s3389 = scalar_lea.vmem [#allocation2], %s3388
        // Predicated region
        $region53: #{tpu_custom_call.1} parent=51 // pred_check
          %p3390 = pneg %p213
        $region54: #{tpu_custom_call.1} parent=51 // pred_check_branch
          %3392 = sbr.rel (%p3390) target = $region56
        $region55: #{tpu_custom_call.1} parent=51 // pred_region
          %s3394 = ssub.s32 128, 128
          %3395 = vsyncadd %s3386, %s3394
          %s3396 = smul.addr %s22, 2
          %s3397 = smul.addr %s3396, 64
          %s3398 = scalar_lea.hbm %s8, %s3397
          %s3400 = sshll.u32 %s3389, 4
          %s3401 = int_to_ptr.vmem [resolvable:$true] %s3400
          %3403 = dma.vmem_to_hbm [thread:$0]  %s3401, 128, %s3398, %s3386
        $region56: #{tpu_custom_call.1} parent=51 // pred_fallthru
          _
      $region52: #{tpu_custom_call.1} parent=5 // pred_fallthru
        _
      %p3404 = scmp.le.s32.totalorder 2, %s17
      // Predicated region
      $region57: #{tpu_custom_call.1} parent=5 // pred_check
        %p3405 = pneg %p3404
      $region58: #{tpu_custom_call.1} parent=5 // pred_check_branch
        %3407 = sbr.rel (%p3405) target = $region60
      $region59: #{tpu_custom_call.1} parent=5 // pred_region
        %s3408 = ssub.s32 %s17, 2
        // Predicated region
        $region61: #{tpu_custom_call.1} parent=59 // pred_check
          %p3409 = pneg %p219
        $region62: #{tpu_custom_call.1} parent=59 // pred_check_branch
          %3411 = sbr.rel (%p3409) target = $region64
        $region63: #{tpu_custom_call.1} parent=59 // pred_region
          %s3412 = sand.u32 %s204, 1
          %s3413 = scalar_lea.sflag [#allocation3], %s3412
          %s3414 = sand.u32 %s204, 1
          %s3415 = smul.addr %s3414, 8
          %s3416 = scalar_lea.vmem [#allocation2], %s3415
          %3417 = dma.done %s3413, 128
        $region64: #{tpu_custom_call.1} parent=59 // pred_fallthru
          _
      $region60: #{tpu_custom_call.1} parent=5 // pred_fallthru
        _
    $region6: #{tpu_custom_call.1} parent=1 // loop_footer
      %s21 = sadd.s32 1, %s17
    $region7: #{tpu_custom_call.1} parent=1 // loop_footer_branch
      %16 = sbr.rel target = $region3
    $region8: #{tpu_custom_call.1} parent=1 // loop_exit
      _
    %3418 = vsyncpa [#allocation3], 1
    %s3419 = scalar_lea.sflag [#allocation3], 1
    %3420 = vsyncpa %s3419, 1

</llo_original>
